<compile_context>
chip_gen: v5e
topology: v5e:2x2
jax: 0.10.0
libtpu: 0.0.40
codegen_flags: <defaults>
</compile_context>

<pallas_src>
import jax
import jax.numpy as jnp
from jax.experimental import pallas as pl
from jax.experimental.pallas import tpu as pltpu

EPS = 1e-5
C = 64                                  # conv output channels
NUM_CLASSES = 10
MAX_IPT = 16                            # images per tile cap (v7x VMEM budget)
VMEM_LIMIT = 32 * 1024 * 1024           # explicit scoped-VMEM limit (safe on v5e/v6e/v7x)


def _largest_divisor_leq(n, cap):
    for d in range(min(n, cap), 0, -1):
        if n % d == 0:
            return d
    return 1


# ----------------------------------------------------------------------------
# Host-side (XLA) glue: im2col patches, folded conv weights, FC constants
# ----------------------------------------------------------------------------
def _im2col_patches(x):
    # x: (N, 1, 32, 32) NCHW.  Returns lane-dense (17, M) bf16 patches where
    # M = N * 256 pooled cells; rows = 16 taps of the 4x4 window covering one
    # 2x2 pool cell + a ones row that carries the conv bias.
    N, _, H, W = x.shape
    Hp, Wp = H // 2, W // 2
    M = N * Hp * Wp
    xpad = jnp.pad(x[:, 0].astype(jnp.float32), ((0, 0), (1, 1), (1, 1)))      # (N,34,34)
    taps = jnp.stack([xpad[:, ty:ty + 2 * Hp:2, tx:tx + 2 * Wp:2]
                      for ty in range(4) for tx in range(4)], axis=0)          # (16,N,Hp,Wp)
    patches = jnp.concatenate(
        [taps.reshape(16, M), jnp.ones((1, M), jnp.float32)], axis=0)          # (17, M)
    return patches.astype(jnp.bfloat16)


def _fold_conv_weight(conv_w, conv_b):
    # (256, 17) folded weights, rows ordered (pool-offset p, channel c); the
    # 17th column is the conv bias (broadcast via the ones row of the patches).
    w3 = conv_w.reshape(C, 3, 3).astype(jnp.float32)
    w4 = jnp.zeros((4, C, 4, 4), jnp.float32)
    for p, (i, j) in enumerate(((0, 0), (0, 1), (1, 0), (1, 1))):
        w4 = w4.at[p, :, i:i + 3, j:j + 3].set(w3)
    wmat = jnp.concatenate(
        [w4.reshape(4 * C, 16),
         jnp.tile(conv_b.reshape(C, 1).astype(jnp.float32), (4, 1))], axis=1)  # (256,17)
    return wmat.astype(jnp.bfloat16)


def _fc_constants(fc_w, fc_b):
    # fc_w: (10, 16384) torch layout, flatten order k = c*256 + s  (NCHW view).
    K = fc_w.shape[1]
    S = K // C                                                                 # 256
    fcw_t = (fc_w.astype(jnp.float32)
             .reshape(NUM_CLASSES, C, S)
             .transpose(2, 0, 1)                                              # (S, 10, C)
             .reshape(S, NUM_CLASSES * C))                                    # (256, 640)
    eye_mask = jnp.tile(jnp.eye(C, dtype=jnp.float32), (1, NUM_CLASSES))      # (64, 640)
    seg = jnp.kron(jnp.eye(NUM_CLASSES, dtype=jnp.float32),
                   jnp.ones((C, 1), jnp.float32))                             # (640, 10)
    fcb = fc_b.reshape(1, NUM_CLASSES).astype(jnp.float32)                    # (1, 10)
    return fcw_t, eye_mask, seg, fcb


# ----------------------------------------------------------------------------
# In-kernel fused FC: logits rows for every image of the current tile
# ----------------------------------------------------------------------------
def _fc_rows(pooled, ipt, S, fcw_ref, eye_ref, seg_ref):
    # pooled: (64, ipt*S) f32, lane order (image, pooled-cell s), s = h*16+w.
    rows = []
    for i in range(ipt):
        p_i = pooled[:, i * S:(i + 1) * S]                                     # (64, 256)
        # u[c', o*64+c] = sum_s p_i[c', s] * W[o, c, s]      (MXU)
        u = jnp.dot(p_i, fcw_ref[...], preferred_element_type=jnp.float32)     # (64, 640)
        # keep only c' == c, sum over channels                (VPU + sublane reduce)
        colsum = jnp.sum(u * eye_ref[...], axis=0, keepdims=True)              # (1, 640)
        # sum the 64-wide channel groups per output o         (tiny MXU matmul)
        rows.append(jnp.dot(colsum, seg_ref[...],
                            preferred_element_type=jnp.float32))               # (1, 10)
    return jnp.concatenate(rows, axis=0)                                       # (ipt, 10)


# ----------------------------------------------------------------------------
# Full forward: conv + BN(batch stats) + ReLU + maxpool + Linear, all in Pallas
# ----------------------------------------------------------------------------
def vgg11_forward(x, params):
    N, _, H, W = x.shape              # expects (N, 1, 32, 32)
    Hp, Wp = H // 2, W // 2
    S = Hp * Wp                       # 256 pooled cells per image
    M = N * S
    inv_count = 1.0 / (4.0 * M)       # BN sample count per channel = N*32*32

    patches = _im2col_patches(x)                                   # (17, M) bf16
    wmat = _fold_conv_weight(params["conv_w"], params["conv_b"])   # (256, 17) bf16
    gb = jnp.stack([params["bn_gamma"].astype(jnp.float32),
                    params["bn_beta"].astype(jnp.float32)], axis=1)  # (64, 2)
    fcw_t, eye_mask, seg, fcb = _fc_constants(params["fc_w"], params["fc_b"])

    fc_specs = [
        pl.BlockSpec((S, NUM_CLASSES * C), lambda k: (0, 0)),          # fcw_t
        pl.BlockSpec((C, NUM_CLASSES * C), lambda k: (0, 0)),          # eye_mask
        pl.BlockSpec((NUM_CLASSES * C, NUM_CLASSES), lambda k: (0, 0)),  # seg
        pl.BlockSpec((1, NUM_CLASSES), lambda k: (0, 0)),              # fcb
    ]

    # ---------------- single-pass path: whole batch in one tile ----------------
    if N <= MAX_IPT:
        ipt, TM = N, M

        def fused_kernel(p_ref, w_ref, gb_ref, fcw_ref, eye_ref, seg_ref,
                         fcb_ref, out_ref):
            # conv as ONE matmul: (256,17) @ (17,TM) -> (256,TM), rows = (p, c)
            z = jnp.dot(w_ref[...], p_ref[...], preferred_element_type=jnp.float32)
            # BN batch statistics over all 4*TM pre-pool activations per channel
            s = jnp.zeros((C, 1), jnp.float32)
            ssq = jnp.zeros((C, 1), jnp.float32)
            for p in range(4):
                zp = z[p * C:(p + 1) * C, :]
                s = s + jnp.sum(zp, axis=1, keepdims=True)
                ssq = ssq + jnp.sum(zp * zp, axis=1, keepdims=True)
            mean = s * inv_count
            var = jnp.maximum(ssq * inv_count - mean * mean, 0.0)
            inv = jax.lax.rsqrt(var + EPS)
            scale = gb_ref[:, 0:1] * inv
            shift = gb_ref[:, 1:2] - mean * scale
            # BN + ReLU + 2x2 maxpool (max over the 4 pool offsets)
            pooled = None
            for p in range(4):
                yp = jnp.maximum(z[p * C:(p + 1) * C, :] * scale + shift, 0.0)
                pooled = yp if pooled is None else jnp.maximum(pooled, yp)
            # fused classifier
            logits = _fc_rows(pooled, ipt, S, fcw_ref, eye_ref, seg_ref) + fcb_ref[...]
            out_ref[0] = logits

        out3 = pl.pallas_call(
            fused_kernel,
            out_shape=jax.ShapeDtypeStruct((1, N, NUM_CLASSES), jnp.float32),
            grid=(1,),
            in_specs=[
                pl.BlockSpec((17, TM), lambda k: (0, 0)),
                pl.BlockSpec((4 * C, 17), lambda k: (0, 0)),
                pl.BlockSpec((C, 2), lambda k: (0, 0)),
            ] + fc_specs,
            out_specs=pl.BlockSpec((1, N, NUM_CLASSES), lambda k: (0, 0, 0)),
            compiler_params=pltpu.CompilerParams(
                dimension_semantics=("arbitrary",),
                vmem_limit_bytes=VMEM_LIMIT),
        )(patches, wmat, gb, fcw_t, eye_mask, seg, fcb)
        return out3.reshape(N, NUM_CLASSES)

    # ---------------- two-pass path: batch spans multiple tiles ----------------
    ipt = _largest_divisor_leq(N, MAX_IPT)
    TM = ipt * S
    n_tiles = M // TM                 # >= 2 here, so both v7x cores get work

    def stats_kernel(p_ref, w_ref, gb_ref, out_ref, sum_ref, ssq_ref):
        k = pl.program_id(0)

        @pl.when(k == 0)
        def _():
            sum_ref[...] = jnp.zeros_like(sum_ref)
            ssq_ref[...] = jnp.zeros_like(ssq_ref)

        z = jnp.dot(w_ref[...], p_ref[...], preferred_element_type=jnp.float32)
        s = jnp.zeros((C, 1), jnp.float32)
        ssq = jnp.zeros((C, 1), jnp.float32)
        for p in range(4):
            zp = z[p * C:(p + 1) * C, :]
            s = s + jnp.sum(zp, axis=1, keepdims=True)
            ssq = ssq + jnp.sum(zp * zp, axis=1, keepdims=True)
        sum_ref[...] += s
        ssq_ref[...] += ssq

        @pl.when(k == pl.num_programs(0) - 1)
        def _():
            mean = sum_ref[...] * inv_count
            var = jnp.maximum(ssq_ref[...] * inv_count - mean * mean, 0.0)
            inv = jax.lax.rsqrt(var + EPS)
            scale = gb_ref[:, 0:1] * inv
            shift = gb_ref[:, 1:2] - mean * scale
            out_ref[:, 0:1] = scale
            out_ref[:, 1:2] = shift

    scale_shift = pl.pallas_call(
        stats_kernel,
        out_shape=jax.ShapeDtypeStruct((C, 2), jnp.float32),
        grid=(n_tiles,),
        in_specs=[
            pl.BlockSpec((17, TM), lambda k: (0, k)),
            pl.BlockSpec((4 * C, 17), lambda k: (0, 0)),
            pl.BlockSpec((C, 2), lambda k: (0, 0)),
        ],
        out_specs=pl.BlockSpec((C, 2), lambda k: (0, 0)),
        scratch_shapes=[pltpu.VMEM((C, 1), jnp.float32),
                        pltpu.VMEM((C, 1), jnp.float32)],
        compiler_params=pltpu.CompilerParams(
            dimension_semantics=("arbitrary",),
            vmem_limit_bytes=VMEM_LIMIT),
    )(patches, wmat, gb)

    def apply_kernel(p_ref, w_ref, ss_ref, fcw_ref, eye_ref, seg_ref,
                     fcb_ref, out_ref):
        z = jnp.dot(w_ref[...], p_ref[...], preferred_element_type=jnp.float32)
        scale = ss_ref[:, 0:1]
        shift = ss_ref[:, 1:2]
        pooled = None
        for p in range(4):
            yp = jnp.maximum(z[p * C:(p + 1) * C, :] * scale + shift, 0.0)
            pooled = yp if pooled is None else jnp.maximum(pooled, yp)
        logits = _fc_rows(pooled, ipt, S, fcw_ref, eye_ref, seg_ref) + fcb_ref[...]
        out_ref[0] = logits

    out3 = pl.pallas_call(
        apply_kernel,
        out_shape=jax.ShapeDtypeStruct((n_tiles, ipt, NUM_CLASSES), jnp.float32),
        grid=(n_tiles,),
        in_specs=[
            pl.BlockSpec((17, TM), lambda k: (0, k)),
            pl.BlockSpec((4 * C, 17), lambda k: (0, 0)),
            pl.BlockSpec((C, 2), lambda k: (0, 0)),
        ] + fc_specs,
        out_specs=pl.BlockSpec((1, ipt, NUM_CLASSES), lambda k: (k, 0, 0)),
        compiler_params=pltpu.CompilerParams(
            dimension_semantics=("parallel",),
            vmem_limit_bytes=VMEM_LIMIT),
    )(patches, wmat, scale_shift, fcw_t, eye_mask, seg, fcb)
    return out3.reshape(N, NUM_CLASSES)


# ----------------------------------------------------------------------------
# Deterministic parameter init (mirrors the torch module's parameter shapes)
# ----------------------------------------------------------------------------
def init_params(key):
    ks = jax.random.split(key, 6)
    fc_in = 64 * 16 * 16  # matches calculate_features_size() for 32x32 input
    return dict(
        conv_w=0.1 * jax.random.normal(ks[0], (64, 1, 3, 3), jnp.float32),
        conv_b=0.1 * jax.random.normal(ks[1], (64,), jnp.float32),
        bn_gamma=1.0 + 0.1 * jax.random.normal(ks[2], (64,), jnp.float32),
        bn_beta=0.1 * jax.random.normal(ks[3], (64,), jnp.float32),
        fc_w=0.01 * jax.random.normal(ks[4], (10, fc_in), jnp.float32),
        fc_b=0.01 * jax.random.normal(ks[5], (10,), jnp.float32),
    )


if __name__ == "__main__":
    key = jax.random.PRNGKey(0)
    pkey, xkey = jax.random.split(key)
    params = init_params(pkey)
    # Spatial size is fixed to 32x32 by the module's classifier input size.
    x = jax.random.normal(xkey, (2, 1, 32, 32), jnp.float32)  # NCHW
    out = jax.jit(vgg11_forward)(x, params)
    out = jax.block_until_ready(out)
    assert out.shape == (2, 10) and out.dtype == jnp.float32
    print("KERNEL_OK")
</pallas_src>

<mosaic_0001>
module attributes {stable_mosaic.version = 11 : i64} {
  func.func @fused_kernel(%arg0: i32, %arg1: memref<17x512xbf16, #tpu.memory_space<vmem>>, %arg2: memref<256x17xbf16, #tpu.memory_space<vmem>>, %arg3: memref<64x2xf32, #tpu.memory_space<vmem>>, %arg4: memref<256x640xf32, #tpu.memory_space<vmem>>, %arg5: memref<64x640xf32, #tpu.memory_space<vmem>>, %arg6: memref<640x10xf32, #tpu.memory_space<vmem>>, %arg7: memref<1x10xf32, #tpu.memory_space<vmem>>, %arg8: memref<1x2x10xf32, #tpu.memory_space<vmem>>) attributes {dimension_semantics = [#tpu.dimension_semantics<arbitrary>], iteration_bounds = array<i64: 1>, scalar_prefetch = 0 : i64, scratch_operands = 0 : i64, tpu.core_type = #tpu.core_type<tc>, window_params = [{pipeline_mode = #tpu.pipeline_mode<synchronous>, transform_indices = @transform_0, window_bounds = array<i64: 17, 512>}, {pipeline_mode = #tpu.pipeline_mode<synchronous>, transform_indices = @transform_1, window_bounds = array<i64: 256, 17>}, {pipeline_mode = #tpu.pipeline_mode<synchronous>, transform_indices = @transform_2, window_bounds = array<i64: 64, 2>}, {pipeline_mode = #tpu.pipeline_mode<synchronous>, transform_indices = @transform_3, window_bounds = array<i64: 256, 640>}, {pipeline_mode = #tpu.pipeline_mode<synchronous>, transform_indices = @transform_4, window_bounds = array<i64: 64, 640>}, {pipeline_mode = #tpu.pipeline_mode<synchronous>, transform_indices = @transform_5, window_bounds = array<i64: 640, 10>}, {pipeline_mode = #tpu.pipeline_mode<synchronous>, transform_indices = @transform_6, window_bounds = array<i64: 1, 10>}, {pipeline_mode = #tpu.pipeline_mode<synchronous>, transform_indices = @transform_7, window_bounds = array<i64: 1, 2, 10>}]} {
    %c0 = arith.constant 0 : index
    %c0_0 = arith.constant 0 : index
    %0 = vector.load %arg2[%c0, %c0_0] : memref<256x17xbf16, #tpu.memory_space<vmem>>, vector<256x17xbf16>
    %c0_1 = arith.constant 0 : index
    %c0_2 = arith.constant 0 : index
    %1 = vector.load %arg1[%c0_1, %c0_2] : memref<17x512xbf16, #tpu.memory_space<vmem>>, vector<17x512xbf16>
    %cst = arith.constant dense<0.000000e+00> : vector<256x512xf32>
    %2 = tpu.matmul %0, %1, %cst {dimension_numbers = #tpu.dot_dimension_numbers<[1], [0], [0], [1], [0, 0, 1, 1], [], []>} : vector<256x17xbf16>, vector<17x512xbf16>, vector<256x512xf32> -> vector<256x512xf32>
    %cst_3 = arith.constant 0.000000e+00 : f32
    %3 = vector.broadcast %cst_3 : f32 to vector<64x1xf32>
    %cst_4 = arith.constant 0.000000e+00 : f32
    %4 = vector.broadcast %cst_4 : f32 to vector<64x1xf32>
    %5 = vector.extract_strided_slice %2 {offsets = [0, 0], sizes = [64, 512], strides = [1, 1]} : vector<256x512xf32> to vector<64x512xf32>
    %cst_5 = arith.constant dense<0.000000e+00> : vector<64xf32>
    %6 = vector.multi_reduction <add>, %5, %cst_5 [1] : vector<64x512xf32> to vector<64xf32>
    %7 = vector.shape_cast %6 : vector<64xf32> to vector<64x1xf32>
    %8 = arith.addf %3, %7 : vector<64x1xf32>
    %9 = arith.mulf %5, %5 : vector<64x512xf32>
    %cst_6 = arith.constant dense<0.000000e+00> : vector<64xf32>
    %10 = vector.multi_reduction <add>, %9, %cst_6 [1] : vector<64x512xf32> to vector<64xf32>
    %11 = vector.shape_cast %10 : vector<64xf32> to vector<64x1xf32>
    %12 = arith.addf %4, %11 : vector<64x1xf32>
    %13 = vector.extract_strided_slice %2 {offsets = [64, 0], sizes = [64, 512], strides = [1, 1]} : vector<256x512xf32> to vector<64x512xf32>
    %cst_7 = arith.constant dense<0.000000e+00> : vector<64xf32>
    %14 = vector.multi_reduction <add>, %13, %cst_7 [1] : vector<64x512xf32> to vector<64xf32>
    %15 = vector.shape_cast %14 : vector<64xf32> to vector<64x1xf32>
    %16 = arith.addf %8, %15 : vector<64x1xf32>
    %17 = arith.mulf %13, %13 : vector<64x512xf32>
    %cst_8 = arith.constant dense<0.000000e+00> : vector<64xf32>
    %18 = vector.multi_reduction <add>, %17, %cst_8 [1] : vector<64x512xf32> to vector<64xf32>
    %19 = vector.shape_cast %18 : vector<64xf32> to vector<64x1xf32>
    %20 = arith.addf %12, %19 : vector<64x1xf32>
    %21 = vector.extract_strided_slice %2 {offsets = [128, 0], sizes = [64, 512], strides = [1, 1]} : vector<256x512xf32> to vector<64x512xf32>
    %cst_9 = arith.constant dense<0.000000e+00> : vector<64xf32>
    %22 = vector.multi_reduction <add>, %21, %cst_9 [1] : vector<64x512xf32> to vector<64xf32>
    %23 = vector.shape_cast %22 : vector<64xf32> to vector<64x1xf32>
    %24 = arith.addf %16, %23 : vector<64x1xf32>
    %25 = arith.mulf %21, %21 : vector<64x512xf32>
    %cst_10 = arith.constant dense<0.000000e+00> : vector<64xf32>
    %26 = vector.multi_reduction <add>, %25, %cst_10 [1] : vector<64x512xf32> to vector<64xf32>
    %27 = vector.shape_cast %26 : vector<64xf32> to vector<64x1xf32>
    %28 = arith.addf %20, %27 : vector<64x1xf32>
    %29 = vector.extract_strided_slice %2 {offsets = [192, 0], sizes = [64, 512], strides = [1, 1]} : vector<256x512xf32> to vector<64x512xf32>
    %cst_11 = arith.constant dense<0.000000e+00> : vector<64xf32>
    %30 = vector.multi_reduction <add>, %29, %cst_11 [1] : vector<64x512xf32> to vector<64xf32>
    %31 = vector.shape_cast %30 : vector<64xf32> to vector<64x1xf32>
    %32 = arith.addf %24, %31 : vector<64x1xf32>
    %33 = arith.mulf %29, %29 : vector<64x512xf32>
    %cst_12 = arith.constant dense<0.000000e+00> : vector<64xf32>
    %34 = vector.multi_reduction <add>, %33, %cst_12 [1] : vector<64x512xf32> to vector<64xf32>
    %35 = vector.shape_cast %34 : vector<64xf32> to vector<64x1xf32>
    %36 = arith.addf %28, %35 : vector<64x1xf32>
    %cst_13 = arith.constant 4.8828125E-4 : f32
    %37 = vector.broadcast %cst_13 : f32 to vector<64x1xf32>
    %38 = arith.mulf %32, %37 : vector<64x1xf32>
    %cst_14 = arith.constant 4.8828125E-4 : f32
    %39 = vector.broadcast %cst_14 : f32 to vector<64x1xf32>
    %40 = arith.mulf %36, %39 : vector<64x1xf32>
    %41 = arith.mulf %38, %38 : vector<64x1xf32>
    %42 = arith.subf %40, %41 : vector<64x1xf32>
    %cst_15 = arith.constant 0.000000e+00 : f32
    %43 = vector.broadcast %cst_15 : f32 to vector<64x1xf32>
    %44 = arith.maximumf %42, %43 : vector<64x1xf32>
    %cst_16 = arith.constant 9.99999974E-6 : f32
    %45 = vector.broadcast %cst_16 : f32 to vector<64x1xf32>
    %46 = arith.addf %44, %45 : vector<64x1xf32>
    %47 = math.rsqrt %46 : vector<64x1xf32>
    %c0_17 = arith.constant 0 : index
    %c0_18 = arith.constant 0 : index
    %48 = vector.load %arg3[%c0_17, %c0_18] : memref<64x2xf32, #tpu.memory_space<vmem>>, vector<64x1xf32>
    %49 = arith.mulf %48, %47 : vector<64x1xf32>
    %c0_19 = arith.constant 0 : index
    %c1 = arith.constant 1 : index
    %50 = vector.load %arg3[%c0_19, %c1] : memref<64x2xf32, #tpu.memory_space<vmem>>, vector<64x1xf32>
    %51 = arith.mulf %38, %49 : vector<64x1xf32>
    %52 = arith.subf %50, %51 : vector<64x1xf32>
    %53 = vector.extract_strided_slice %2 {offsets = [0, 0], sizes = [64, 512], strides = [1, 1]} : vector<256x512xf32> to vector<64x512xf32>
    %54 = vector.broadcast %49 : vector<64x1xf32> to vector<64x512xf32>
    %55 = arith.mulf %53, %54 : vector<64x512xf32>
    %56 = vector.broadcast %52 : vector<64x1xf32> to vector<64x512xf32>
    %57 = arith.addf %55, %56 : vector<64x512xf32>
    %cst_20 = arith.constant 0.000000e+00 : f32
    %58 = vector.broadcast %cst_20 : f32 to vector<64x512xf32>
    %59 = arith.maximumf %57, %58 : vector<64x512xf32>
    %60 = vector.extract_strided_slice %2 {offsets = [64, 0], sizes = [64, 512], strides = [1, 1]} : vector<256x512xf32> to vector<64x512xf32>
    %61 = vector.broadcast %49 : vector<64x1xf32> to vector<64x512xf32>
    %62 = arith.mulf %60, %61 : vector<64x512xf32>
    %63 = vector.broadcast %52 : vector<64x1xf32> to vector<64x512xf32>
    %64 = arith.addf %62, %63 : vector<64x512xf32>
    %cst_21 = arith.constant 0.000000e+00 : f32
    %65 = vector.broadcast %cst_21 : f32 to vector<64x512xf32>
    %66 = arith.maximumf %64, %65 : vector<64x512xf32>
    %67 = arith.maximumf %59, %66 : vector<64x512xf32>
    %68 = vector.extract_strided_slice %2 {offsets = [128, 0], sizes = [64, 512], strides = [1, 1]} : vector<256x512xf32> to vector<64x512xf32>
    %69 = vector.broadcast %49 : vector<64x1xf32> to vector<64x512xf32>
    %70 = arith.mulf %68, %69 : vector<64x512xf32>
    %71 = vector.broadcast %52 : vector<64x1xf32> to vector<64x512xf32>
    %72 = arith.addf %70, %71 : vector<64x512xf32>
    %cst_22 = arith.constant 0.000000e+00 : f32
    %73 = vector.broadcast %cst_22 : f32 to vector<64x512xf32>
    %74 = arith.maximumf %72, %73 : vector<64x512xf32>
    %75 = arith.maximumf %67, %74 : vector<64x512xf32>
    %76 = vector.extract_strided_slice %2 {offsets = [192, 0], sizes = [64, 512], strides = [1, 1]} : vector<256x512xf32> to vector<64x512xf32>
    %77 = vector.broadcast %49 : vector<64x1xf32> to vector<64x512xf32>
    %78 = arith.mulf %76, %77 : vector<64x512xf32>
    %79 = vector.broadcast %52 : vector<64x1xf32> to vector<64x512xf32>
    %80 = arith.addf %78, %79 : vector<64x512xf32>
    %cst_23 = arith.constant 0.000000e+00 : f32
    %81 = vector.broadcast %cst_23 : f32 to vector<64x512xf32>
    %82 = arith.maximumf %80, %81 : vector<64x512xf32>
    %83 = arith.maximumf %75, %82 : vector<64x512xf32>
    %84 = vector.extract_strided_slice %83 {offsets = [0, 0], sizes = [64, 256], strides = [1, 1]} : vector<64x512xf32> to vector<64x256xf32>
    %c0_24 = arith.constant 0 : index
    %c0_25 = arith.constant 0 : index
    %85 = vector.load %arg4[%c0_24, %c0_25] : memref<256x640xf32, #tpu.memory_space<vmem>>, vector<256x640xf32>
    %cst_26 = arith.constant dense<0.000000e+00> : vector<64x640xf32>
    %86 = tpu.matmul %84, %85, %cst_26 {dimension_numbers = #tpu.dot_dimension_numbers<[1], [0], [0], [1], [0, 0, 1, 1], [], []>} : vector<64x256xf32>, vector<256x640xf32>, vector<64x640xf32> -> vector<64x640xf32>
    %c0_27 = arith.constant 0 : index
    %c0_28 = arith.constant 0 : index
    %87 = vector.load %arg5[%c0_27, %c0_28] : memref<64x640xf32, #tpu.memory_space<vmem>>, vector<64x640xf32>
    %88 = arith.mulf %86, %87 : vector<64x640xf32>
    %cst_29 = arith.constant dense<0.000000e+00> : vector<640xf32>
    %89 = vector.multi_reduction <add>, %88, %cst_29 [0] : vector<64x640xf32> to vector<640xf32>
    %90 = vector.shape_cast %89 : vector<640xf32> to vector<1x640xf32>
    %c0_30 = arith.constant 0 : index
    %c0_31 = arith.constant 0 : index
    %91 = vector.load %arg6[%c0_30, %c0_31] : memref<640x10xf32, #tpu.memory_space<vmem>>, vector<640x10xf32>
    %cst_32 = arith.constant dense<0.000000e+00> : vector<1x10xf32>
    %92 = tpu.matmul %90, %91, %cst_32 {dimension_numbers = #tpu.dot_dimension_numbers<[1], [0], [0], [1], [0, 0, 1, 1], [], []>} : vector<1x640xf32>, vector<640x10xf32>, vector<1x10xf32> -> vector<1x10xf32>
    %93 = vector.extract_strided_slice %83 {offsets = [0, 256], sizes = [64, 256], strides = [1, 1]} : vector<64x512xf32> to vector<64x256xf32>
    %c0_33 = arith.constant 0 : index
    %c0_34 = arith.constant 0 : index
    %94 = vector.load %arg4[%c0_33, %c0_34] : memref<256x640xf32, #tpu.memory_space<vmem>>, vector<256x640xf32>
    %cst_35 = arith.constant dense<0.000000e+00> : vector<64x640xf32>
    %95 = tpu.matmul %93, %94, %cst_35 {dimension_numbers = #tpu.dot_dimension_numbers<[1], [0], [0], [1], [0, 0, 1, 1], [], []>} : vector<64x256xf32>, vector<256x640xf32>, vector<64x640xf32> -> vector<64x640xf32>
    %c0_36 = arith.constant 0 : index
    %c0_37 = arith.constant 0 : index
    %96 = vector.load %arg5[%c0_36, %c0_37] : memref<64x640xf32, #tpu.memory_space<vmem>>, vector<64x640xf32>
    %97 = arith.mulf %95, %96 : vector<64x640xf32>
    %cst_38 = arith.constant dense<0.000000e+00> : vector<640xf32>
    %98 = vector.multi_reduction <add>, %97, %cst_38 [0] : vector<64x640xf32> to vector<640xf32>
    %99 = vector.shape_cast %98 : vector<640xf32> to vector<1x640xf32>
    %c0_39 = arith.constant 0 : index
    %c0_40 = arith.constant 0 : index
    %100 = vector.load %arg6[%c0_39, %c0_40] : memref<640x10xf32, #tpu.memory_space<vmem>>, vector<640x10xf32>
    %cst_41 = arith.constant dense<0.000000e+00> : vector<1x10xf32>
    %101 = tpu.matmul %99, %100, %cst_41 {dimension_numbers = #tpu.dot_dimension_numbers<[1], [0], [0], [1], [0, 0, 1, 1], [], []>} : vector<1x640xf32>, vector<640x10xf32>, vector<1x10xf32> -> vector<1x10xf32>
    %102 = tpu.concatenate %92, %101 in 0 : vector<1x10xf32>, vector<1x10xf32> -> vector<2x10xf32>
    %c0_42 = arith.constant 0 : index
    %c0_43 = arith.constant 0 : index
    %103 = vector.load %arg7[%c0_42, %c0_43] : memref<1x10xf32, #tpu.memory_space<vmem>>, vector<1x10xf32>
    %104 = vector.broadcast %103 : vector<1x10xf32> to vector<2x10xf32>
    %105 = arith.addf %102, %104 : vector<2x10xf32>
    %c0_44 = arith.constant 0 : index
    %c0_45 = arith.constant 0 : index
    %c0_46 = arith.constant 0 : index
    %106 = vector.load %arg8[%c0_44, %c0_45, %c0_46] : memref<1x2x10xf32, #tpu.memory_space<vmem>>, vector<1x2x10xf32>
    %107 = vector.shape_cast %106 : vector<1x2x10xf32> to vector<2x10xf32>
    %108 = vector.shape_cast %105 : vector<2x10xf32> to vector<1x2x10xf32>
    tpu.vector_store %arg8[%c0_44, %c0_45, %c0_46], %108 {strides = array<i32>} : memref<1x2x10xf32, #tpu.memory_space<vmem>>, vector<1x2x10xf32>,
    return
  }
  func.func @transform_0(%arg0: i32) -> (i32, i32) {
    %c0_i32 = arith.constant 0 : i32
    %c0_i32_0 = arith.constant 0 : i32
    %c0_i32_1 = arith.constant 0 : i32
    return %c0_i32, %c0_i32_0 : i32, i32
  }
  func.func @transform_1(%arg0: i32) -> (i32, i32) {
    %c0_i32 = arith.constant 0 : i32
    %c0_i32_0 = arith.constant 0 : i32
    %c0_i32_1 = arith.constant 0 : i32
    return %c0_i32, %c0_i32_0 : i32, i32
  }
  func.func @transform_2(%arg0: i32) -> (i32, i32) {
    %c0_i32 = arith.constant 0 : i32
    %c0_i32_0 = arith.constant 0 : i32
    %c0_i32_1 = arith.constant 0 : i32
    return %c0_i32, %c0_i32_0 : i32, i32
  }
  func.func @transform_3(%arg0: i32) -> (i32, i32) {
    %c0_i32 = arith.constant 0 : i32
    %c0_i32_0 = arith.constant 0 : i32
    %c0_i32_1 = arith.constant 0 : i32
    return %c0_i32, %c0_i32_0 : i32, i32
  }
  func.func @transform_4(%arg0: i32) -> (i32, i32) {
    %c0_i32 = arith.constant 0 : i32
    %c0_i32_0 = arith.constant 0 : i32
    %c0_i32_1 = arith.constant 0 : i32
    return %c0_i32, %c0_i32_0 : i32, i32
  }
  func.func @transform_5(%arg0: i32) -> (i32, i32) {
    %c0_i32 = arith.constant 0 : i32
    %c0_i32_0 = arith.constant 0 : i32
    %c0_i32_1 = arith.constant 0 : i32
    return %c0_i32, %c0_i32_0 : i32, i32
  }
  func.func @transform_6(%arg0: i32) -> (i32, i32) {
    %c0_i32 = arith.constant 0 : i32
    %c0_i32_0 = arith.constant 0 : i32
    %c0_i32_1 = arith.constant 0 : i32
    return %c0_i32, %c0_i32_0 : i32, i32
  }
  func.func @transform_7(%arg0: i32) -> (i32, i32, i32) {
    %c0_i32 = arith.constant 0 : i32
    %c0_i32_0 = arith.constant 0 : i32
    %c0_i32_1 = arith.constant 0 : i32
    %c0_i32_2 = arith.constant 0 : i32
    return %c0_i32, %c0_i32_0, %c0_i32_1 : i32, i32, i32
  }
}

</mosaic_0001>

<llo_original>
// kernel: vgg11_forward.1
$region0: #{vgg11_forward.1}
  #allocation0 [shape = 'u32[]', space=smem, size = 0x4, offset = 0x4, fixed_abs, tag = 'smem constant byte address 0x4 - core index']
  #allocation1 [shape = 'u32[72,128]{1,0:T(1,128)}', space=vmem, size = 0x9000, scoped, tag = 'internal scratch']
  %s0 = inlined_call_operand.vmem [shape: bf16[17,512], index: 0, kind: input, shape index: {}]
  %s1 = inlined_call_operand.vmem [shape: bf16[256,17], index: 1, kind: input, shape index: {}]
  %s2 = inlined_call_operand.vmem [shape: f32[64,2], index: 2, kind: input, shape index: {}]
  %s3 = inlined_call_operand.vmem [shape: f32[256,640], index: 3, kind: input, shape index: {}]
  %s4 = inlined_call_operand.vmem [shape: f32[64,640], index: 4, kind: input, shape index: {}]
  %s5 = inlined_call_operand.vmem [shape: f32[640,10], index: 5, kind: input, shape index: {}]
  %s6 = inlined_call_operand.vmem [shape: f32[1,10], index: 6, kind: input, shape index: {}]
  %s7 = inlined_call_operand.hbm [shape: f32[1,2,10], index: 7, kind: output, shape index: {}]
  %s8 = sld [smem:[#allocation0]]
  $region38: #{vgg11_forward.1} parent=0
    _
  %s10 = ssub.s32 1, %s8
  %s11 = scalar_select 0, %s10, %s8
  $region1: #{vgg11_forward.1} parent=0
    #allocation2 [shape = 'u8[1024]{0}', space=vmem, size = 0x400, scoped, tag = 'output window, operand 0, single buffered']
    #allocation3 [shape = 's32[1]{0}', space=sflag, size = 0x4, scoped, tag = 'scoped memory for vgg11_forward.1']
    %12 = vsyncpa [#allocation3], 0
    // Predicated region
    $region2: #{vgg11_forward.1} parent=1 // pred_check
      _
    $region3: #{vgg11_forward.1} parent=1 // pred_check_branch
      %14 = sbr.rel (0) target = $region5
    $region4: #{vgg11_forward.1} parent=1 // pred_region
      _
    $region5: #{vgg11_forward.1} parent=1 // pred_fallthru
      _
    // Predicated region
    $region6: #{vgg11_forward.1} parent=1 // pred_check
      _
    $region7: #{vgg11_forward.1} parent=1 // pred_check_branch
      %16 = sbr.rel (0) target = $region9
    $region8: #{vgg11_forward.1} parent=1 // pred_region
      _
    $region9: #{vgg11_forward.1} parent=1 // pred_fallthru
      _
    // Predicated region
    $region10: #{vgg11_forward.1} parent=1 // pred_check
      _
    $region11: #{vgg11_forward.1} parent=1 // pred_check_branch
      %18 = sbr.rel (0) target = $region13
    $region12: #{vgg11_forward.1} parent=1 // pred_region
      _
    $region13: #{vgg11_forward.1} parent=1 // pred_fallthru
      _
    // Predicated region
    $region14: #{vgg11_forward.1} parent=1 // pred_check
      _
    $region15: #{vgg11_forward.1} parent=1 // pred_check_branch
      %20 = sbr.rel (0) target = $region17
    $region16: #{vgg11_forward.1} parent=1 // pred_region
      _
    $region17: #{vgg11_forward.1} parent=1 // pred_fallthru
      _
    // Predicated region
    $region18: #{vgg11_forward.1} parent=1 // pred_check
      _
    $region19: #{vgg11_forward.1} parent=1 // pred_check_branch
      %22 = sbr.rel (0) target = $region21
    $region20: #{vgg11_forward.1} parent=1 // pred_region
      _
    $region21: #{vgg11_forward.1} parent=1 // pred_fallthru
      _
    // Predicated region
    $region22: #{vgg11_forward.1} parent=1 // pred_check
      _
    $region23: #{vgg11_forward.1} parent=1 // pred_check_branch
      %24 = sbr.rel (0) target = $region25
    $region24: #{vgg11_forward.1} parent=1 // pred_region
      _
    $region25: #{vgg11_forward.1} parent=1 // pred_fallthru
      _
    // Predicated region
    $region26: #{vgg11_forward.1} parent=1 // pred_check
      _
    $region27: #{vgg11_forward.1} parent=1 // pred_check_branch
      %26 = sbr.rel (0) target = $region29
    $region28: #{vgg11_forward.1} parent=1 // pred_region
      _
    $region29: #{vgg11_forward.1} parent=1 // pred_fallthru
      _
    %v28 = vld [vmem:[%s1] sm:$0xf]
    %v29 = vld [vmem:[%s1 + $0x4] sm:$0xf]
    %v30 = vld [vmem:[%s1 + $0x8] sm:$0xf]
    %v31 = vld [vmem:[%s1 + $0xc] sm:$0xf]
    %v32 = vld [vmem:[%s1 + $0x10] sm:$0xf]
    %v33 = vld [vmem:[%s1 + $0x14] sm:$0xf]
    %v34 = vld [vmem:[%s1 + $0x18] sm:$0xf]
    %v35 = vld [vmem:[%s1 + $0x1c] sm:$0xf]
    %v36 = vld [vmem:[%s1 + $0x20] sm:$0xf]
    %v37 = vld [vmem:[%s1 + $0x24] sm:$0xf]
    %v38 = vld [vmem:[%s1 + $0x28] sm:$0xf]
    %v39 = vld [vmem:[%s1 + $0x2c] sm:$0xf]
    %v40 = vld [vmem:[%s1 + $0x30] sm:$0xf]
    %v41 = vld [vmem:[%s1 + $0x34] sm:$0xf]
    %v42 = vld [vmem:[%s1 + $0x38] sm:$0xf]
    %v43 = vld [vmem:[%s1 + $0x3c] sm:$0xf]
    %v44 = vld [vmem:[%s1 + $0x40] sm:$0xf]
    %v45 = vld [vmem:[%s1 + $0x44] sm:$0xf]
    %v46 = vld [vmem:[%s1 + $0x48] sm:$0xf]
    %v47 = vld [vmem:[%s1 + $0x4c] sm:$0xf]
    %v48 = vld [vmem:[%s1 + $0x50] sm:$0xf]
    %v49 = vld [vmem:[%s1 + $0x54] sm:$0xf]
    %v50 = vld [vmem:[%s1 + $0x58] sm:$0xf]
    %v51 = vld [vmem:[%s1 + $0x5c] sm:$0xf]
    %v52 = vld [vmem:[%s1 + $0x60] sm:$0xf]
    %v53 = vld [vmem:[%s1 + $0x64] sm:$0xf]
    %v54 = vld [vmem:[%s1 + $0x68] sm:$0xf]
    %v55 = vld [vmem:[%s1 + $0x6c] sm:$0xf]
    %v56 = vld [vmem:[%s1 + $0x70] sm:$0xf]
    %v57 = vld [vmem:[%s1 + $0x74] sm:$0xf]
    %v58 = vld [vmem:[%s1 + $0x78] sm:$0xf]
    %v59 = vld [vmem:[%s1 + $0x7c] sm:$0xf]
    %v60 = vld [vmem:[%s0] sm:$0xff]
    %v61 = vld [vmem:[%s0 + $0x8] sm:$0xff]
    %v62 = vld [vmem:[%s0 + $0x10] sm:$0xff]
    %v63 = vld [vmem:[%s0 + $0x18] sm:$0xff]
    %v64 = vld [vmem:[%s0 + $0x20] sm:$0x11]
    %v65 = vld [vmem:[%s0 + $0x28] sm:$0x11]
    %v98 = vunpack.c.l.b16 %v28
    %v99 = vunpack.c.l.b16 %v29
    %v100 = vunpack.c.l.b16 %v30
    %v101 = vunpack.c.l.b16 %v31
    %v102 = vunpack.c.l.b16 %v32
    %v103 = vunpack.c.l.b16 %v33
    %v104 = vunpack.c.l.b16 %v34
    %v105 = vunpack.c.l.b16 %v35
    %v106 = vunpack.c.l.b16 %v36
    %v107 = vunpack.c.l.b16 %v37
    %v108 = vunpack.c.l.b16 %v38
    %v109 = vunpack.c.l.b16 %v39
    %v110 = vunpack.c.l.b16 %v40
    %v111 = vunpack.c.l.b16 %v41
    %v112 = vunpack.c.l.b16 %v42
    %v113 = vunpack.c.l.b16 %v43
    %v114 = vunpack.c.l.b16 %v44
    %v115 = vunpack.c.l.b16 %v45
    %v116 = vunpack.c.l.b16 %v46
    %v117 = vunpack.c.l.b16 %v47
    %v118 = vunpack.c.l.b16 %v48
    %v119 = vunpack.c.l.b16 %v49
    %v120 = vunpack.c.l.b16 %v50
    %v121 = vunpack.c.l.b16 %v51
    %v122 = vunpack.c.l.b16 %v52
    %v123 = vunpack.c.l.b16 %v53
    %v124 = vunpack.c.l.b16 %v54
    %v125 = vunpack.c.l.b16 %v55
    %v126 = vunpack.c.l.b16 %v56
    %v127 = vunpack.c.l.b16 %v57
    %v128 = vunpack.c.l.b16 %v58
    %v129 = vunpack.c.l.b16 %v59
    %v130 = vpack.c.b16 %v99, %v98
    %v131 = vpack.c.b16 %v101, %v100
    %v132 = vpack.c.b16 %v103, %v102
    %v133 = vpack.c.b16 %v105, %v104
    %v134 = vpack.c.b16 %v107, %v106
    %v135 = vpack.c.b16 %v109, %v108
    %v136 = vpack.c.b16 %v111, %v110
    %v137 = vpack.c.b16 %v113, %v112
    %v138 = vpack.c.b16 %v115, %v114
    %v139 = vpack.c.b16 %v117, %v116
    %v140 = vpack.c.b16 %v119, %v118
    %v141 = vpack.c.b16 %v121, %v120
    %v142 = vpack.c.b16 %v123, %v122
    %v143 = vpack.c.b16 %v125, %v124
    %v144 = vpack.c.b16 %v127, %v126
    %v145 = vpack.c.b16 %v129, %v128
    %v152 = vunpack.c.l.b16 %v60
    %v153 = vunpack.c.h.b16 %v60
    %v154 = vunpack.c.l.b16 %v61
    %v155 = vunpack.c.h.b16 %v61
    %v156 = vunpack.c.l.b16 %v62
    %v157 = vunpack.c.h.b16 %v62
    %v158 = vunpack.c.l.b16 %v63
    %v159 = vunpack.c.h.b16 %v63
    %v160 = vunpack.c.l.b16 %v64
    %v161 = vunpack.c.h.b16 %v64
    %v162 = vunpack.c.l.b16 %v65
    %v163 = vunpack.c.h.b16 %v65
    %v164 = vpack.c.b16 %v156, %v152
    %v165 = vpack.c.b16 %v157, %v153
    %v166 = vpack.c.b16 %v158, %v154
    %v167 = vpack.c.b16 %v159, %v155
    %v168 = vpack.c.b16 %v160, %v160
    %v169 = vpack.c.b16 %v161, %v161
    %v170 = vpack.c.b16 %v162, %v162
    %v171 = vpack.c.b16 %v163, %v163
    %vm176 = vcmask 138240
    %v178 = vsel %vm176, %v130, 0
    %v181 = vsel %vm176, %v131, 0
    %v184 = vsel %vm176, %v132, 0
    %v187 = vsel %vm176, %v133, 0
    %v190 = vsel %vm176, %v134, 0
    %v193 = vsel %vm176, %v135, 0
    %v196 = vsel %vm176, %v136, 0
    %v199 = vsel %vm176, %v137, 0
    %v202 = vsel %vm176, %v138, 0
    %v205 = vsel %vm176, %v139, 0
    %v208 = vsel %vm176, %v140, 0
    %v211 = vsel %vm176, %v141, 0
    %v214 = vsel %vm176, %v142, 0
    %v217 = vsel %vm176, %v143, 0
    %v220 = vsel %vm176, %v144, 0
    %v223 = vsel %vm176, %v145, 0
    %vm225 = vcmask 1040384
    %v226 = vsel 0, 4294967295, 65535
    %v227 = vsel %vm225, %v226, 0
    %v229 = vand.u32 %v168, %v227
    %v232 = vand.u32 %v169, %v227
    %v235 = vand.u32 %v170, %v227
    %v238 = vand.u32 %v171, %v227
    %240 = vmatpush.bf16.msra.mxu0 0
    %241 = vmatpush.bf16.msra.mxu0 0
    %242 = vmatpush.bf16.msra.mxu0 0
    %243 = vmatpush.bf16.msra.mxu0 0
    %244 = vmatpush.bf16.msra.mxu0 0
    %245 = vmatpush.bf16.msra.mxu0 0
    %246 = vmatpush.bf16.msra.mxu0 %v229
    %247 = vmatpush.bf16.msra.mxu0 %v164
    %248 = vmatmul.bf16.gmra.mxu0 %v178
    %v249 = vpop.f32.mrf.mxu0
    %v250 = vadd.f32 0.0, %v249
    %v251 = vpop.f32.mrf.mxu0
    %v252 = vadd.f32 0.0, %v251
    %253 = vmatmul.bf16.gmra.mxu0 %v181
    %v254 = vpop.f32.mrf.mxu0
    %v255 = vadd.f32 0.0, %v254
    %v256 = vpop.f32.mrf.mxu0
    %v257 = vadd.f32 0.0, %v256
    %258 = vmatmul.bf16.gmra.mxu0 %v184
    %v259 = vpop.f32.mrf.mxu0
    %v260 = vadd.f32 0.0, %v259
    %v261 = vpop.f32.mrf.mxu0
    %v262 = vadd.f32 0.0, %v261
    %263 = vmatmul.bf16.gmra.mxu0 %v187
    %v264 = vpop.f32.mrf.mxu0
    %v265 = vadd.f32 0.0, %v264
    %v266 = vpop.f32.mrf.mxu0
    %v267 = vadd.f32 0.0, %v266
    %268 = vmatmul.bf16.gmra.mxu0 %v190
    %v269 = vpop.f32.mrf.mxu0
    %v270 = vadd.f32 0.0, %v269
    %v271 = vpop.f32.mrf.mxu0
    %v272 = vadd.f32 0.0, %v271
    %273 = vmatmul.bf16.gmra.mxu0 %v193
    %v274 = vpop.f32.mrf.mxu0
    %v275 = vadd.f32 0.0, %v274
    %v276 = vpop.f32.mrf.mxu0
    %v277 = vadd.f32 0.0, %v276
    %278 = vmatmul.bf16.gmra.mxu0 %v196
    %v279 = vpop.f32.mrf.mxu0
    %v280 = vadd.f32 0.0, %v279
    %v281 = vpop.f32.mrf.mxu0
    %v282 = vadd.f32 0.0, %v281
    %283 = vmatmul.bf16.gmra.mxu0 %v199
    %v284 = vpop.f32.mrf.mxu0
    %v285 = vadd.f32 0.0, %v284
    %v286 = vpop.f32.mrf.mxu0
    %v287 = vadd.f32 0.0, %v286
    %288 = vmatmul.bf16.gmra.mxu0 %v202
    %v289 = vpop.f32.mrf.mxu0
    %v290 = vadd.f32 0.0, %v289
    %v291 = vpop.f32.mrf.mxu0
    %v292 = vadd.f32 0.0, %v291
    %293 = vmatmul.bf16.gmra.mxu0 %v205
    %v294 = vpop.f32.mrf.mxu0
    %v295 = vadd.f32 0.0, %v294
    %v296 = vpop.f32.mrf.mxu0
    %v297 = vadd.f32 0.0, %v296
    %298 = vmatmul.bf16.gmra.mxu0 %v208
    %v299 = vpop.f32.mrf.mxu0
    %v300 = vadd.f32 0.0, %v299
    %v301 = vpop.f32.mrf.mxu0
    %v302 = vadd.f32 0.0, %v301
    %303 = vmatmul.bf16.gmra.mxu0 %v211
    %v304 = vpop.f32.mrf.mxu0
    %v305 = vadd.f32 0.0, %v304
    %v306 = vpop.f32.mrf.mxu0
    %v307 = vadd.f32 0.0, %v306
    %308 = vmatmul.bf16.gmra.mxu0 %v214
    %v309 = vpop.f32.mrf.mxu0
    %v310 = vadd.f32 0.0, %v309
    %v311 = vpop.f32.mrf.mxu0
    %v312 = vadd.f32 0.0, %v311
    %313 = vmatmul.bf16.gmra.mxu0 %v217
    %v314 = vpop.f32.mrf.mxu0
    %v315 = vadd.f32 0.0, %v314
    %v316 = vpop.f32.mrf.mxu0
    %v317 = vadd.f32 0.0, %v316
    %318 = vmatmul.bf16.gmra.mxu0 %v220
    %v319 = vpop.f32.mrf.mxu0
    %v320 = vadd.f32 0.0, %v319
    %v321 = vpop.f32.mrf.mxu0
    %v322 = vadd.f32 0.0, %v321
    %323 = vmatmul.bf16.gmra.mxu0 %v223
    %v324 = vpop.f32.mrf.mxu0
    %v325 = vadd.f32 0.0, %v324
    %v326 = vpop.f32.mrf.mxu0
    %v327 = vadd.f32 0.0, %v326
    %328 = vdwg.mxu0
    %329 = vmatpush.bf16.msra.mxu0 0
    %330 = vmatpush.bf16.msra.mxu0 0
    %331 = vmatpush.bf16.msra.mxu0 0
    %332 = vmatpush.bf16.msra.mxu0 0
    %333 = vmatpush.bf16.msra.mxu0 0
    %334 = vmatpush.bf16.msra.mxu0 0
    %335 = vmatpush.bf16.msra.mxu0 %v232
    %336 = vmatpush.bf16.msra.mxu0 %v165
    %337 = vmatmul.bf16.gmra.mxu0 %v178
    %v338 = vpop.f32.mrf.mxu0
    %v339 = vadd.f32 0.0, %v338
    %v340 = vpop.f32.mrf.mxu0
    %v341 = vadd.f32 0.0, %v340
    %342 = vmatmul.bf16.gmra.mxu0 %v181
    %v343 = vpop.f32.mrf.mxu0
    %v344 = vadd.f32 0.0, %v343
    %v345 = vpop.f32.mrf.mxu0
    %v346 = vadd.f32 0.0, %v345
    %347 = vmatmul.bf16.gmra.mxu0 %v184
    %v348 = vpop.f32.mrf.mxu0
    %v349 = vadd.f32 0.0, %v348
    %v350 = vpop.f32.mrf.mxu0
    %v351 = vadd.f32 0.0, %v350
    %352 = vmatmul.bf16.gmra.mxu0 %v187
    %v353 = vpop.f32.mrf.mxu0
    %v354 = vadd.f32 0.0, %v353
    %v355 = vpop.f32.mrf.mxu0
    %v356 = vadd.f32 0.0, %v355
    %357 = vmatmul.bf16.gmra.mxu0 %v190
    %v358 = vpop.f32.mrf.mxu0
    %v359 = vadd.f32 0.0, %v358
    %v360 = vpop.f32.mrf.mxu0
    %v361 = vadd.f32 0.0, %v360
    %362 = vmatmul.bf16.gmra.mxu0 %v193
    %v363 = vpop.f32.mrf.mxu0
    %v364 = vadd.f32 0.0, %v363
    %v365 = vpop.f32.mrf.mxu0
    %v366 = vadd.f32 0.0, %v365
    %367 = vmatmul.bf16.gmra.mxu0 %v196
    %v368 = vpop.f32.mrf.mxu0
    %v369 = vadd.f32 0.0, %v368
    %v370 = vpop.f32.mrf.mxu0
    %v371 = vadd.f32 0.0, %v370
    %372 = vmatmul.bf16.gmra.mxu0 %v199
    %v373 = vpop.f32.mrf.mxu0
    %v374 = vadd.f32 0.0, %v373
    %v375 = vpop.f32.mrf.mxu0
    %v376 = vadd.f32 0.0, %v375
    %377 = vmatmul.bf16.gmra.mxu0 %v202
    %v378 = vpop.f32.mrf.mxu0
    %v379 = vadd.f32 0.0, %v378
    %v380 = vpop.f32.mrf.mxu0
    %v381 = vadd.f32 0.0, %v380
    %382 = vmatmul.bf16.gmra.mxu0 %v205
    %v383 = vpop.f32.mrf.mxu0
    %v384 = vadd.f32 0.0, %v383
    %v385 = vpop.f32.mrf.mxu0
    %v386 = vadd.f32 0.0, %v385
    %387 = vmatmul.bf16.gmra.mxu0 %v208
    %v388 = vpop.f32.mrf.mxu0
    %v389 = vadd.f32 0.0, %v388
    %v390 = vpop.f32.mrf.mxu0
    %v391 = vadd.f32 0.0, %v390
    %392 = vmatmul.bf16.gmra.mxu0 %v211
    %v393 = vpop.f32.mrf.mxu0
    %v394 = vadd.f32 0.0, %v393
    %v395 = vpop.f32.mrf.mxu0
    %v396 = vadd.f32 0.0, %v395
    %397 = vmatmul.bf16.gmra.mxu0 %v214
    %v398 = vpop.f32.mrf.mxu0
    %v399 = vadd.f32 0.0, %v398
    %v400 = vpop.f32.mrf.mxu0
    %v401 = vadd.f32 0.0, %v400
    %402 = vmatmul.bf16.gmra.mxu0 %v217
    %v403 = vpop.f32.mrf.mxu0
    %v404 = vadd.f32 0.0, %v403
    %v405 = vpop.f32.mrf.mxu0
    %v406 = vadd.f32 0.0, %v405
    %407 = vmatmul.bf16.gmra.mxu0 %v220
    %v408 = vpop.f32.mrf.mxu0
    %v409 = vadd.f32 0.0, %v408
    %v410 = vpop.f32.mrf.mxu0
    %v411 = vadd.f32 0.0, %v410
    %412 = vmatmul.bf16.gmra.mxu0 %v223
    %v413 = vpop.f32.mrf.mxu0
    %v414 = vadd.f32 0.0, %v413
    %v415 = vpop.f32.mrf.mxu0
    %v416 = vadd.f32 0.0, %v415
    %417 = vdwg.mxu0
    %418 = vmatpush.bf16.msra.mxu0 0
    %419 = vmatpush.bf16.msra.mxu0 0
    %420 = vmatpush.bf16.msra.mxu0 0
    %421 = vmatpush.bf16.msra.mxu0 0
    %422 = vmatpush.bf16.msra.mxu0 0
    %423 = vmatpush.bf16.msra.mxu0 0
    %424 = vmatpush.bf16.msra.mxu0 %v235
    %425 = vmatpush.bf16.msra.mxu0 %v166
    %426 = vmatmul.bf16.gmra.mxu0 %v178
    %v427 = vpop.f32.mrf.mxu0
    %v428 = vadd.f32 0.0, %v427
    %v429 = vpop.f32.mrf.mxu0
    %v430 = vadd.f32 0.0, %v429
    %431 = vmatmul.bf16.gmra.mxu0 %v181
    %v432 = vpop.f32.mrf.mxu0
    %v433 = vadd.f32 0.0, %v432
    %v434 = vpop.f32.mrf.mxu0
    %v435 = vadd.f32 0.0, %v434
    %436 = vmatmul.bf16.gmra.mxu0 %v184
    %v437 = vpop.f32.mrf.mxu0
    %v438 = vadd.f32 0.0, %v437
    %v439 = vpop.f32.mrf.mxu0
    %v440 = vadd.f32 0.0, %v439
    %441 = vmatmul.bf16.gmra.mxu0 %v187
    %v442 = vpop.f32.mrf.mxu0
    %v443 = vadd.f32 0.0, %v442
    %v444 = vpop.f32.mrf.mxu0
    %v445 = vadd.f32 0.0, %v444
    %446 = vmatmul.bf16.gmra.mxu0 %v190
    %v447 = vpop.f32.mrf.mxu0
    %v448 = vadd.f32 0.0, %v447
    %v449 = vpop.f32.mrf.mxu0
    %v450 = vadd.f32 0.0, %v449
    %451 = vmatmul.bf16.gmra.mxu0 %v193
    %v452 = vpop.f32.mrf.mxu0
    %v453 = vadd.f32 0.0, %v452
    %v454 = vpop.f32.mrf.mxu0
    %v455 = vadd.f32 0.0, %v454
    %456 = vmatmul.bf16.gmra.mxu0 %v196
    %v457 = vpop.f32.mrf.mxu0
    %v458 = vadd.f32 0.0, %v457
    %v459 = vpop.f32.mrf.mxu0
    %v460 = vadd.f32 0.0, %v459
    %461 = vmatmul.bf16.gmra.mxu0 %v199
    %v462 = vpop.f32.mrf.mxu0
    %v463 = vadd.f32 0.0, %v462
    %v464 = vpop.f32.mrf.mxu0
    %v465 = vadd.f32 0.0, %v464
    %466 = vmatmul.bf16.gmra.mxu0 %v202
    %v467 = vpop.f32.mrf.mxu0
    %v468 = vadd.f32 0.0, %v467
    %v469 = vpop.f32.mrf.mxu0
    %v470 = vadd.f32 0.0, %v469
    %471 = vmatmul.bf16.gmra.mxu0 %v205
    %v472 = vpop.f32.mrf.mxu0
    %v473 = vadd.f32 0.0, %v472
    %v474 = vpop.f32.mrf.mxu0
    %v475 = vadd.f32 0.0, %v474
    %476 = vmatmul.bf16.gmra.mxu0 %v208
    %v477 = vpop.f32.mrf.mxu0
    %v478 = vadd.f32 0.0, %v477
    %v479 = vpop.f32.mrf.mxu0
    %v480 = vadd.f32 0.0, %v479
    %481 = vmatmul.bf16.gmra.mxu0 %v211
    %v482 = vpop.f32.mrf.mxu0
    %v483 = vadd.f32 0.0, %v482
    %v484 = vpop.f32.mrf.mxu0
    %v485 = vadd.f32 0.0, %v484
    %486 = vmatmul.bf16.gmra.mxu0 %v214
    %v487 = vpop.f32.mrf.mxu0
    %v488 = vadd.f32 0.0, %v487
    %v489 = vpop.f32.mrf.mxu0
    %v490 = vadd.f32 0.0, %v489
    %491 = vmatmul.bf16.gmra.mxu0 %v217
    %v492 = vpop.f32.mrf.mxu0
    %v493 = vadd.f32 0.0, %v492
    %v494 = vpop.f32.mrf.mxu0
    %v495 = vadd.f32 0.0, %v494
    %496 = vmatmul.bf16.gmra.mxu0 %v220
    %v497 = vpop.f32.mrf.mxu0
    %v498 = vadd.f32 0.0, %v497
    %v499 = vpop.f32.mrf.mxu0
    %v500 = vadd.f32 0.0, %v499
    %501 = vmatmul.bf16.gmra.mxu0 %v223
    %v502 = vpop.f32.mrf.mxu0
    %v503 = vadd.f32 0.0, %v502
    %v504 = vpop.f32.mrf.mxu0
    %v505 = vadd.f32 0.0, %v504
    %506 = vdwg.mxu0
    %507 = vmatpush.bf16.msra.mxu0 0
    %508 = vmatpush.bf16.msra.mxu0 0
    %509 = vmatpush.bf16.msra.mxu0 0
    %510 = vmatpush.bf16.msra.mxu0 0
    %511 = vmatpush.bf16.msra.mxu0 0
    %512 = vmatpush.bf16.msra.mxu0 0
    %513 = vmatpush.bf16.msra.mxu0 %v238
    %514 = vmatpush.bf16.msra.mxu0 %v167
    %515 = vmatmul.bf16.gmra.mxu0 %v178
    %v516 = vpop.f32.mrf.mxu0
    %v517 = vadd.f32 0.0, %v516
    %v518 = vpop.f32.mrf.mxu0
    %v519 = vadd.f32 0.0, %v518
    %520 = vmatmul.bf16.gmra.mxu0 %v181
    %v521 = vpop.f32.mrf.mxu0
    %v522 = vadd.f32 0.0, %v521
    %v523 = vpop.f32.mrf.mxu0
    %v524 = vadd.f32 0.0, %v523
    %525 = vmatmul.bf16.gmra.mxu0 %v184
    %v526 = vpop.f32.mrf.mxu0
    %v527 = vadd.f32 0.0, %v526
    %v528 = vpop.f32.mrf.mxu0
    %v529 = vadd.f32 0.0, %v528
    %530 = vmatmul.bf16.gmra.mxu0 %v187
    %v531 = vpop.f32.mrf.mxu0
    %v532 = vadd.f32 0.0, %v531
    %v533 = vpop.f32.mrf.mxu0
    %v534 = vadd.f32 0.0, %v533
    %535 = vmatmul.bf16.gmra.mxu0 %v190
    %v536 = vpop.f32.mrf.mxu0
    %v537 = vadd.f32 0.0, %v536
    %v538 = vpop.f32.mrf.mxu0
    %v539 = vadd.f32 0.0, %v538
    %540 = vmatmul.bf16.gmra.mxu0 %v193
    %v541 = vpop.f32.mrf.mxu0
    %v542 = vadd.f32 0.0, %v541
    %v543 = vpop.f32.mrf.mxu0
    %v544 = vadd.f32 0.0, %v543
    %545 = vmatmul.bf16.gmra.mxu0 %v196
    %v546 = vpop.f32.mrf.mxu0
    %v547 = vadd.f32 0.0, %v546
    %v548 = vpop.f32.mrf.mxu0
    %v549 = vadd.f32 0.0, %v548
    %550 = vmatmul.bf16.gmra.mxu0 %v199
    %v551 = vpop.f32.mrf.mxu0
    %v552 = vadd.f32 0.0, %v551
    %v553 = vpop.f32.mrf.mxu0
    %v554 = vadd.f32 0.0, %v553
    %555 = vmatmul.bf16.gmra.mxu0 %v202
    %v556 = vpop.f32.mrf.mxu0
    %v557 = vadd.f32 0.0, %v556
    %v558 = vpop.f32.mrf.mxu0
    %v559 = vadd.f32 0.0, %v558
    %560 = vmatmul.bf16.gmra.mxu0 %v205
    %v561 = vpop.f32.mrf.mxu0
    %v562 = vadd.f32 0.0, %v561
    %v563 = vpop.f32.mrf.mxu0
    %v564 = vadd.f32 0.0, %v563
    %565 = vmatmul.bf16.gmra.mxu0 %v208
    %v566 = vpop.f32.mrf.mxu0
    %v567 = vadd.f32 0.0, %v566
    %v568 = vpop.f32.mrf.mxu0
    %v569 = vadd.f32 0.0, %v568
    %570 = vmatmul.bf16.gmra.mxu0 %v211
    %v571 = vpop.f32.mrf.mxu0
    %v572 = vadd.f32 0.0, %v571
    %v573 = vpop.f32.mrf.mxu0
    %v574 = vadd.f32 0.0, %v573
    %575 = vmatmul.bf16.gmra.mxu0 %v214
    %v576 = vpop.f32.mrf.mxu0
    %v577 = vadd.f32 0.0, %v576
    %v578 = vpop.f32.mrf.mxu0
    %v579 = vadd.f32 0.0, %v578
    %580 = vmatmul.bf16.gmra.mxu0 %v217
    %v581 = vpop.f32.mrf.mxu0
    %v582 = vadd.f32 0.0, %v581
    %v583 = vpop.f32.mrf.mxu0
    %v584 = vadd.f32 0.0, %v583
    %585 = vmatmul.bf16.gmra.mxu0 %v220
    %v586 = vpop.f32.mrf.mxu0
    %v587 = vadd.f32 0.0, %v586
    %v588 = vpop.f32.mrf.mxu0
    %v589 = vadd.f32 0.0, %v588
    %590 = vmatmul.bf16.gmra.mxu0 %v223
    %v591 = vpop.f32.mrf.mxu0
    %v592 = vadd.f32 0.0, %v591
    %v593 = vpop.f32.mrf.mxu0
    %v594 = vadd.f32 0.0, %v593
    %595 = vdwg.mxu0
    %v596 = vadd.f32 %v250, %v339
    %v597 = vadd.f32 %v596, %v428
    %v598 = vadd.f32 %v597, %v517
    %599 = vadd.xlane.f32.xlu0 %v598
    %v600 = vpop.xlane.xlu0 %599
    %v601 = vadd.f32 %v252, %v341
    %v602 = vadd.f32 %v601, %v430
    %v603 = vadd.f32 %v602, %v519
    %604 = vadd.xlane.f32.xlu0 %v603
    %v605 = vpop.xlane.xlu0 %604
    %v606 = vadd.f32 %v255, %v344
    %v607 = vadd.f32 %v606, %v433
    %v608 = vadd.f32 %v607, %v522
    %609 = vadd.xlane.f32.xlu0 %v608
    %v610 = vpop.xlane.xlu0 %609
    %v611 = vadd.f32 %v257, %v346
    %v612 = vadd.f32 %v611, %v435
    %v613 = vadd.f32 %v612, %v524
    %614 = vadd.xlane.f32.xlu0 %v613
    %v615 = vpop.xlane.xlu0 %614
    %v616 = vadd.f32 %v260, %v349
    %v617 = vadd.f32 %v616, %v438
    %v618 = vadd.f32 %v617, %v527
    %619 = vadd.xlane.f32.xlu0 %v618
    %v620 = vpop.xlane.xlu0 %619
    %v621 = vadd.f32 %v262, %v351
    %v622 = vadd.f32 %v621, %v440
    %v623 = vadd.f32 %v622, %v529
    %624 = vadd.xlane.f32.xlu0 %v623
    %v625 = vpop.xlane.xlu0 %624
    %v626 = vadd.f32 %v265, %v354
    %v627 = vadd.f32 %v626, %v443
    %v628 = vadd.f32 %v627, %v532
    %629 = vadd.xlane.f32.xlu0 %v628
    %v630 = vpop.xlane.xlu0 %629
    %v631 = vadd.f32 %v267, %v356
    %v632 = vadd.f32 %v631, %v445
    %v633 = vadd.f32 %v632, %v534
    %634 = vadd.xlane.f32.xlu0 %v633
    %v635 = vpop.xlane.xlu0 %634
    %v636 = vadd.f32 %v600, 0.0
    %v637 = vadd.f32 %v605, 0.0
    %v638 = vadd.f32 %v610, 0.0
    %v639 = vadd.f32 %v615, 0.0
    %v640 = vadd.f32 %v620, 0.0
    %v641 = vadd.f32 %v625, 0.0
    %v642 = vadd.f32 %v630, 0.0
    %v643 = vadd.f32 %v635, 0.0
    %v644 = vmul.f32 %v250, %v250
    %v645 = vmul.f32 %v339, %v339
    %v646 = vmul.f32 %v428, %v428
    %v647 = vmul.f32 %v517, %v517
    %v648 = vmul.f32 %v252, %v252
    %v649 = vmul.f32 %v341, %v341
    %v650 = vmul.f32 %v430, %v430
    %v651 = vmul.f32 %v519, %v519
    %v652 = vmul.f32 %v255, %v255
    %v653 = vmul.f32 %v344, %v344
    %v654 = vmul.f32 %v433, %v433
    %v655 = vmul.f32 %v522, %v522
    %v656 = vmul.f32 %v257, %v257
    %v657 = vmul.f32 %v346, %v346
    %v658 = vmul.f32 %v435, %v435
    %v659 = vmul.f32 %v524, %v524
    %v660 = vmul.f32 %v260, %v260
    %v661 = vmul.f32 %v349, %v349
    %v662 = vmul.f32 %v438, %v438
    %v663 = vmul.f32 %v527, %v527
    %v664 = vmul.f32 %v262, %v262
    %v665 = vmul.f32 %v351, %v351
    %v666 = vmul.f32 %v440, %v440
    %v667 = vmul.f32 %v529, %v529
    %v668 = vmul.f32 %v265, %v265
    %v669 = vmul.f32 %v354, %v354
    %v670 = vmul.f32 %v443, %v443
    %v671 = vmul.f32 %v532, %v532
    %v672 = vmul.f32 %v267, %v267
    %v673 = vmul.f32 %v356, %v356
    %v674 = vmul.f32 %v445, %v445
    %v675 = vmul.f32 %v534, %v534
    %v676 = vadd.f32 %v644, %v645
    %v677 = vadd.f32 %v676, %v646
    %v678 = vadd.f32 %v677, %v647
    %679 = vadd.xlane.f32.xlu0 %v678
    %v680 = vpop.xlane.xlu0 %679
    %v681 = vadd.f32 %v648, %v649
    %v682 = vadd.f32 %v681, %v650
    %v683 = vadd.f32 %v682, %v651
    %684 = vadd.xlane.f32.xlu0 %v683
    %v685 = vpop.xlane.xlu0 %684
    %v686 = vadd.f32 %v652, %v653
    %v687 = vadd.f32 %v686, %v654
    %v688 = vadd.f32 %v687, %v655
    %689 = vadd.xlane.f32.xlu0 %v688
    %v690 = vpop.xlane.xlu0 %689
    %v691 = vadd.f32 %v656, %v657
    %v692 = vadd.f32 %v691, %v658
    %v693 = vadd.f32 %v692, %v659
    %694 = vadd.xlane.f32.xlu0 %v693
    %v695 = vpop.xlane.xlu0 %694
    %v696 = vadd.f32 %v660, %v661
    %v697 = vadd.f32 %v696, %v662
    %v698 = vadd.f32 %v697, %v663
    %699 = vadd.xlane.f32.xlu0 %v698
    %v700 = vpop.xlane.xlu0 %699
    %v701 = vadd.f32 %v664, %v665
    %v702 = vadd.f32 %v701, %v666
    %v703 = vadd.f32 %v702, %v667
    %704 = vadd.xlane.f32.xlu0 %v703
    %v705 = vpop.xlane.xlu0 %704
    %v706 = vadd.f32 %v668, %v669
    %v707 = vadd.f32 %v706, %v670
    %v708 = vadd.f32 %v707, %v671
    %709 = vadd.xlane.f32.xlu0 %v708
    %v710 = vpop.xlane.xlu0 %709
    %v711 = vadd.f32 %v672, %v673
    %v712 = vadd.f32 %v711, %v674
    %v713 = vadd.f32 %v712, %v675
    %714 = vadd.xlane.f32.xlu0 %v713
    %v715 = vpop.xlane.xlu0 %714
    %v716 = vadd.f32 %v680, 0.0
    %v717 = vadd.f32 %v685, 0.0
    %v718 = vadd.f32 %v690, 0.0
    %v719 = vadd.f32 %v695, 0.0
    %v720 = vadd.f32 %v700, 0.0
    %v721 = vadd.f32 %v705, 0.0
    %v722 = vadd.f32 %v710, 0.0
    %v723 = vadd.f32 %v715, 0.0
    %v724 = vadd.f32 %v270, %v359
    %v725 = vadd.f32 %v724, %v448
    %v726 = vadd.f32 %v725, %v537
    %727 = vadd.xlane.f32.xlu0 %v726
    %v728 = vpop.xlane.xlu0 %727
    %v729 = vadd.f32 %v272, %v361
    %v730 = vadd.f32 %v729, %v450
    %v731 = vadd.f32 %v730, %v539
    %732 = vadd.xlane.f32.xlu0 %v731
    %v733 = vpop.xlane.xlu0 %732
    %v734 = vadd.f32 %v275, %v364
    %v735 = vadd.f32 %v734, %v453
    %v736 = vadd.f32 %v735, %v542
    %737 = vadd.xlane.f32.xlu0 %v736
    %v738 = vpop.xlane.xlu0 %737
    %v739 = vadd.f32 %v277, %v366
    %v740 = vadd.f32 %v739, %v455
    %v741 = vadd.f32 %v740, %v544
    %742 = vadd.xlane.f32.xlu0 %v741
    %v743 = vpop.xlane.xlu0 %742
    %v744 = vadd.f32 %v280, %v369
    %v745 = vadd.f32 %v744, %v458
    %v746 = vadd.f32 %v745, %v547
    %747 = vadd.xlane.f32.xlu0 %v746
    %v748 = vpop.xlane.xlu0 %747
    %v749 = vadd.f32 %v282, %v371
    %v750 = vadd.f32 %v749, %v460
    %v751 = vadd.f32 %v750, %v549
    %752 = vadd.xlane.f32.xlu0 %v751
    %v753 = vpop.xlane.xlu0 %752
    %v754 = vadd.f32 %v285, %v374
    %v755 = vadd.f32 %v754, %v463
    %v756 = vadd.f32 %v755, %v552
    %757 = vadd.xlane.f32.xlu0 %v756
    %v758 = vpop.xlane.xlu0 %757
    %v759 = vadd.f32 %v287, %v376
    %v760 = vadd.f32 %v759, %v465
    %v761 = vadd.f32 %v760, %v554
    %762 = vadd.xlane.f32.xlu0 %v761
    %v763 = vpop.xlane.xlu0 %762
    %v764 = vadd.f32 %v636, %v728
    %v765 = vadd.f32 %v637, %v733
    %v766 = vadd.f32 %v638, %v738
    %v767 = vadd.f32 %v639, %v743
    %v768 = vadd.f32 %v640, %v748
    %v769 = vadd.f32 %v641, %v753
    %v770 = vadd.f32 %v642, %v758
    %v771 = vadd.f32 %v643, %v763
    %v772 = vmul.f32 %v270, %v270
    %v773 = vmul.f32 %v359, %v359
    %v774 = vmul.f32 %v448, %v448
    %v775 = vmul.f32 %v537, %v537
    %v776 = vmul.f32 %v272, %v272
    %v777 = vmul.f32 %v361, %v361
    %v778 = vmul.f32 %v450, %v450
    %v779 = vmul.f32 %v539, %v539
    %v780 = vmul.f32 %v275, %v275
    %v781 = vmul.f32 %v364, %v364
    %v782 = vmul.f32 %v453, %v453
    %v783 = vmul.f32 %v542, %v542
    %v784 = vmul.f32 %v277, %v277
    %v785 = vmul.f32 %v366, %v366
    %v786 = vmul.f32 %v455, %v455
    %v787 = vmul.f32 %v544, %v544
    %v788 = vmul.f32 %v280, %v280
    %v789 = vmul.f32 %v369, %v369
    %v790 = vmul.f32 %v458, %v458
    %v791 = vmul.f32 %v547, %v547
    %v792 = vmul.f32 %v282, %v282
    %v793 = vmul.f32 %v371, %v371
    %v794 = vmul.f32 %v460, %v460
    %v795 = vmul.f32 %v549, %v549
    %v796 = vmul.f32 %v285, %v285
    %v797 = vmul.f32 %v374, %v374
    %v798 = vmul.f32 %v463, %v463
    %v799 = vmul.f32 %v552, %v552
    %v800 = vmul.f32 %v287, %v287
    %v801 = vmul.f32 %v376, %v376
    %v802 = vmul.f32 %v465, %v465
    %v803 = vmul.f32 %v554, %v554
    %v804 = vadd.f32 %v772, %v773
    %v805 = vadd.f32 %v804, %v774
    %v806 = vadd.f32 %v805, %v775
    %807 = vadd.xlane.f32.xlu0 %v806
    %v808 = vpop.xlane.xlu0 %807
    %v809 = vadd.f32 %v776, %v777
    %v810 = vadd.f32 %v809, %v778
    %v811 = vadd.f32 %v810, %v779
    %812 = vadd.xlane.f32.xlu0 %v811
    %v813 = vpop.xlane.xlu0 %812
    %v814 = vadd.f32 %v780, %v781
    %v815 = vadd.f32 %v814, %v782
    %v816 = vadd.f32 %v815, %v783
    %817 = vadd.xlane.f32.xlu0 %v816
    %v818 = vpop.xlane.xlu0 %817
    %v819 = vadd.f32 %v784, %v785
    %v820 = vadd.f32 %v819, %v786
    %v821 = vadd.f32 %v820, %v787
    %822 = vadd.xlane.f32.xlu0 %v821
    %v823 = vpop.xlane.xlu0 %822
    %v824 = vadd.f32 %v788, %v789
    %v825 = vadd.f32 %v824, %v790
    %v826 = vadd.f32 %v825, %v791
    %827 = vadd.xlane.f32.xlu0 %v826
    %v828 = vpop.xlane.xlu0 %827
    %v829 = vadd.f32 %v792, %v793
    %v830 = vadd.f32 %v829, %v794
    %v831 = vadd.f32 %v830, %v795
    %832 = vadd.xlane.f32.xlu0 %v831
    %v833 = vpop.xlane.xlu0 %832
    %v834 = vadd.f32 %v796, %v797
    %v835 = vadd.f32 %v834, %v798
    %v836 = vadd.f32 %v835, %v799
    %837 = vadd.xlane.f32.xlu0 %v836
    %v838 = vpop.xlane.xlu0 %837
    %v839 = vadd.f32 %v800, %v801
    %v840 = vadd.f32 %v839, %v802
    %v841 = vadd.f32 %v840, %v803
    %842 = vadd.xlane.f32.xlu0 %v841
    %v843 = vpop.xlane.xlu0 %842
    %v844 = vadd.f32 %v716, %v808
    %v845 = vadd.f32 %v717, %v813
    %v846 = vadd.f32 %v718, %v818
    %v847 = vadd.f32 %v719, %v823
    %v848 = vadd.f32 %v720, %v828
    %v849 = vadd.f32 %v721, %v833
    %v850 = vadd.f32 %v722, %v838
    %v851 = vadd.f32 %v723, %v843
    %v852 = vadd.f32 %v290, %v379
    %v853 = vadd.f32 %v852, %v468
    %v854 = vadd.f32 %v853, %v557
    %855 = vadd.xlane.f32.xlu0 %v854
    %v856 = vpop.xlane.xlu0 %855
    %v857 = vadd.f32 %v292, %v381
    %v858 = vadd.f32 %v857, %v470
    %v859 = vadd.f32 %v858, %v559
    %860 = vadd.xlane.f32.xlu0 %v859
    %v861 = vpop.xlane.xlu0 %860
    %v862 = vadd.f32 %v295, %v384
    %v863 = vadd.f32 %v862, %v473
    %v864 = vadd.f32 %v863, %v562
    %865 = vadd.xlane.f32.xlu0 %v864
    %v866 = vpop.xlane.xlu0 %865
    %v867 = vadd.f32 %v297, %v386
    %v868 = vadd.f32 %v867, %v475
    %v869 = vadd.f32 %v868, %v564
    %870 = vadd.xlane.f32.xlu0 %v869
    %v871 = vpop.xlane.xlu0 %870
    %v872 = vadd.f32 %v300, %v389
    %v873 = vadd.f32 %v872, %v478
    %v874 = vadd.f32 %v873, %v567
    %875 = vadd.xlane.f32.xlu0 %v874
    %v876 = vpop.xlane.xlu0 %875
    %v877 = vadd.f32 %v302, %v391
    %v878 = vadd.f32 %v877, %v480
    %v879 = vadd.f32 %v878, %v569
    %880 = vadd.xlane.f32.xlu0 %v879
    %v881 = vpop.xlane.xlu0 %880
    %v882 = vadd.f32 %v305, %v394
    %v883 = vadd.f32 %v882, %v483
    %v884 = vadd.f32 %v883, %v572
    %885 = vadd.xlane.f32.xlu0 %v884
    %v886 = vpop.xlane.xlu0 %885
    %v887 = vadd.f32 %v307, %v396
    %v888 = vadd.f32 %v887, %v485
    %v889 = vadd.f32 %v888, %v574
    %890 = vadd.xlane.f32.xlu0 %v889
    %v891 = vpop.xlane.xlu0 %890
    %v892 = vadd.f32 %v764, %v856
    %v893 = vadd.f32 %v765, %v861
    %v894 = vadd.f32 %v766, %v866
    %v895 = vadd.f32 %v767, %v871
    %v896 = vadd.f32 %v768, %v876
    %v897 = vadd.f32 %v769, %v881
    %v898 = vadd.f32 %v770, %v886
    %v899 = vadd.f32 %v771, %v891
    %v900 = vmul.f32 %v290, %v290
    %v901 = vmul.f32 %v379, %v379
    %v902 = vmul.f32 %v468, %v468
    %v903 = vmul.f32 %v557, %v557
    %v904 = vmul.f32 %v292, %v292
    %v905 = vmul.f32 %v381, %v381
    %v906 = vmul.f32 %v470, %v470
    %v907 = vmul.f32 %v559, %v559
    %v908 = vmul.f32 %v295, %v295
    %v909 = vmul.f32 %v384, %v384
    %v910 = vmul.f32 %v473, %v473
    %v911 = vmul.f32 %v562, %v562
    %v912 = vmul.f32 %v297, %v297
    %v913 = vmul.f32 %v386, %v386
    %v914 = vmul.f32 %v475, %v475
    %v915 = vmul.f32 %v564, %v564
    %v916 = vmul.f32 %v300, %v300
    %v917 = vmul.f32 %v389, %v389
    %v918 = vmul.f32 %v478, %v478
    %v919 = vmul.f32 %v567, %v567
    %v920 = vmul.f32 %v302, %v302
    %v921 = vmul.f32 %v391, %v391
    %v922 = vmul.f32 %v480, %v480
    %v923 = vmul.f32 %v569, %v569
    %v924 = vmul.f32 %v305, %v305
    %v925 = vmul.f32 %v394, %v394
    %v926 = vmul.f32 %v483, %v483
    %v927 = vmul.f32 %v572, %v572
    %v928 = vmul.f32 %v307, %v307
    %v929 = vmul.f32 %v396, %v396
    %v930 = vmul.f32 %v485, %v485
    %v931 = vmul.f32 %v574, %v574
    %v932 = vadd.f32 %v900, %v901
    %v933 = vadd.f32 %v932, %v902
    %v934 = vadd.f32 %v933, %v903
    %935 = vadd.xlane.f32.xlu0 %v934
    %v936 = vpop.xlane.xlu0 %935
    %v937 = vadd.f32 %v904, %v905
    %v938 = vadd.f32 %v937, %v906
    %v939 = vadd.f32 %v938, %v907
    %940 = vadd.xlane.f32.xlu0 %v939
    %v941 = vpop.xlane.xlu0 %940
    %v942 = vadd.f32 %v908, %v909
    %v943 = vadd.f32 %v942, %v910
    %v944 = vadd.f32 %v943, %v911
    %945 = vadd.xlane.f32.xlu0 %v944
    %v946 = vpop.xlane.xlu0 %945
    %v947 = vadd.f32 %v912, %v913
    %v948 = vadd.f32 %v947, %v914
    %v949 = vadd.f32 %v948, %v915
    %950 = vadd.xlane.f32.xlu0 %v949
    %v951 = vpop.xlane.xlu0 %950
    %v952 = vadd.f32 %v916, %v917
    %v953 = vadd.f32 %v952, %v918
    %v954 = vadd.f32 %v953, %v919
    %955 = vadd.xlane.f32.xlu0 %v954
    %v956 = vpop.xlane.xlu0 %955
    %v957 = vadd.f32 %v920, %v921
    %v958 = vadd.f32 %v957, %v922
    %v959 = vadd.f32 %v958, %v923
    %960 = vadd.xlane.f32.xlu0 %v959
    %v961 = vpop.xlane.xlu0 %960
    %v962 = vadd.f32 %v924, %v925
    %v963 = vadd.f32 %v962, %v926
    %v964 = vadd.f32 %v963, %v927
    %965 = vadd.xlane.f32.xlu0 %v964
    %v966 = vpop.xlane.xlu0 %965
    %v967 = vadd.f32 %v928, %v929
    %v968 = vadd.f32 %v967, %v930
    %v969 = vadd.f32 %v968, %v931
    %970 = vadd.xlane.f32.xlu0 %v969
    %v971 = vpop.xlane.xlu0 %970
    %v972 = vadd.f32 %v844, %v936
    %v973 = vadd.f32 %v845, %v941
    %v974 = vadd.f32 %v846, %v946
    %v975 = vadd.f32 %v847, %v951
    %v976 = vadd.f32 %v848, %v956
    %v977 = vadd.f32 %v849, %v961
    %v978 = vadd.f32 %v850, %v966
    %v979 = vadd.f32 %v851, %v971
    %v980 = vadd.f32 %v310, %v399
    %v981 = vadd.f32 %v980, %v488
    %v982 = vadd.f32 %v981, %v577
    %983 = vadd.xlane.f32.xlu0 %v982
    %v984 = vpop.xlane.xlu0 %983
    %v985 = vadd.f32 %v312, %v401
    %v986 = vadd.f32 %v985, %v490
    %v987 = vadd.f32 %v986, %v579
    %988 = vadd.xlane.f32.xlu0 %v987
    %v989 = vpop.xlane.xlu0 %988
    %v990 = vadd.f32 %v315, %v404
    %v991 = vadd.f32 %v990, %v493
    %v992 = vadd.f32 %v991, %v582
    %993 = vadd.xlane.f32.xlu0 %v992
    %v994 = vpop.xlane.xlu0 %993
    %v995 = vadd.f32 %v317, %v406
    %v996 = vadd.f32 %v995, %v495
    %v997 = vadd.f32 %v996, %v584
    %998 = vadd.xlane.f32.xlu0 %v997
    %v999 = vpop.xlane.xlu0 %998
    %v1000 = vadd.f32 %v320, %v409
    %v1001 = vadd.f32 %v1000, %v498
    %v1002 = vadd.f32 %v1001, %v587
    %1003 = vadd.xlane.f32.xlu0 %v1002
    %v1004 = vpop.xlane.xlu0 %1003
    %v1005 = vadd.f32 %v322, %v411
    %v1006 = vadd.f32 %v1005, %v500
    %v1007 = vadd.f32 %v1006, %v589
    %1008 = vadd.xlane.f32.xlu0 %v1007
    %v1009 = vpop.xlane.xlu0 %1008
    %v1010 = vadd.f32 %v325, %v414
    %v1011 = vadd.f32 %v1010, %v503
    %v1012 = vadd.f32 %v1011, %v592
    %1013 = vadd.xlane.f32.xlu0 %v1012
    %v1014 = vpop.xlane.xlu0 %1013
    %v1015 = vadd.f32 %v327, %v416
    %v1016 = vadd.f32 %v1015, %v505
    %v1017 = vadd.f32 %v1016, %v594
    %1018 = vadd.xlane.f32.xlu0 %v1017
    %v1019 = vpop.xlane.xlu0 %1018
    %v1020 = vadd.f32 %v892, %v984
    %v1021 = vadd.f32 %v893, %v989
    %v1022 = vadd.f32 %v894, %v994
    %v1023 = vadd.f32 %v895, %v999
    %v1024 = vadd.f32 %v896, %v1004
    %v1025 = vadd.f32 %v897, %v1009
    %v1026 = vadd.f32 %v898, %v1014
    %v1027 = vadd.f32 %v899, %v1019
    %v1028 = vmul.f32 %v310, %v310
    %v1029 = vmul.f32 %v399, %v399
    %v1030 = vmul.f32 %v488, %v488
    %v1031 = vmul.f32 %v577, %v577
    %v1032 = vmul.f32 %v312, %v312
    %v1033 = vmul.f32 %v401, %v401
    %v1034 = vmul.f32 %v490, %v490
    %v1035 = vmul.f32 %v579, %v579
    %v1036 = vmul.f32 %v315, %v315
    %v1037 = vmul.f32 %v404, %v404
    %v1038 = vmul.f32 %v493, %v493
    %v1039 = vmul.f32 %v582, %v582
    %v1040 = vmul.f32 %v317, %v317
    %v1041 = vmul.f32 %v406, %v406
    %v1042 = vmul.f32 %v495, %v495
    %v1043 = vmul.f32 %v584, %v584
    %v1044 = vmul.f32 %v320, %v320
    %v1045 = vmul.f32 %v409, %v409
    %v1046 = vmul.f32 %v498, %v498
    %v1047 = vmul.f32 %v587, %v587
    %v1048 = vmul.f32 %v322, %v322
    %v1049 = vmul.f32 %v411, %v411
    %v1050 = vmul.f32 %v500, %v500
    %v1051 = vmul.f32 %v589, %v589
    %v1052 = vmul.f32 %v325, %v325
    %v1053 = vmul.f32 %v414, %v414
    %v1054 = vmul.f32 %v503, %v503
    %v1055 = vmul.f32 %v592, %v592
    %v1056 = vmul.f32 %v327, %v327
    %v1057 = vmul.f32 %v416, %v416
    %v1058 = vmul.f32 %v505, %v505
    %v1059 = vmul.f32 %v594, %v594
    %v1060 = vadd.f32 %v1028, %v1029
    %v1061 = vadd.f32 %v1060, %v1030
    %v1062 = vadd.f32 %v1061, %v1031
    %1063 = vadd.xlane.f32.xlu0 %v1062
    %v1064 = vpop.xlane.xlu0 %1063
    %v1065 = vadd.f32 %v1032, %v1033
    %v1066 = vadd.f32 %v1065, %v1034
    %v1067 = vadd.f32 %v1066, %v1035
    %1068 = vadd.xlane.f32.xlu0 %v1067
    %v1069 = vpop.xlane.xlu0 %1068
    %v1070 = vadd.f32 %v1036, %v1037
    %v1071 = vadd.f32 %v1070, %v1038
    %v1072 = vadd.f32 %v1071, %v1039
    %1073 = vadd.xlane.f32.xlu0 %v1072
    %v1074 = vpop.xlane.xlu0 %1073
    %v1075 = vadd.f32 %v1040, %v1041
    %v1076 = vadd.f32 %v1075, %v1042
    %v1077 = vadd.f32 %v1076, %v1043
    %1078 = vadd.xlane.f32.xlu0 %v1077
    %v1079 = vpop.xlane.xlu0 %1078
    %v1080 = vadd.f32 %v1044, %v1045
    %v1081 = vadd.f32 %v1080, %v1046
    %v1082 = vadd.f32 %v1081, %v1047
    %1083 = vadd.xlane.f32.xlu0 %v1082
    %v1084 = vpop.xlane.xlu0 %1083
    %v1085 = vadd.f32 %v1048, %v1049
    %v1086 = vadd.f32 %v1085, %v1050
    %v1087 = vadd.f32 %v1086, %v1051
    %1088 = vadd.xlane.f32.xlu0 %v1087
    %v1089 = vpop.xlane.xlu0 %1088
    %v1090 = vadd.f32 %v1052, %v1053
    %v1091 = vadd.f32 %v1090, %v1054
    %v1092 = vadd.f32 %v1091, %v1055
    %1093 = vadd.xlane.f32.xlu0 %v1092
    %v1094 = vpop.xlane.xlu0 %1093
    %v1095 = vadd.f32 %v1056, %v1057
    %v1096 = vadd.f32 %v1095, %v1058
    %v1097 = vadd.f32 %v1096, %v1059
    %1098 = vadd.xlane.f32.xlu0 %v1097
    %v1099 = vpop.xlane.xlu0 %1098
    %v1100 = vadd.f32 %v972, %v1064
    %v1101 = vadd.f32 %v973, %v1069
    %v1102 = vadd.f32 %v974, %v1074
    %v1103 = vadd.f32 %v975, %v1079
    %v1104 = vadd.f32 %v976, %v1084
    %v1105 = vadd.f32 %v977, %v1089
    %v1106 = vadd.f32 %v978, %v1094
    %v1107 = vadd.f32 %v979, %v1099
    %v1108 = vmul.f32 %v1020, 0.00048828125
    %v1109 = vmul.f32 %v1021, 0.00048828125
    %v1110 = vmul.f32 %v1022, 0.00048828125
    %v1111 = vmul.f32 %v1023, 0.00048828125
    %v1112 = vmul.f32 %v1024, 0.00048828125
    %v1113 = vmul.f32 %v1025, 0.00048828125
    %v1114 = vmul.f32 %v1026, 0.00048828125
    %v1115 = vmul.f32 %v1027, 0.00048828125
    %v1116 = vmul.f32 %v1100, 0.00048828125
    %v1117 = vmul.f32 %v1101, 0.00048828125
    %v1118 = vmul.f32 %v1102, 0.00048828125
    %v1119 = vmul.f32 %v1103, 0.00048828125
    %v1120 = vmul.f32 %v1104, 0.00048828125
    %v1121 = vmul.f32 %v1105, 0.00048828125
    %v1122 = vmul.f32 %v1106, 0.00048828125
    %v1123 = vmul.f32 %v1107, 0.00048828125
    %v1124 = vmul.f32 %v1108, %v1108
    %v1125 = vmul.f32 %v1109, %v1109
    %v1126 = vmul.f32 %v1110, %v1110
    %v1127 = vmul.f32 %v1111, %v1111
    %v1128 = vmul.f32 %v1112, %v1112
    %v1129 = vmul.f32 %v1113, %v1113
    %v1130 = vmul.f32 %v1114, %v1114
    %v1131 = vmul.f32 %v1115, %v1115
    %v1132 = vsub.f32 %v1116, %v1124
    %v1133 = vsub.f32 %v1117, %v1125
    %v1134 = vsub.f32 %v1118, %v1126
    %v1135 = vsub.f32 %v1119, %v1127
    %v1136 = vsub.f32 %v1120, %v1128
    %v1137 = vsub.f32 %v1121, %v1129
    %v1138 = vsub.f32 %v1122, %v1130
    %v1139 = vsub.f32 %v1123, %v1131
    %v1140 = vmax.f32 %v1132, 0.0
    %v1141 = vmax.f32 %v1133, 0.0
    %v1142 = vmax.f32 %v1134, 0.0
    %v1143 = vmax.f32 %v1135, 0.0
    %v1144 = vmax.f32 %v1136, 0.0
    %v1145 = vmax.f32 %v1137, 0.0
    %v1146 = vmax.f32 %v1138, 0.0
    %v1147 = vmax.f32 %v1139, 0.0
    %v1148 = vadd.f32 %v1140, 1e-05
    %v1149 = vadd.f32 %v1141, 1e-05
    %v1150 = vadd.f32 %v1142, 1e-05
    %v1151 = vadd.f32 %v1143, 1e-05
    %v1152 = vadd.f32 %v1144, 1e-05
    %v1153 = vadd.f32 %v1145, 1e-05
    %v1154 = vadd.f32 %v1146, 1e-05
    %v1155 = vadd.f32 %v1147, 1e-05
    %v1156 = vrsqrt.pop %v1148
    %v1157 = vmul.f32 %v1156, %v1148
    %v1158 = vmul.f32 %v1157, %v1156
    %v1159 = vmul.f32 0.5, %v1158
    %v1160 = vsub.f32 1.5, %v1159
    %v1161 = vmul.f32 %v1156, %v1160
    %vm1162 = vweird.f32 %v1148
    %vm1163 = vweird.f32 %v1156
    %vm1164 = vmor %vm1162, %vm1163
    %v1165 = vsel %vm1164, %v1156, %v1161
    %v1166 = vrsqrt.pop %v1149
    %v1167 = vmul.f32 %v1166, %v1149
    %v1168 = vmul.f32 %v1167, %v1166
    %v1169 = vmul.f32 0.5, %v1168
    %v1170 = vsub.f32 1.5, %v1169
    %v1171 = vmul.f32 %v1166, %v1170
    %vm1172 = vweird.f32 %v1149
    %vm1173 = vweird.f32 %v1166
    %vm1174 = vmor %vm1172, %vm1173
    %v1175 = vsel %vm1174, %v1166, %v1171
    %v1176 = vrsqrt.pop %v1150
    %v1177 = vmul.f32 %v1176, %v1150
    %v1178 = vmul.f32 %v1177, %v1176
    %v1179 = vmul.f32 0.5, %v1178
    %v1180 = vsub.f32 1.5, %v1179
    %v1181 = vmul.f32 %v1176, %v1180
    %vm1182 = vweird.f32 %v1150
    %vm1183 = vweird.f32 %v1176
    %vm1184 = vmor %vm1182, %vm1183
    %v1185 = vsel %vm1184, %v1176, %v1181
    %v1186 = vrsqrt.pop %v1151
    %v1187 = vmul.f32 %v1186, %v1151
    %v1188 = vmul.f32 %v1187, %v1186
    %v1189 = vmul.f32 0.5, %v1188
    %v1190 = vsub.f32 1.5, %v1189
    %v1191 = vmul.f32 %v1186, %v1190
    %vm1192 = vweird.f32 %v1151
    %vm1193 = vweird.f32 %v1186
    %vm1194 = vmor %vm1192, %vm1193
    %v1195 = vsel %vm1194, %v1186, %v1191
    %v1196 = vrsqrt.pop %v1152
    %v1197 = vmul.f32 %v1196, %v1152
    %v1198 = vmul.f32 %v1197, %v1196
    %v1199 = vmul.f32 0.5, %v1198
    %v1200 = vsub.f32 1.5, %v1199
    %v1201 = vmul.f32 %v1196, %v1200
    %vm1202 = vweird.f32 %v1152
    %vm1203 = vweird.f32 %v1196
    %vm1204 = vmor %vm1202, %vm1203
    %v1205 = vsel %vm1204, %v1196, %v1201
    %v1206 = vrsqrt.pop %v1153
    %v1207 = vmul.f32 %v1206, %v1153
    %v1208 = vmul.f32 %v1207, %v1206
    %v1209 = vmul.f32 0.5, %v1208
    %v1210 = vsub.f32 1.5, %v1209
    %v1211 = vmul.f32 %v1206, %v1210
    %vm1212 = vweird.f32 %v1153
    %vm1213 = vweird.f32 %v1206
    %vm1214 = vmor %vm1212, %vm1213
    %v1215 = vsel %vm1214, %v1206, %v1211
    %v1216 = vrsqrt.pop %v1154
    %v1217 = vmul.f32 %v1216, %v1154
    %v1218 = vmul.f32 %v1217, %v1216
    %v1219 = vmul.f32 0.5, %v1218
    %v1220 = vsub.f32 1.5, %v1219
    %v1221 = vmul.f32 %v1216, %v1220
    %vm1222 = vweird.f32 %v1154
    %vm1223 = vweird.f32 %v1216
    %vm1224 = vmor %vm1222, %vm1223
    %v1225 = vsel %vm1224, %v1216, %v1221
    %v1226 = vrsqrt.pop %v1155
    %v1227 = vmul.f32 %v1226, %v1155
    %v1228 = vmul.f32 %v1227, %v1226
    %v1229 = vmul.f32 0.5, %v1228
    %v1230 = vsub.f32 1.5, %v1229
    %v1231 = vmul.f32 %v1226, %v1230
    %vm1232 = vweird.f32 %v1155
    %vm1233 = vweird.f32 %v1226
    %vm1234 = vmor %vm1232, %vm1233
    %v1235 = vsel %vm1234, %v1226, %v1231
    %v1236 = vld [vmem:[%s2] sm:$0xff]
    %v1237 = vld [vmem:[%s2 + $0x8] sm:$0xff]
    %v1238 = vld [vmem:[%s2 + $0x10] sm:$0xff]
    %v1239 = vld [vmem:[%s2 + $0x18] sm:$0xff]
    %v1240 = vld [vmem:[%s2 + $0x20] sm:$0xff]
    %v1241 = vld [vmem:[%s2 + $0x28] sm:$0xff]
    %v1242 = vld [vmem:[%s2 + $0x30] sm:$0xff]
    %v1243 = vld [vmem:[%s2 + $0x38] sm:$0xff]
    %v1244 = vmul.f32 %v1236, %v1165
    %v1245 = vmul.f32 %v1237, %v1175
    %v1246 = vmul.f32 %v1238, %v1185
    %v1247 = vmul.f32 %v1239, %v1195
    %v1248 = vmul.f32 %v1240, %v1205
    %v1249 = vmul.f32 %v1241, %v1215
    %v1250 = vmul.f32 %v1242, %v1225
    %v1251 = vmul.f32 %v1243, %v1235
    %v1252 = vmul.f32 %v1108, %v1244
    %v1253 = vmul.f32 %v1109, %v1245
    %v1254 = vmul.f32 %v1110, %v1246
    %v1255 = vmul.f32 %v1111, %v1247
    %v1256 = vmul.f32 %v1112, %v1248
    %v1257 = vmul.f32 %v1113, %v1249
    %v1258 = vmul.f32 %v1114, %v1250
    %v1259 = vmul.f32 %v1115, %v1251
    %1268 = vrot.lane.b32.xlu0 %v1252, 1
    %v1269 = vpop.permute.xlu0 %1268
    %1270 = vrot.lane.b32.xlu0 %v1253, 1
    %v1271 = vpop.permute.xlu0 %1270
    %1272 = vrot.lane.b32.xlu0 %v1254, 1
    %v1273 = vpop.permute.xlu0 %1272
    %1274 = vrot.lane.b32.xlu0 %v1255, 1
    %v1275 = vpop.permute.xlu0 %1274
    %1276 = vrot.lane.b32.xlu0 %v1256, 1
    %v1277 = vpop.permute.xlu0 %1276
    %1278 = vrot.lane.b32.xlu0 %v1257, 1
    %v1279 = vpop.permute.xlu0 %1278
    %1280 = vrot.lane.b32.xlu0 %v1258, 1
    %v1281 = vpop.permute.xlu0 %1280
    %1282 = vrot.lane.b32.xlu0 %v1259, 1
    %v1283 = vpop.permute.xlu0 %1282
    %v1292 = vsub.f32 %v1236, %v1269
    %v1293 = vsub.f32 %v1237, %v1271
    %v1294 = vsub.f32 %v1238, %v1273
    %v1295 = vsub.f32 %v1239, %v1275
    %v1296 = vsub.f32 %v1240, %v1277
    %v1297 = vsub.f32 %v1241, %v1279
    %v1298 = vsub.f32 %v1242, %v1281
    %v1299 = vsub.f32 %v1243, %v1283
    %1301 = vset.pattern.permute.xlu0 0
    %1302 = vperm.xlu0 %1301, %v1244
    %v1303 = vpop.permute.xlu0 %1302
    %1306 = vset.pattern.permute.xlu0 0
    %1307 = vperm.xlu0 %1306, %v1245
    %v1308 = vpop.permute.xlu0 %1307
    %1311 = vset.pattern.permute.xlu0 0
    %1312 = vperm.xlu0 %1311, %v1246
    %v1313 = vpop.permute.xlu0 %1312
    %1316 = vset.pattern.permute.xlu0 0
    %1317 = vperm.xlu0 %1316, %v1247
    %v1318 = vpop.permute.xlu0 %1317
    %1321 = vset.pattern.permute.xlu0 0
    %1322 = vperm.xlu0 %1321, %v1248
    %v1323 = vpop.permute.xlu0 %1322
    %1326 = vset.pattern.permute.xlu0 0
    %1327 = vperm.xlu0 %1326, %v1249
    %v1328 = vpop.permute.xlu0 %1327
    %1331 = vset.pattern.permute.xlu0 0
    %1332 = vperm.xlu0 %1331, %v1250
    %v1333 = vpop.permute.xlu0 %1332
    %1336 = vset.pattern.permute.xlu0 0
    %1337 = vperm.xlu0 %1336, %v1251
    %v1338 = vpop.permute.xlu0 %1337
    %v1340 = vmul.f32 %v250, %v1303
    %v1341 = vmul.f32 %v339, %v1303
    %v1342 = vmul.f32 %v428, %v1303
    %v1343 = vmul.f32 %v517, %v1303
    %v1344 = vmul.f32 %v252, %v1308
    %v1345 = vmul.f32 %v341, %v1308
    %v1346 = vmul.f32 %v430, %v1308
    %v1347 = vmul.f32 %v519, %v1308
    %v1348 = vmul.f32 %v255, %v1313
    %v1349 = vmul.f32 %v344, %v1313
    %v1350 = vmul.f32 %v433, %v1313
    %v1351 = vmul.f32 %v522, %v1313
    %v1352 = vmul.f32 %v257, %v1318
    %v1353 = vmul.f32 %v346, %v1318
    %v1354 = vmul.f32 %v435, %v1318
    %v1355 = vmul.f32 %v524, %v1318
    %v1356 = vmul.f32 %v260, %v1323
    %v1357 = vmul.f32 %v349, %v1323
    %v1358 = vmul.f32 %v438, %v1323
    %v1359 = vmul.f32 %v527, %v1323
    %v1360 = vmul.f32 %v262, %v1328
    %v1361 = vmul.f32 %v351, %v1328
    %v1362 = vmul.f32 %v440, %v1328
    %v1363 = vmul.f32 %v529, %v1328
    %v1364 = vmul.f32 %v265, %v1333
    %v1365 = vmul.f32 %v354, %v1333
    %v1366 = vmul.f32 %v443, %v1333
    %v1367 = vmul.f32 %v532, %v1333
    %v1368 = vmul.f32 %v267, %v1338
    %v1369 = vmul.f32 %v356, %v1338
    %v1370 = vmul.f32 %v445, %v1338
    %v1371 = vmul.f32 %v534, %v1338
    %1373 = vset.pattern.permute.xlu0 1
    %1374 = vperm.xlu0 %1373, %v1292
    %v1375 = vpop.permute.xlu0 %1374
    %1378 = vset.pattern.permute.xlu0 1
    %1379 = vperm.xlu0 %1378, %v1293
    %v1380 = vpop.permute.xlu0 %1379
    %1383 = vset.pattern.permute.xlu0 1
    %1384 = vperm.xlu0 %1383, %v1294
    %v1385 = vpop.permute.xlu0 %1384
    %1388 = vset.pattern.permute.xlu0 1
    %1389 = vperm.xlu0 %1388, %v1295
    %v1390 = vpop.permute.xlu0 %1389
    %1393 = vset.pattern.permute.xlu0 1
    %1394 = vperm.xlu0 %1393, %v1296
    %v1395 = vpop.permute.xlu0 %1394
    %1398 = vset.pattern.permute.xlu0 1
    %1399 = vperm.xlu0 %1398, %v1297
    %v1400 = vpop.permute.xlu0 %1399
    %1403 = vset.pattern.permute.xlu0 1
    %1404 = vperm.xlu0 %1403, %v1298
    %v1405 = vpop.permute.xlu0 %1404
    %1408 = vset.pattern.permute.xlu0 1
    %1409 = vperm.xlu0 %1408, %v1299
    %v1410 = vpop.permute.xlu0 %1409
    %v1412 = vadd.f32 %v1340, %v1375
    %v1413 = vadd.f32 %v1341, %v1375
    %v1414 = vadd.f32 %v1342, %v1375
    %v1415 = vadd.f32 %v1343, %v1375
    %v1416 = vadd.f32 %v1344, %v1380
    %v1417 = vadd.f32 %v1345, %v1380
    %v1418 = vadd.f32 %v1346, %v1380
    %v1419 = vadd.f32 %v1347, %v1380
    %v1420 = vadd.f32 %v1348, %v1385
    %v1421 = vadd.f32 %v1349, %v1385
    %v1422 = vadd.f32 %v1350, %v1385
    %v1423 = vadd.f32 %v1351, %v1385
    %v1424 = vadd.f32 %v1352, %v1390
    %v1425 = vadd.f32 %v1353, %v1390
    %v1426 = vadd.f32 %v1354, %v1390
    %v1427 = vadd.f32 %v1355, %v1390
    %v1428 = vadd.f32 %v1356, %v1395
    %v1429 = vadd.f32 %v1357, %v1395
    %v1430 = vadd.f32 %v1358, %v1395
    %v1431 = vadd.f32 %v1359, %v1395
    %v1432 = vadd.f32 %v1360, %v1400
    %v1433 = vadd.f32 %v1361, %v1400
    %v1434 = vadd.f32 %v1362, %v1400
    %v1435 = vadd.f32 %v1363, %v1400
    %v1436 = vadd.f32 %v1364, %v1405
    %v1437 = vadd.f32 %v1365, %v1405
    %v1438 = vadd.f32 %v1366, %v1405
    %v1439 = vadd.f32 %v1367, %v1405
    %v1440 = vadd.f32 %v1368, %v1410
    %v1441 = vadd.f32 %v1369, %v1410
    %v1442 = vadd.f32 %v1370, %v1410
    %v1443 = vadd.f32 %v1371, %v1410
    %v1444 = vmax.f32 %v1412, 0.0
    %v1445 = vmax.f32 %v1413, 0.0
    %v1446 = vmax.f32 %v1414, 0.0
    %v1447 = vmax.f32 %v1415, 0.0
    %v1448 = vmax.f32 %v1416, 0.0
    %v1449 = vmax.f32 %v1417, 0.0
    %v1450 = vmax.f32 %v1418, 0.0
    %v1451 = vmax.f32 %v1419, 0.0
    %v1452 = vmax.f32 %v1420, 0.0
    %v1453 = vmax.f32 %v1421, 0.0
    %v1454 = vmax.f32 %v1422, 0.0
    %v1455 = vmax.f32 %v1423, 0.0
    %v1456 = vmax.f32 %v1424, 0.0
    %v1457 = vmax.f32 %v1425, 0.0
    %v1458 = vmax.f32 %v1426, 0.0
    %v1459 = vmax.f32 %v1427, 0.0
    %v1460 = vmax.f32 %v1428, 0.0
    %v1461 = vmax.f32 %v1429, 0.0
    %v1462 = vmax.f32 %v1430, 0.0
    %v1463 = vmax.f32 %v1431, 0.0
    %v1464 = vmax.f32 %v1432, 0.0
    %v1465 = vmax.f32 %v1433, 0.0
    %v1466 = vmax.f32 %v1434, 0.0
    %v1467 = vmax.f32 %v1435, 0.0
    %v1468 = vmax.f32 %v1436, 0.0
    %v1469 = vmax.f32 %v1437, 0.0
    %v1470 = vmax.f32 %v1438, 0.0
    %v1471 = vmax.f32 %v1439, 0.0
    %v1472 = vmax.f32 %v1440, 0.0
    %v1473 = vmax.f32 %v1441, 0.0
    %v1474 = vmax.f32 %v1442, 0.0
    %v1475 = vmax.f32 %v1443, 0.0
    %v1476 = vmul.f32 %v270, %v1303
    %v1477 = vmul.f32 %v359, %v1303
    %v1478 = vmul.f32 %v448, %v1303
    %v1479 = vmul.f32 %v537, %v1303
    %v1480 = vmul.f32 %v272, %v1308
    %v1481 = vmul.f32 %v361, %v1308
    %v1482 = vmul.f32 %v450, %v1308
    %v1483 = vmul.f32 %v539, %v1308
    %v1484 = vmul.f32 %v275, %v1313
    %v1485 = vmul.f32 %v364, %v1313
    %v1486 = vmul.f32 %v453, %v1313
    %v1487 = vmul.f32 %v542, %v1313
    %v1488 = vmul.f32 %v277, %v1318
    %v1489 = vmul.f32 %v366, %v1318
    %v1490 = vmul.f32 %v455, %v1318
    %v1491 = vmul.f32 %v544, %v1318
    %v1492 = vmul.f32 %v280, %v1323
    %v1493 = vmul.f32 %v369, %v1323
    %v1494 = vmul.f32 %v458, %v1323
    %v1495 = vmul.f32 %v547, %v1323
    %v1496 = vmul.f32 %v282, %v1328
    %v1497 = vmul.f32 %v371, %v1328
    %v1498 = vmul.f32 %v460, %v1328
    %v1499 = vmul.f32 %v549, %v1328
    %v1500 = vmul.f32 %v285, %v1333
    %v1501 = vmul.f32 %v374, %v1333
    %v1502 = vmul.f32 %v463, %v1333
    %v1503 = vmul.f32 %v552, %v1333
    %v1504 = vmul.f32 %v287, %v1338
    %v1505 = vmul.f32 %v376, %v1338
    %v1506 = vmul.f32 %v465, %v1338
    %v1507 = vmul.f32 %v554, %v1338
    %v1508 = vadd.f32 %v1476, %v1375
    %v1509 = vadd.f32 %v1477, %v1375
    %v1510 = vadd.f32 %v1478, %v1375
    %v1511 = vadd.f32 %v1479, %v1375
    %v1512 = vadd.f32 %v1480, %v1380
    %v1513 = vadd.f32 %v1481, %v1380
    %v1514 = vadd.f32 %v1482, %v1380
    %v1515 = vadd.f32 %v1483, %v1380
    %v1516 = vadd.f32 %v1484, %v1385
    %v1517 = vadd.f32 %v1485, %v1385
    %v1518 = vadd.f32 %v1486, %v1385
    %v1519 = vadd.f32 %v1487, %v1385
    %v1520 = vadd.f32 %v1488, %v1390
    %v1521 = vadd.f32 %v1489, %v1390
    %v1522 = vadd.f32 %v1490, %v1390
    %v1523 = vadd.f32 %v1491, %v1390
    %v1524 = vadd.f32 %v1492, %v1395
    %v1525 = vadd.f32 %v1493, %v1395
    %v1526 = vadd.f32 %v1494, %v1395
    %v1527 = vadd.f32 %v1495, %v1395
    %v1528 = vadd.f32 %v1496, %v1400
    %v1529 = vadd.f32 %v1497, %v1400
    %v1530 = vadd.f32 %v1498, %v1400
    %v1531 = vadd.f32 %v1499, %v1400
    %v1532 = vadd.f32 %v1500, %v1405
    %v1533 = vadd.f32 %v1501, %v1405
    %v1534 = vadd.f32 %v1502, %v1405
    %v1535 = vadd.f32 %v1503, %v1405
    %v1536 = vadd.f32 %v1504, %v1410
    %v1537 = vadd.f32 %v1505, %v1410
    %v1538 = vadd.f32 %v1506, %v1410
    %v1539 = vadd.f32 %v1507, %v1410
    %v1540 = vmax.f32 %v1508, 0.0
    %v1541 = vmax.f32 %v1509, 0.0
    %v1542 = vmax.f32 %v1510, 0.0
    %v1543 = vmax.f32 %v1511, 0.0
    %v1544 = vmax.f32 %v1512, 0.0
    %v1545 = vmax.f32 %v1513, 0.0
    %v1546 = vmax.f32 %v1514, 0.0
    %v1547 = vmax.f32 %v1515, 0.0
    %v1548 = vmax.f32 %v1516, 0.0
    %v1549 = vmax.f32 %v1517, 0.0
    %v1550 = vmax.f32 %v1518, 0.0
    %v1551 = vmax.f32 %v1519, 0.0
    %v1552 = vmax.f32 %v1520, 0.0
    %v1553 = vmax.f32 %v1521, 0.0
    %v1554 = vmax.f32 %v1522, 0.0
    %v1555 = vmax.f32 %v1523, 0.0
    %v1556 = vmax.f32 %v1524, 0.0
    %v1557 = vmax.f32 %v1525, 0.0
    %v1558 = vmax.f32 %v1526, 0.0
    %v1559 = vmax.f32 %v1527, 0.0
    %v1560 = vmax.f32 %v1528, 0.0
    %v1561 = vmax.f32 %v1529, 0.0
    %v1562 = vmax.f32 %v1530, 0.0
    %v1563 = vmax.f32 %v1531, 0.0
    %v1564 = vmax.f32 %v1532, 0.0
    %v1565 = vmax.f32 %v1533, 0.0
    %v1566 = vmax.f32 %v1534, 0.0
    %v1567 = vmax.f32 %v1535, 0.0
    %v1568 = vmax.f32 %v1536, 0.0
    %v1569 = vmax.f32 %v1537, 0.0
    %v1570 = vmax.f32 %v1538, 0.0
    %v1571 = vmax.f32 %v1539, 0.0
    %v1572 = vmax.f32 %v1444, %v1540
    %v1573 = vmax.f32 %v1445, %v1541
    %v1574 = vmax.f32 %v1446, %v1542
    %v1575 = vmax.f32 %v1447, %v1543
    %v1576 = vmax.f32 %v1448, %v1544
    %v1577 = vmax.f32 %v1449, %v1545
    %v1578 = vmax.f32 %v1450, %v1546
    %v1579 = vmax.f32 %v1451, %v1547
    %v1580 = vmax.f32 %v1452, %v1548
    %v1581 = vmax.f32 %v1453, %v1549
    %v1582 = vmax.f32 %v1454, %v1550
    %v1583 = vmax.f32 %v1455, %v1551
    %v1584 = vmax.f32 %v1456, %v1552
    %v1585 = vmax.f32 %v1457, %v1553
    %v1586 = vmax.f32 %v1458, %v1554
    %v1587 = vmax.f32 %v1459, %v1555
    %v1588 = vmax.f32 %v1460, %v1556
    %v1589 = vmax.f32 %v1461, %v1557
    %v1590 = vmax.f32 %v1462, %v1558
    %v1591 = vmax.f32 %v1463, %v1559
    %v1592 = vmax.f32 %v1464, %v1560
    %v1593 = vmax.f32 %v1465, %v1561
    %v1594 = vmax.f32 %v1466, %v1562
    %v1595 = vmax.f32 %v1467, %v1563
    %v1596 = vmax.f32 %v1468, %v1564
    %v1597 = vmax.f32 %v1469, %v1565
    %v1598 = vmax.f32 %v1470, %v1566
    %v1599 = vmax.f32 %v1471, %v1567
    %v1600 = vmax.f32 %v1472, %v1568
    %v1601 = vmax.f32 %v1473, %v1569
    %v1602 = vmax.f32 %v1474, %v1570
    %v1603 = vmax.f32 %v1475, %v1571
    %v1604 = vmul.f32 %v290, %v1303
    %v1605 = vmul.f32 %v379, %v1303
    %v1606 = vmul.f32 %v468, %v1303
    %v1607 = vmul.f32 %v557, %v1303
    %v1608 = vmul.f32 %v292, %v1308
    %v1609 = vmul.f32 %v381, %v1308
    %v1610 = vmul.f32 %v470, %v1308
    %v1611 = vmul.f32 %v559, %v1308
    %v1612 = vmul.f32 %v295, %v1313
    %v1613 = vmul.f32 %v384, %v1313
    %v1614 = vmul.f32 %v473, %v1313
    %v1615 = vmul.f32 %v562, %v1313
    %v1616 = vmul.f32 %v297, %v1318
    %v1617 = vmul.f32 %v386, %v1318
    %v1618 = vmul.f32 %v475, %v1318
    %v1619 = vmul.f32 %v564, %v1318
    %v1620 = vmul.f32 %v300, %v1323
    %v1621 = vmul.f32 %v389, %v1323
    %v1622 = vmul.f32 %v478, %v1323
    %v1623 = vmul.f32 %v567, %v1323
    %v1624 = vmul.f32 %v302, %v1328
    %v1625 = vmul.f32 %v391, %v1328
    %v1626 = vmul.f32 %v480, %v1328
    %v1627 = vmul.f32 %v569, %v1328
    %v1628 = vmul.f32 %v305, %v1333
    %v1629 = vmul.f32 %v394, %v1333
    %v1630 = vmul.f32 %v483, %v1333
    %v1631 = vmul.f32 %v572, %v1333
    %v1632 = vmul.f32 %v307, %v1338
    %v1633 = vmul.f32 %v396, %v1338
    %v1634 = vmul.f32 %v485, %v1338
    %v1635 = vmul.f32 %v574, %v1338
    %v1636 = vadd.f32 %v1604, %v1375
    %v1637 = vadd.f32 %v1605, %v1375
    %v1638 = vadd.f32 %v1606, %v1375
    %v1639 = vadd.f32 %v1607, %v1375
    %v1640 = vadd.f32 %v1608, %v1380
    %v1641 = vadd.f32 %v1609, %v1380
    %v1642 = vadd.f32 %v1610, %v1380
    %v1643 = vadd.f32 %v1611, %v1380
    %v1644 = vadd.f32 %v1612, %v1385
    %v1645 = vadd.f32 %v1613, %v1385
    %v1646 = vadd.f32 %v1614, %v1385
    %v1647 = vadd.f32 %v1615, %v1385
    %v1648 = vadd.f32 %v1616, %v1390
    %v1649 = vadd.f32 %v1617, %v1390
    %v1650 = vadd.f32 %v1618, %v1390
    %v1651 = vadd.f32 %v1619, %v1390
    %v1652 = vadd.f32 %v1620, %v1395
    %v1653 = vadd.f32 %v1621, %v1395
    %v1654 = vadd.f32 %v1622, %v1395
    %v1655 = vadd.f32 %v1623, %v1395
    %v1656 = vadd.f32 %v1624, %v1400
    %v1657 = vadd.f32 %v1625, %v1400
    %v1658 = vadd.f32 %v1626, %v1400
    %v1659 = vadd.f32 %v1627, %v1400
    %v1660 = vadd.f32 %v1628, %v1405
    %v1661 = vadd.f32 %v1629, %v1405
    %v1662 = vadd.f32 %v1630, %v1405
    %v1663 = vadd.f32 %v1631, %v1405
    %v1664 = vadd.f32 %v1632, %v1410
    %v1665 = vadd.f32 %v1633, %v1410
    %v1666 = vadd.f32 %v1634, %v1410
    %v1667 = vadd.f32 %v1635, %v1410
    %v1668 = vmax.f32 %v1636, 0.0
    %v1669 = vmax.f32 %v1637, 0.0
    %v1670 = vmax.f32 %v1638, 0.0
    %v1671 = vmax.f32 %v1639, 0.0
    %v1672 = vmax.f32 %v1640, 0.0
    %v1673 = vmax.f32 %v1641, 0.0
    %v1674 = vmax.f32 %v1642, 0.0
    %v1675 = vmax.f32 %v1643, 0.0
    %v1676 = vmax.f32 %v1644, 0.0
    %v1677 = vmax.f32 %v1645, 0.0
    %v1678 = vmax.f32 %v1646, 0.0
    %v1679 = vmax.f32 %v1647, 0.0
    %v1680 = vmax.f32 %v1648, 0.0
    %v1681 = vmax.f32 %v1649, 0.0
    %v1682 = vmax.f32 %v1650, 0.0
    %v1683 = vmax.f32 %v1651, 0.0
    %v1684 = vmax.f32 %v1652, 0.0
    %v1685 = vmax.f32 %v1653, 0.0
    %v1686 = vmax.f32 %v1654, 0.0
    %v1687 = vmax.f32 %v1655, 0.0
    %v1688 = vmax.f32 %v1656, 0.0
    %v1689 = vmax.f32 %v1657, 0.0
    %v1690 = vmax.f32 %v1658, 0.0
    %v1691 = vmax.f32 %v1659, 0.0
    %v1692 = vmax.f32 %v1660, 0.0
    %v1693 = vmax.f32 %v1661, 0.0
    %v1694 = vmax.f32 %v1662, 0.0
    %v1695 = vmax.f32 %v1663, 0.0
    %v1696 = vmax.f32 %v1664, 0.0
    %v1697 = vmax.f32 %v1665, 0.0
    %v1698 = vmax.f32 %v1666, 0.0
    %v1699 = vmax.f32 %v1667, 0.0
    %v1700 = vmax.f32 %v1572, %v1668
    %v1701 = vmax.f32 %v1573, %v1669
    %v1702 = vmax.f32 %v1574, %v1670
    %v1703 = vmax.f32 %v1575, %v1671
    %v1704 = vmax.f32 %v1576, %v1672
    %v1705 = vmax.f32 %v1577, %v1673
    %v1706 = vmax.f32 %v1578, %v1674
    %v1707 = vmax.f32 %v1579, %v1675
    %v1708 = vmax.f32 %v1580, %v1676
    %v1709 = vmax.f32 %v1581, %v1677
    %v1710 = vmax.f32 %v1582, %v1678
    %v1711 = vmax.f32 %v1583, %v1679
    %v1712 = vmax.f32 %v1584, %v1680
    %v1713 = vmax.f32 %v1585, %v1681
    %v1714 = vmax.f32 %v1586, %v1682
    %v1715 = vmax.f32 %v1587, %v1683
    %v1716 = vmax.f32 %v1588, %v1684
    %v1717 = vmax.f32 %v1589, %v1685
    %v1718 = vmax.f32 %v1590, %v1686
    %v1719 = vmax.f32 %v1591, %v1687
    %v1720 = vmax.f32 %v1592, %v1688
    %v1721 = vmax.f32 %v1593, %v1689
    %v1722 = vmax.f32 %v1594, %v1690
    %v1723 = vmax.f32 %v1595, %v1691
    %v1724 = vmax.f32 %v1596, %v1692
    %v1725 = vmax.f32 %v1597, %v1693
    %v1726 = vmax.f32 %v1598, %v1694
    %v1727 = vmax.f32 %v1599, %v1695
    %v1728 = vmax.f32 %v1600, %v1696
    %v1729 = vmax.f32 %v1601, %v1697
    %v1730 = vmax.f32 %v1602, %v1698
    %v1731 = vmax.f32 %v1603, %v1699
    %v1732 = vmul.f32 %v310, %v1303
    %v1733 = vmul.f32 %v399, %v1303
    %v1734 = vmul.f32 %v488, %v1303
    %v1735 = vmul.f32 %v577, %v1303
    %v1736 = vmul.f32 %v312, %v1308
    %v1737 = vmul.f32 %v401, %v1308
    %v1738 = vmul.f32 %v490, %v1308
    %v1739 = vmul.f32 %v579, %v1308
    %v1740 = vmul.f32 %v315, %v1313
    %v1741 = vmul.f32 %v404, %v1313
    %v1742 = vmul.f32 %v493, %v1313
    %v1743 = vmul.f32 %v582, %v1313
    %v1744 = vmul.f32 %v317, %v1318
    %v1745 = vmul.f32 %v406, %v1318
    %v1746 = vmul.f32 %v495, %v1318
    %v1747 = vmul.f32 %v584, %v1318
    %v1748 = vmul.f32 %v320, %v1323
    %v1749 = vmul.f32 %v409, %v1323
    %v1750 = vmul.f32 %v498, %v1323
    %v1751 = vmul.f32 %v587, %v1323
    %v1752 = vmul.f32 %v322, %v1328
    %v1753 = vmul.f32 %v411, %v1328
    %v1754 = vmul.f32 %v500, %v1328
    %v1755 = vmul.f32 %v589, %v1328
    %v1756 = vmul.f32 %v325, %v1333
    %v1757 = vmul.f32 %v414, %v1333
    %v1758 = vmul.f32 %v503, %v1333
    %v1759 = vmul.f32 %v592, %v1333
    %v1760 = vmul.f32 %v327, %v1338
    %v1761 = vmul.f32 %v416, %v1338
    %v1762 = vmul.f32 %v505, %v1338
    %v1763 = vmul.f32 %v594, %v1338
    %v1764 = vadd.f32 %v1732, %v1375
    %v1765 = vadd.f32 %v1733, %v1375
    %v1766 = vadd.f32 %v1734, %v1375
    %v1767 = vadd.f32 %v1735, %v1375
    %v1768 = vadd.f32 %v1736, %v1380
    %v1769 = vadd.f32 %v1737, %v1380
    %v1770 = vadd.f32 %v1738, %v1380
    %v1771 = vadd.f32 %v1739, %v1380
    %v1772 = vadd.f32 %v1740, %v1385
    %v1773 = vadd.f32 %v1741, %v1385
    %v1774 = vadd.f32 %v1742, %v1385
    %v1775 = vadd.f32 %v1743, %v1385
    %v1776 = vadd.f32 %v1744, %v1390
    %v1777 = vadd.f32 %v1745, %v1390
    %v1778 = vadd.f32 %v1746, %v1390
    %v1779 = vadd.f32 %v1747, %v1390
    %v1780 = vadd.f32 %v1748, %v1395
    %v1781 = vadd.f32 %v1749, %v1395
    %v1782 = vadd.f32 %v1750, %v1395
    %v1783 = vadd.f32 %v1751, %v1395
    %v1784 = vadd.f32 %v1752, %v1400
    %v1785 = vadd.f32 %v1753, %v1400
    %v1786 = vadd.f32 %v1754, %v1400
    %v1787 = vadd.f32 %v1755, %v1400
    %v1788 = vadd.f32 %v1756, %v1405
    %v1789 = vadd.f32 %v1757, %v1405
    %v1790 = vadd.f32 %v1758, %v1405
    %v1791 = vadd.f32 %v1759, %v1405
    %v1792 = vadd.f32 %v1760, %v1410
    %v1793 = vadd.f32 %v1761, %v1410
    %v1794 = vadd.f32 %v1762, %v1410
    %v1795 = vadd.f32 %v1763, %v1410
    %v1796 = vmax.f32 %v1764, 0.0
    %v1797 = vmax.f32 %v1765, 0.0
    %v1798 = vmax.f32 %v1766, 0.0
    %v1799 = vmax.f32 %v1767, 0.0
    %v1800 = vmax.f32 %v1768, 0.0
    %v1801 = vmax.f32 %v1769, 0.0
    %v1802 = vmax.f32 %v1770, 0.0
    %v1803 = vmax.f32 %v1771, 0.0
    %v1804 = vmax.f32 %v1772, 0.0
    %v1805 = vmax.f32 %v1773, 0.0
    %v1806 = vmax.f32 %v1774, 0.0
    %v1807 = vmax.f32 %v1775, 0.0
    %v1808 = vmax.f32 %v1776, 0.0
    %v1809 = vmax.f32 %v1777, 0.0
    %v1810 = vmax.f32 %v1778, 0.0
    %v1811 = vmax.f32 %v1779, 0.0
    %v1812 = vmax.f32 %v1780, 0.0
    %v1813 = vmax.f32 %v1781, 0.0
    %v1814 = vmax.f32 %v1782, 0.0
    %v1815 = vmax.f32 %v1783, 0.0
    %v1816 = vmax.f32 %v1784, 0.0
    %v1817 = vmax.f32 %v1785, 0.0
    %v1818 = vmax.f32 %v1786, 0.0
    %v1819 = vmax.f32 %v1787, 0.0
    %v1820 = vmax.f32 %v1788, 0.0
    %v1821 = vmax.f32 %v1789, 0.0
    %v1822 = vmax.f32 %v1790, 0.0
    %v1823 = vmax.f32 %v1791, 0.0
    %v1824 = vmax.f32 %v1792, 0.0
    %v1825 = vmax.f32 %v1793, 0.0
    %v1826 = vmax.f32 %v1794, 0.0
    %v1827 = vmax.f32 %v1795, 0.0
    %v1828 = vmax.f32 %v1700, %v1796
    %v1829 = vmax.f32 %v1701, %v1797
    %v1830 = vmax.f32 %v1702, %v1798
    %v1831 = vmax.f32 %v1703, %v1799
    %v1832 = vmax.f32 %v1704, %v1800
    %v1833 = vmax.f32 %v1705, %v1801
    %v1834 = vmax.f32 %v1706, %v1802
    %v1835 = vmax.f32 %v1707, %v1803
    %v1836 = vmax.f32 %v1708, %v1804
    %v1837 = vmax.f32 %v1709, %v1805
    %v1838 = vmax.f32 %v1710, %v1806
    %v1839 = vmax.f32 %v1711, %v1807
    %v1840 = vmax.f32 %v1712, %v1808
    %v1841 = vmax.f32 %v1713, %v1809
    %v1842 = vmax.f32 %v1714, %v1810
    %v1843 = vmax.f32 %v1715, %v1811
    %v1844 = vmax.f32 %v1716, %v1812
    %v1845 = vmax.f32 %v1717, %v1813
    %v1846 = vmax.f32 %v1718, %v1814
    %v1847 = vmax.f32 %v1719, %v1815
    %v1848 = vmax.f32 %v1720, %v1816
    %v1849 = vmax.f32 %v1721, %v1817
    %v1850 = vmax.f32 %v1722, %v1818
    %v1851 = vmax.f32 %v1723, %v1819
    %v1852 = vmax.f32 %v1724, %v1820
    %v1853 = vmax.f32 %v1725, %v1821
    %v1854 = vmax.f32 %v1726, %v1822
    %v1855 = vmax.f32 %v1727, %v1823
    %v1856 = vmax.f32 %v1728, %v1824
    %v1857 = vmax.f32 %v1729, %v1825
    %v1858 = vmax.f32 %v1730, %v1826
    %v1859 = vmax.f32 %v1731, %v1827
    %v1860 = vld [vmem:[%s3] sm:$0xff]
    %v1861 = vld [vmem:[%s3 + $0x8] sm:$0xff]
    %v1862 = vld [vmem:[%s3 + $0x10] sm:$0xff]
    %v1863 = vld [vmem:[%s3 + $0x18] sm:$0xff]
    %v1864 = vld [vmem:[%s3 + $0x20] sm:$0xff]
    %v1865 = vld [vmem:[%s3 + $0x28] sm:$0xff]
    %v1866 = vld [vmem:[%s3 + $0x30] sm:$0xff]
    %v1867 = vld [vmem:[%s3 + $0x38] sm:$0xff]
    %v1868 = vld [vmem:[%s3 + $0x40] sm:$0xff]
    %v1869 = vld [vmem:[%s3 + $0x48] sm:$0xff]
    %v1870 = vld [vmem:[%s3 + $0x50] sm:$0xff]
    %v1871 = vld [vmem:[%s3 + $0x58] sm:$0xff]
    %v1872 = vld [vmem:[%s3 + $0x60] sm:$0xff]
    %v1873 = vld [vmem:[%s3 + $0x68] sm:$0xff]
    %v1874 = vld [vmem:[%s3 + $0x70] sm:$0xff]
    %v1875 = vld [vmem:[%s3 + $0x78] sm:$0xff]
    %v1876 = vld [vmem:[%s3 + $0x80] sm:$0xff]
    %v1877 = vld [vmem:[%s3 + $0x88] sm:$0xff]
    %v1878 = vld [vmem:[%s3 + $0x90] sm:$0xff]
    %v1879 = vld [vmem:[%s3 + $0x98] sm:$0xff]
    %v1880 = vld [vmem:[%s3 + $0xa0] sm:$0xff]
    %v1881 = vld [vmem:[%s3 + $0xa8] sm:$0xff]
    %v1882 = vld [vmem:[%s3 + $0xb0] sm:$0xff]
    %v1883 = vld [vmem:[%s3 + $0xb8] sm:$0xff]
    %v1884 = vld [vmem:[%s3 + $0xc0] sm:$0xff]
    %v1885 = vld [vmem:[%s3 + $0xc8] sm:$0xff]
    %v1886 = vld [vmem:[%s3 + $0xd0] sm:$0xff]
    %v1887 = vld [vmem:[%s3 + $0xd8] sm:$0xff]
    %v1888 = vld [vmem:[%s3 + $0xe0] sm:$0xff]
    %v1889 = vld [vmem:[%s3 + $0xe8] sm:$0xff]
    %v1890 = vld [vmem:[%s3 + $0xf0] sm:$0xff]
    %v1891 = vld [vmem:[%s3 + $0xf8] sm:$0xff]
    %v1892 = vld [vmem:[%s3 + $0x100] sm:$0xff]
    %v1893 = vld [vmem:[%s3 + $0x108] sm:$0xff]
    %v1894 = vld [vmem:[%s3 + $0x110] sm:$0xff]
    %v1895 = vld [vmem:[%s3 + $0x118] sm:$0xff]
    %v1896 = vld [vmem:[%s3 + $0x120] sm:$0xff]
    %v1897 = vld [vmem:[%s3 + $0x128] sm:$0xff]
    %v1898 = vld [vmem:[%s3 + $0x130] sm:$0xff]
    %v1899 = vld [vmem:[%s3 + $0x138] sm:$0xff]
    %v1900 = vld [vmem:[%s3 + $0x140] sm:$0xff]
    %v1901 = vld [vmem:[%s3 + $0x148] sm:$0xff]
    %v1902 = vld [vmem:[%s3 + $0x150] sm:$0xff]
    %v1903 = vld [vmem:[%s3 + $0x158] sm:$0xff]
    %v1904 = vld [vmem:[%s3 + $0x160] sm:$0xff]
    %v1905 = vld [vmem:[%s3 + $0x168] sm:$0xff]
    %v1906 = vld [vmem:[%s3 + $0x170] sm:$0xff]
    %v1907 = vld [vmem:[%s3 + $0x178] sm:$0xff]
    %v1908 = vld [vmem:[%s3 + $0x180] sm:$0xff]
    %v1909 = vld [vmem:[%s3 + $0x188] sm:$0xff]
    %v1910 = vld [vmem:[%s3 + $0x190] sm:$0xff]
    %v1911 = vld [vmem:[%s3 + $0x198] sm:$0xff]
    %v1912 = vld [vmem:[%s3 + $0x1a0] sm:$0xff]
    %v1913 = vld [vmem:[%s3 + $0x1a8] sm:$0xff]
    %v1914 = vld [vmem:[%s3 + $0x1b0] sm:$0xff]
    %v1915 = vld [vmem:[%s3 + $0x1b8] sm:$0xff]
    %v1916 = vld [vmem:[%s3 + $0x1c0] sm:$0xff]
    %v1917 = vld [vmem:[%s3 + $0x1c8] sm:$0xff]
    %v1918 = vld [vmem:[%s3 + $0x1d0] sm:$0xff]
    %v1919 = vld [vmem:[%s3 + $0x1d8] sm:$0xff]
    %v1920 = vld [vmem:[%s3 + $0x1e0] sm:$0xff]
    %v1921 = vld [vmem:[%s3 + $0x1e8] sm:$0xff]
    %v1922 = vld [vmem:[%s3 + $0x1f0] sm:$0xff]
    %v1923 = vld [vmem:[%s3 + $0x1f8] sm:$0xff]
    %v1924 = vld [vmem:[%s3 + $0x200] sm:$0xff]
    %v1925 = vld [vmem:[%s3 + $0x208] sm:$0xff]
    %v1926 = vld [vmem:[%s3 + $0x210] sm:$0xff]
    %v1927 = vld [vmem:[%s3 + $0x218] sm:$0xff]
    %v1928 = vld [vmem:[%s3 + $0x220] sm:$0xff]
    %v1929 = vld [vmem:[%s3 + $0x228] sm:$0xff]
    %v1930 = vld [vmem:[%s3 + $0x230] sm:$0xff]
    %v1931 = vld [vmem:[%s3 + $0x238] sm:$0xff]
    %v1932 = vld [vmem:[%s3 + $0x240] sm:$0xff]
    %v1933 = vld [vmem:[%s3 + $0x248] sm:$0xff]
    %v1934 = vld [vmem:[%s3 + $0x250] sm:$0xff]
    %v1935 = vld [vmem:[%s3 + $0x258] sm:$0xff]
    %v1936 = vld [vmem:[%s3 + $0x260] sm:$0xff]
    %v1937 = vld [vmem:[%s3 + $0x268] sm:$0xff]
    %v1938 = vld [vmem:[%s3 + $0x270] sm:$0xff]
    %v1939 = vld [vmem:[%s3 + $0x278] sm:$0xff]
    %v1940 = vld [vmem:[%s3 + $0x280] sm:$0xff]
    %v1941 = vld [vmem:[%s3 + $0x288] sm:$0xff]
    %v1942 = vld [vmem:[%s3 + $0x290] sm:$0xff]
    %v1943 = vld [vmem:[%s3 + $0x298] sm:$0xff]
    %v1944 = vld [vmem:[%s3 + $0x2a0] sm:$0xff]
    %v1945 = vld [vmem:[%s3 + $0x2a8] sm:$0xff]
    %v1946 = vld [vmem:[%s3 + $0x2b0] sm:$0xff]
    %v1947 = vld [vmem:[%s3 + $0x2b8] sm:$0xff]
    %v1948 = vld [vmem:[%s3 + $0x2c0] sm:$0xff]
    %v1949 = vld [vmem:[%s3 + $0x2c8] sm:$0xff]
    %v1950 = vld [vmem:[%s3 + $0x2d0] sm:$0xff]
    %v1951 = vld [vmem:[%s3 + $0x2d8] sm:$0xff]
    %v1952 = vld [vmem:[%s3 + $0x2e0] sm:$0xff]
    %v1953 = vld [vmem:[%s3 + $0x2e8] sm:$0xff]
    %v1954 = vld [vmem:[%s3 + $0x2f0] sm:$0xff]
    %v1955 = vld [vmem:[%s3 + $0x2f8] sm:$0xff]
    %v1956 = vld [vmem:[%s3 + $0x300] sm:$0xff]
    %v1957 = vld [vmem:[%s3 + $0x308] sm:$0xff]
    %v1958 = vld [vmem:[%s3 + $0x310] sm:$0xff]
    %v1959 = vld [vmem:[%s3 + $0x318] sm:$0xff]
    %v1960 = vld [vmem:[%s3 + $0x320] sm:$0xff]
    %v1961 = vld [vmem:[%s3 + $0x328] sm:$0xff]
    %v1962 = vld [vmem:[%s3 + $0x330] sm:$0xff]
    %v1963 = vld [vmem:[%s3 + $0x338] sm:$0xff]
    %v1964 = vld [vmem:[%s3 + $0x340] sm:$0xff]
    %v1965 = vld [vmem:[%s3 + $0x348] sm:$0xff]
    %v1966 = vld [vmem:[%s3 + $0x350] sm:$0xff]
    %v1967 = vld [vmem:[%s3 + $0x358] sm:$0xff]
    %v1968 = vld [vmem:[%s3 + $0x360] sm:$0xff]
    %v1969 = vld [vmem:[%s3 + $0x368] sm:$0xff]
    %v1970 = vld [vmem:[%s3 + $0x370] sm:$0xff]
    %v1971 = vld [vmem:[%s3 + $0x378] sm:$0xff]
    %v1972 = vld [vmem:[%s3 + $0x380] sm:$0xff]
    %v1973 = vld [vmem:[%s3 + $0x388] sm:$0xff]
    %v1974 = vld [vmem:[%s3 + $0x390] sm:$0xff]
    %v1975 = vld [vmem:[%s3 + $0x398] sm:$0xff]
    %v1976 = vld [vmem:[%s3 + $0x3a0] sm:$0xff]
    %v1977 = vld [vmem:[%s3 + $0x3a8] sm:$0xff]
    %v1978 = vld [vmem:[%s3 + $0x3b0] sm:$0xff]
    %v1979 = vld [vmem:[%s3 + $0x3b8] sm:$0xff]
    %v1980 = vld [vmem:[%s3 + $0x3c0] sm:$0xff]
    %v1981 = vld [vmem:[%s3 + $0x3c8] sm:$0xff]
    %v1982 = vld [vmem:[%s3 + $0x3d0] sm:$0xff]
    %v1983 = vld [vmem:[%s3 + $0x3d8] sm:$0xff]
    %v1984 = vld [vmem:[%s3 + $0x3e0] sm:$0xff]
    %v1985 = vld [vmem:[%s3 + $0x3e8] sm:$0xff]
    %v1986 = vld [vmem:[%s3 + $0x3f0] sm:$0xff]
    %v1987 = vld [vmem:[%s3 + $0x3f8] sm:$0xff]
    %v1988 = vld [vmem:[%s3 + $0x400] sm:$0xff]
    %v1989 = vld [vmem:[%s3 + $0x408] sm:$0xff]
    %v1990 = vld [vmem:[%s3 + $0x410] sm:$0xff]
    %v1991 = vld [vmem:[%s3 + $0x418] sm:$0xff]
    %v1992 = vld [vmem:[%s3 + $0x420] sm:$0xff]
    %v1993 = vld [vmem:[%s3 + $0x428] sm:$0xff]
    %v1994 = vld [vmem:[%s3 + $0x430] sm:$0xff]
    %v1995 = vld [vmem:[%s3 + $0x438] sm:$0xff]
    %v1996 = vld [vmem:[%s3 + $0x440] sm:$0xff]
    %v1997 = vld [vmem:[%s3 + $0x448] sm:$0xff]
    %v1998 = vld [vmem:[%s3 + $0x450] sm:$0xff]
    %v1999 = vld [vmem:[%s3 + $0x458] sm:$0xff]
    %v2000 = vld [vmem:[%s3 + $0x460] sm:$0xff]
    %v2001 = vld [vmem:[%s3 + $0x468] sm:$0xff]
    %v2002 = vld [vmem:[%s3 + $0x470] sm:$0xff]
    %v2003 = vld [vmem:[%s3 + $0x478] sm:$0xff]
    %v2004 = vld [vmem:[%s3 + $0x480] sm:$0xff]
    %v2005 = vld [vmem:[%s3 + $0x488] sm:$0xff]
    %v2006 = vld [vmem:[%s3 + $0x490] sm:$0xff]
    %v2007 = vld [vmem:[%s3 + $0x498] sm:$0xff]
    %v2008 = vld [vmem:[%s3 + $0x4a0] sm:$0xff]
    %v2009 = vld [vmem:[%s3 + $0x4a8] sm:$0xff]
    %v2010 = vld [vmem:[%s3 + $0x4b0] sm:$0xff]
    %v2011 = vld [vmem:[%s3 + $0x4b8] sm:$0xff]
    %v2012 = vld [vmem:[%s3 + $0x4c0] sm:$0xff]
    %v2013 = vld [vmem:[%s3 + $0x4c8] sm:$0xff]
    %v2014 = vld [vmem:[%s3 + $0x4d0] sm:$0xff]
    %v2015 = vld [vmem:[%s3 + $0x4d8] sm:$0xff]
    %v2016 = vld [vmem:[%s3 + $0x4e0] sm:$0xff]
    %v2017 = vld [vmem:[%s3 + $0x4e8] sm:$0xff]
    %v2018 = vld [vmem:[%s3 + $0x4f0] sm:$0xff]
    %v2019 = vld [vmem:[%s3 + $0x4f8] sm:$0xff]
    %2020 = vmatpush.msra.mxu0 %v1935
    %2021 = vmatpush.msra.mxu0 %v1930
    %2022 = vmatpush.msra.mxu0 %v1925
    %2023 = vmatpush.msra.mxu0 %v1920
    %2024 = vmatpush.msra.mxu0 %v1915
    %2025 = vmatpush.msra.mxu0 %v1910
    %2026 = vmatpush.msra.mxu0 %v1905
    %2027 = vmatpush.msra.mxu0 %v1900
    %2028 = vmatpush.msra.mxu0 %v1895
    %2029 = vmatpush.msra.mxu0 %v1890
    %2030 = vmatpush.msra.mxu0 %v1885
    %2031 = vmatpush.msra.mxu0 %v1880
    %2032 = vmatpush.msra.mxu0 %v1875
    %2033 = vmatpush.msra.mxu0 %v1870
    %2034 = vmatpush.msra.mxu0 %v1865
    %2035 = vmatpush.msra.mxu0 %v1860
    %2036 = vmatmul.f32.gmra.mxu0 %v1828
    %v2037 = vpop.f32.mrf.mxu0
    %v2038 = vadd.f32 0.0, %v2037
    %2039 = vmatmul.f32.gmra.mxu0 %v1832
    %v2040 = vpop.f32.mrf.mxu0
    %v2041 = vadd.f32 0.0, %v2040
    %2042 = vmatmul.f32.gmra.mxu0 %v1836
    %v2043 = vpop.f32.mrf.mxu0
    %v2044 = vadd.f32 0.0, %v2043
    %2045 = vmatmul.f32.gmra.mxu0 %v1840
    %v2046 = vpop.f32.mrf.mxu0
    %v2047 = vadd.f32 0.0, %v2046
    %2048 = vmatmul.f32.gmra.mxu0 %v1844
    %v2049 = vpop.f32.mrf.mxu0
    %v2050 = vadd.f32 0.0, %v2049
    %2051 = vmatmul.f32.gmra.mxu0 %v1848
    %v2052 = vpop.f32.mrf.mxu0
    %v2053 = vadd.f32 0.0, %v2052
    %2054 = vmatmul.f32.gmra.mxu0 %v1852
    %v2055 = vpop.f32.mrf.mxu0
    %v2056 = vadd.f32 0.0, %v2055
    %2057 = vmatmul.f32.gmra.mxu0 %v1856
    %v2058 = vpop.f32.mrf.mxu0
    %v2059 = vadd.f32 0.0, %v2058
    %2060 = vdwg.mxu0
    %2061 = vmatpush.msra.mxu0 %v2015
    %2062 = vmatpush.msra.mxu0 %v2010
    %2063 = vmatpush.msra.mxu0 %v2005
    %2064 = vmatpush.msra.mxu0 %v2000
    %2065 = vmatpush.msra.mxu0 %v1995
    %2066 = vmatpush.msra.mxu0 %v1990
    %2067 = vmatpush.msra.mxu0 %v1985
    %2068 = vmatpush.msra.mxu0 %v1980
    %2069 = vmatpush.msra.mxu0 %v1975
    %2070 = vmatpush.msra.mxu0 %v1970
    %2071 = vmatpush.msra.mxu0 %v1965
    %2072 = vmatpush.msra.mxu0 %v1960
    %2073 = vmatpush.msra.mxu0 %v1955
    %2074 = vmatpush.msra.mxu0 %v1950
    %2075 = vmatpush.msra.mxu0 %v1945
    %2076 = vmatpush.msra.mxu0 %v1940
    %2077 = vmatmul.f32.gmra.mxu0 %v1829
    %v2078 = vpop.f32.mrf.mxu0
    %v2079 = vadd.f32 %v2038, %v2078
    %2080 = vmatmul.f32.gmra.mxu0 %v1833
    %v2081 = vpop.f32.mrf.mxu0
    %v2082 = vadd.f32 %v2041, %v2081
    %2083 = vmatmul.f32.gmra.mxu0 %v1837
    %v2084 = vpop.f32.mrf.mxu0
    %v2085 = vadd.f32 %v2044, %v2084
    %2086 = vmatmul.f32.gmra.mxu0 %v1841
    %v2087 = vpop.f32.mrf.mxu0
    %v2088 = vadd.f32 %v2047, %v2087
    %2089 = vmatmul.f32.gmra.mxu0 %v1845
    %v2090 = vpop.f32.mrf.mxu0
    %v2091 = vadd.f32 %v2050, %v2090
    %2092 = vmatmul.f32.gmra.mxu0 %v1849
    %v2093 = vpop.f32.mrf.mxu0
    %v2094 = vadd.f32 %v2053, %v2093
    %2095 = vmatmul.f32.gmra.mxu0 %v1853
    %v2096 = vpop.f32.mrf.mxu0
    %v2097 = vadd.f32 %v2056, %v2096
    %2098 = vmatmul.f32.gmra.mxu0 %v1857
    %v2099 = vpop.f32.mrf.mxu0
    %v2100 = vadd.f32 %v2059, %v2099
    %2101 = vdwg.mxu0
    %2102 = vmatpush.msra.mxu0 %v1936
    %2103 = vmatpush.msra.mxu0 %v1931
    %2104 = vmatpush.msra.mxu0 %v1926
    %2105 = vmatpush.msra.mxu0 %v1921
    %2106 = vmatpush.msra.mxu0 %v1916
    %2107 = vmatpush.msra.mxu0 %v1911
    %2108 = vmatpush.msra.mxu0 %v1906
    %2109 = vmatpush.msra.mxu0 %v1901
    %2110 = vmatpush.msra.mxu0 %v1896
    %2111 = vmatpush.msra.mxu0 %v1891
    %2112 = vmatpush.msra.mxu0 %v1886
    %2113 = vmatpush.msra.mxu0 %v1881
    %2114 = vmatpush.msra.mxu0 %v1876
    %2115 = vmatpush.msra.mxu0 %v1871
    %2116 = vmatpush.msra.mxu0 %v1866
    %2117 = vmatpush.msra.mxu0 %v1861
    %2118 = vmatmul.f32.gmra.mxu0 %v1828
    %v2119 = vpop.f32.mrf.mxu0
    %v2120 = vadd.f32 0.0, %v2119
    %2121 = vmatmul.f32.gmra.mxu0 %v1832
    %v2122 = vpop.f32.mrf.mxu0
    %v2123 = vadd.f32 0.0, %v2122
    %2124 = vmatmul.f32.gmra.mxu0 %v1836
    %v2125 = vpop.f32.mrf.mxu0
    %v2126 = vadd.f32 0.0, %v2125
    %2127 = vmatmul.f32.gmra.mxu0 %v1840
    %v2128 = vpop.f32.mrf.mxu0
    %v2129 = vadd.f32 0.0, %v2128
    %2130 = vmatmul.f32.gmra.mxu0 %v1844
    %v2131 = vpop.f32.mrf.mxu0
    %v2132 = vadd.f32 0.0, %v2131
    %2133 = vmatmul.f32.gmra.mxu0 %v1848
    %v2134 = vpop.f32.mrf.mxu0
    %v2135 = vadd.f32 0.0, %v2134
    %2136 = vmatmul.f32.gmra.mxu0 %v1852
    %v2137 = vpop.f32.mrf.mxu0
    %v2138 = vadd.f32 0.0, %v2137
    %2139 = vmatmul.f32.gmra.mxu0 %v1856
    %v2140 = vpop.f32.mrf.mxu0
    %v2141 = vadd.f32 0.0, %v2140
    %2142 = vdwg.mxu0
    %2143 = vmatpush.msra.mxu0 %v2016
    %2144 = vmatpush.msra.mxu0 %v2011
    %2145 = vmatpush.msra.mxu0 %v2006
    %2146 = vmatpush.msra.mxu0 %v2001
    %2147 = vmatpush.msra.mxu0 %v1996
    %2148 = vmatpush.msra.mxu0 %v1991
    %2149 = vmatpush.msra.mxu0 %v1986
    %2150 = vmatpush.msra.mxu0 %v1981
    %2151 = vmatpush.msra.mxu0 %v1976
    %2152 = vmatpush.msra.mxu0 %v1971
    %2153 = vmatpush.msra.mxu0 %v1966
    %2154 = vmatpush.msra.mxu0 %v1961
    %2155 = vmatpush.msra.mxu0 %v1956
    %2156 = vmatpush.msra.mxu0 %v1951
    %2157 = vmatpush.msra.mxu0 %v1946
    %2158 = vmatpush.msra.mxu0 %v1941
    %2159 = vmatmul.f32.gmra.mxu0 %v1829
    %v2160 = vpop.f32.mrf.mxu0
    %v2161 = vadd.f32 %v2120, %v2160
    %2162 = vmatmul.f32.gmra.mxu0 %v1833
    %v2163 = vpop.f32.mrf.mxu0
    %v2164 = vadd.f32 %v2123, %v2163
    %2165 = vmatmul.f32.gmra.mxu0 %v1837
    %v2166 = vpop.f32.mrf.mxu0
    %v2167 = vadd.f32 %v2126, %v2166
    %2168 = vmatmul.f32.gmra.mxu0 %v1841
    %v2169 = vpop.f32.mrf.mxu0
    %v2170 = vadd.f32 %v2129, %v2169
    %2171 = vmatmul.f32.gmra.mxu0 %v1845
    %v2172 = vpop.f32.mrf.mxu0
    %v2173 = vadd.f32 %v2132, %v2172
    %2174 = vmatmul.f32.gmra.mxu0 %v1849
    %v2175 = vpop.f32.mrf.mxu0
    %v2176 = vadd.f32 %v2135, %v2175
    %2177 = vmatmul.f32.gmra.mxu0 %v1853
    %v2178 = vpop.f32.mrf.mxu0
    %v2179 = vadd.f32 %v2138, %v2178
    %2180 = vmatmul.f32.gmra.mxu0 %v1857
    %v2181 = vpop.f32.mrf.mxu0
    %v2182 = vadd.f32 %v2141, %v2181
    %2183 = vdwg.mxu0
    %2184 = vmatpush.msra.mxu0 %v1937
    %2185 = vmatpush.msra.mxu0 %v1932
    %2186 = vmatpush.msra.mxu0 %v1927
    %2187 = vmatpush.msra.mxu0 %v1922
    %2188 = vmatpush.msra.mxu0 %v1917
    %2189 = vmatpush.msra.mxu0 %v1912
    %2190 = vmatpush.msra.mxu0 %v1907
    %2191 = vmatpush.msra.mxu0 %v1902
    %2192 = vmatpush.msra.mxu0 %v1897
    %2193 = vmatpush.msra.mxu0 %v1892
    %2194 = vmatpush.msra.mxu0 %v1887
    %2195 = vmatpush.msra.mxu0 %v1882
    %2196 = vmatpush.msra.mxu0 %v1877
    %2197 = vmatpush.msra.mxu0 %v1872
    %2198 = vmatpush.msra.mxu0 %v1867
    %2199 = vmatpush.msra.mxu0 %v1862
    %2200 = vmatmul.f32.gmra.mxu0 %v1828
    %v2201 = vpop.f32.mrf.mxu0
    %v2202 = vadd.f32 0.0, %v2201
    %2203 = vmatmul.f32.gmra.mxu0 %v1832
    %v2204 = vpop.f32.mrf.mxu0
    %v2205 = vadd.f32 0.0, %v2204
    %2206 = vmatmul.f32.gmra.mxu0 %v1836
    %v2207 = vpop.f32.mrf.mxu0
    %v2208 = vadd.f32 0.0, %v2207
    %2209 = vmatmul.f32.gmra.mxu0 %v1840
    %v2210 = vpop.f32.mrf.mxu0
    %v2211 = vadd.f32 0.0, %v2210
    %2212 = vmatmul.f32.gmra.mxu0 %v1844
    %v2213 = vpop.f32.mrf.mxu0
    %v2214 = vadd.f32 0.0, %v2213
    %2215 = vmatmul.f32.gmra.mxu0 %v1848
    %v2216 = vpop.f32.mrf.mxu0
    %v2217 = vadd.f32 0.0, %v2216
    %2218 = vmatmul.f32.gmra.mxu0 %v1852
    %v2219 = vpop.f32.mrf.mxu0
    %v2220 = vadd.f32 0.0, %v2219
    %2221 = vmatmul.f32.gmra.mxu0 %v1856
    %v2222 = vpop.f32.mrf.mxu0
    %v2223 = vadd.f32 0.0, %v2222
    %2224 = vdwg.mxu0
    %2225 = vmatpush.msra.mxu0 %v2017
    %2226 = vmatpush.msra.mxu0 %v2012
    %2227 = vmatpush.msra.mxu0 %v2007
    %2228 = vmatpush.msra.mxu0 %v2002
    %2229 = vmatpush.msra.mxu0 %v1997
    %2230 = vmatpush.msra.mxu0 %v1992
    %2231 = vmatpush.msra.mxu0 %v1987
    %2232 = vmatpush.msra.mxu0 %v1982
    %2233 = vmatpush.msra.mxu0 %v1977
    %2234 = vmatpush.msra.mxu0 %v1972
    %2235 = vmatpush.msra.mxu0 %v1967
    %2236 = vmatpush.msra.mxu0 %v1962
    %2237 = vmatpush.msra.mxu0 %v1957
    %2238 = vmatpush.msra.mxu0 %v1952
    %2239 = vmatpush.msra.mxu0 %v1947
    %2240 = vmatpush.msra.mxu0 %v1942
    %2241 = vmatmul.f32.gmra.mxu0 %v1829
    %v2242 = vpop.f32.mrf.mxu0
    %v2243 = vadd.f32 %v2202, %v2242
    %2244 = vmatmul.f32.gmra.mxu0 %v1833
    %v2245 = vpop.f32.mrf.mxu0
    %v2246 = vadd.f32 %v2205, %v2245
    %2247 = vmatmul.f32.gmra.mxu0 %v1837
    %v2248 = vpop.f32.mrf.mxu0
    %v2249 = vadd.f32 %v2208, %v2248
    %2250 = vmatmul.f32.gmra.mxu0 %v1841
    %v2251 = vpop.f32.mrf.mxu0
    %v2252 = vadd.f32 %v2211, %v2251
    %2253 = vmatmul.f32.gmra.mxu0 %v1845
    %v2254 = vpop.f32.mrf.mxu0
    %v2255 = vadd.f32 %v2214, %v2254
    %2256 = vmatmul.f32.gmra.mxu0 %v1849
    %v2257 = vpop.f32.mrf.mxu0
    %v2258 = vadd.f32 %v2217, %v2257
    %2259 = vmatmul.f32.gmra.mxu0 %v1853
    %v2260 = vpop.f32.mrf.mxu0
    %v2261 = vadd.f32 %v2220, %v2260
    %2262 = vmatmul.f32.gmra.mxu0 %v1857
    %v2263 = vpop.f32.mrf.mxu0
    %v2264 = vadd.f32 %v2223, %v2263
    %2265 = vdwg.mxu0
    %2266 = vmatpush.msra.mxu0 %v1938
    %2267 = vmatpush.msra.mxu0 %v1933
    %2268 = vmatpush.msra.mxu0 %v1928
    %2269 = vmatpush.msra.mxu0 %v1923
    %2270 = vmatpush.msra.mxu0 %v1918
    %2271 = vmatpush.msra.mxu0 %v1913
    %2272 = vmatpush.msra.mxu0 %v1908
    %2273 = vmatpush.msra.mxu0 %v1903
    %2274 = vmatpush.msra.mxu0 %v1898
    %2275 = vmatpush.msra.mxu0 %v1893
    %2276 = vmatpush.msra.mxu0 %v1888
    %2277 = vmatpush.msra.mxu0 %v1883
    %2278 = vmatpush.msra.mxu0 %v1878
    %2279 = vmatpush.msra.mxu0 %v1873
    %2280 = vmatpush.msra.mxu0 %v1868
    %2281 = vmatpush.msra.mxu0 %v1863
    %2282 = vmatmul.f32.gmra.mxu0 %v1828
    %v2283 = vpop.f32.mrf.mxu0
    %v2284 = vadd.f32 0.0, %v2283
    %2285 = vmatmul.f32.gmra.mxu0 %v1832
    %v2286 = vpop.f32.mrf.mxu0
    %v2287 = vadd.f32 0.0, %v2286
    %2288 = vmatmul.f32.gmra.mxu0 %v1836
    %v2289 = vpop.f32.mrf.mxu0
    %v2290 = vadd.f32 0.0, %v2289
    %2291 = vmatmul.f32.gmra.mxu0 %v1840
    %v2292 = vpop.f32.mrf.mxu0
    %v2293 = vadd.f32 0.0, %v2292
    %2294 = vmatmul.f32.gmra.mxu0 %v1844
    %v2295 = vpop.f32.mrf.mxu0
    %v2296 = vadd.f32 0.0, %v2295
    %2297 = vmatmul.f32.gmra.mxu0 %v1848
    %v2298 = vpop.f32.mrf.mxu0
    %v2299 = vadd.f32 0.0, %v2298
    %2300 = vmatmul.f32.gmra.mxu0 %v1852
    %v2301 = vpop.f32.mrf.mxu0
    %v2302 = vadd.f32 0.0, %v2301
    %2303 = vmatmul.f32.gmra.mxu0 %v1856
    %v2304 = vpop.f32.mrf.mxu0
    %v2305 = vadd.f32 0.0, %v2304
    %2306 = vdwg.mxu0
    %2307 = vmatpush.msra.mxu0 %v2018
    %2308 = vmatpush.msra.mxu0 %v2013
    %2309 = vmatpush.msra.mxu0 %v2008
    %2310 = vmatpush.msra.mxu0 %v2003
    %2311 = vmatpush.msra.mxu0 %v1998
    %2312 = vmatpush.msra.mxu0 %v1993
    %2313 = vmatpush.msra.mxu0 %v1988
    %2314 = vmatpush.msra.mxu0 %v1983
    %2315 = vmatpush.msra.mxu0 %v1978
    %2316 = vmatpush.msra.mxu0 %v1973
    %2317 = vmatpush.msra.mxu0 %v1968
    %2318 = vmatpush.msra.mxu0 %v1963
    %2319 = vmatpush.msra.mxu0 %v1958
    %2320 = vmatpush.msra.mxu0 %v1953
    %2321 = vmatpush.msra.mxu0 %v1948
    %2322 = vmatpush.msra.mxu0 %v1943
    %2323 = vmatmul.f32.gmra.mxu0 %v1829
    %v2324 = vpop.f32.mrf.mxu0
    %v2325 = vadd.f32 %v2284, %v2324
    %2326 = vmatmul.f32.gmra.mxu0 %v1833
    %v2327 = vpop.f32.mrf.mxu0
    %v2328 = vadd.f32 %v2287, %v2327
    %2329 = vmatmul.f32.gmra.mxu0 %v1837
    %v2330 = vpop.f32.mrf.mxu0
    %v2331 = vadd.f32 %v2290, %v2330
    %2332 = vmatmul.f32.gmra.mxu0 %v1841
    %v2333 = vpop.f32.mrf.mxu0
    %v2334 = vadd.f32 %v2293, %v2333
    %2335 = vmatmul.f32.gmra.mxu0 %v1845
    %v2336 = vpop.f32.mrf.mxu0
    %v2337 = vadd.f32 %v2296, %v2336
    %2338 = vmatmul.f32.gmra.mxu0 %v1849
    %v2339 = vpop.f32.mrf.mxu0
    %v2340 = vadd.f32 %v2299, %v2339
    %2341 = vmatmul.f32.gmra.mxu0 %v1853
    %v2342 = vpop.f32.mrf.mxu0
    %v2343 = vadd.f32 %v2302, %v2342
    %2344 = vmatmul.f32.gmra.mxu0 %v1857
    %v2345 = vpop.f32.mrf.mxu0
    %v2346 = vadd.f32 %v2305, %v2345
    %2347 = vdwg.mxu0
    %2348 = vmatpush.msra.mxu0 %v1939
    %2349 = vmatpush.msra.mxu0 %v1934
    %2350 = vmatpush.msra.mxu0 %v1929
    %2351 = vmatpush.msra.mxu0 %v1924
    %2352 = vmatpush.msra.mxu0 %v1919
    %2353 = vmatpush.msra.mxu0 %v1914
    %2354 = vmatpush.msra.mxu0 %v1909
    %2355 = vmatpush.msra.mxu0 %v1904
    %2356 = vmatpush.msra.mxu0 %v1899
    %2357 = vmatpush.msra.mxu0 %v1894
    %2358 = vmatpush.msra.mxu0 %v1889
    %2359 = vmatpush.msra.mxu0 %v1884
    %2360 = vmatpush.msra.mxu0 %v1879
    %2361 = vmatpush.msra.mxu0 %v1874
    %2362 = vmatpush.msra.mxu0 %v1869
    %2363 = vmatpush.msra.mxu0 %v1864
    %2364 = vmatmul.f32.gmra.mxu0 %v1828
    %v2365 = vpop.f32.mrf.mxu0
    %v2366 = vadd.f32 0.0, %v2365
    %2367 = vmatmul.f32.gmra.mxu0 %v1832
    %v2368 = vpop.f32.mrf.mxu0
    %v2369 = vadd.f32 0.0, %v2368
    %2370 = vmatmul.f32.gmra.mxu0 %v1836
    %v2371 = vpop.f32.mrf.mxu0
    %v2372 = vadd.f32 0.0, %v2371
    %2373 = vmatmul.f32.gmra.mxu0 %v1840
    %v2374 = vpop.f32.mrf.mxu0
    %v2375 = vadd.f32 0.0, %v2374
    %2376 = vmatmul.f32.gmra.mxu0 %v1844
    %v2377 = vpop.f32.mrf.mxu0
    %v2378 = vadd.f32 0.0, %v2377
    %2379 = vmatmul.f32.gmra.mxu0 %v1848
    %v2380 = vpop.f32.mrf.mxu0
    %v2381 = vadd.f32 0.0, %v2380
    %2382 = vmatmul.f32.gmra.mxu0 %v1852
    %v2383 = vpop.f32.mrf.mxu0
    %v2384 = vadd.f32 0.0, %v2383
    %2385 = vmatmul.f32.gmra.mxu0 %v1856
    %v2386 = vpop.f32.mrf.mxu0
    %v2387 = vadd.f32 0.0, %v2386
    %2388 = vdwg.mxu0
    %2389 = vmatpush.msra.mxu0 %v2019
    %2390 = vmatpush.msra.mxu0 %v2014
    %2391 = vmatpush.msra.mxu0 %v2009
    %2392 = vmatpush.msra.mxu0 %v2004
    %2393 = vmatpush.msra.mxu0 %v1999
    %2394 = vmatpush.msra.mxu0 %v1994
    %2395 = vmatpush.msra.mxu0 %v1989
    %2396 = vmatpush.msra.mxu0 %v1984
    %2397 = vmatpush.msra.mxu0 %v1979
    %2398 = vmatpush.msra.mxu0 %v1974
    %2399 = vmatpush.msra.mxu0 %v1969
    %2400 = vmatpush.msra.mxu0 %v1964
    %2401 = vmatpush.msra.mxu0 %v1959
    %2402 = vmatpush.msra.mxu0 %v1954
    %2403 = vmatpush.msra.mxu0 %v1949
    %2404 = vmatpush.msra.mxu0 %v1944
    %2405 = vmatmul.f32.gmra.mxu0 %v1829
    %v2406 = vpop.f32.mrf.mxu0
    %v2407 = vadd.f32 %v2366, %v2406
    %2408 = vmatmul.f32.gmra.mxu0 %v1833
    %v2409 = vpop.f32.mrf.mxu0
    %v2410 = vadd.f32 %v2369, %v2409
    %2411 = vmatmul.f32.gmra.mxu0 %v1837
    %v2412 = vpop.f32.mrf.mxu0
    %v2413 = vadd.f32 %v2372, %v2412
    %2414 = vmatmul.f32.gmra.mxu0 %v1841
    %v2415 = vpop.f32.mrf.mxu0
    %v2416 = vadd.f32 %v2375, %v2415
    %2417 = vmatmul.f32.gmra.mxu0 %v1845
    %v2418 = vpop.f32.mrf.mxu0
    %v2419 = vadd.f32 %v2378, %v2418
    %2420 = vmatmul.f32.gmra.mxu0 %v1849
    %v2421 = vpop.f32.mrf.mxu0
    %v2422 = vadd.f32 %v2381, %v2421
    %2423 = vmatmul.f32.gmra.mxu0 %v1853
    %v2424 = vpop.f32.mrf.mxu0
    %v2425 = vadd.f32 %v2384, %v2424
    %2426 = vmatmul.f32.gmra.mxu0 %v1857
    %v2427 = vpop.f32.mrf.mxu0
    %v2428 = vadd.f32 %v2387, %v2427
    %2429 = vdwg.mxu0
    %v2430 = vld [vmem:[%s4] sm:$0xff]
    %v2431 = vld [vmem:[%s4 + $0x8] sm:$0xff]
    %v2432 = vld [vmem:[%s4 + $0x10] sm:$0xff]
    %v2433 = vld [vmem:[%s4 + $0x18] sm:$0xff]
    %v2434 = vld [vmem:[%s4 + $0x20] sm:$0xff]
    %v2435 = vld [vmem:[%s4 + $0x28] sm:$0xff]
    %v2436 = vld [vmem:[%s4 + $0x30] sm:$0xff]
    %v2437 = vld [vmem:[%s4 + $0x38] sm:$0xff]
    %v2438 = vld [vmem:[%s4 + $0x40] sm:$0xff]
    %v2439 = vld [vmem:[%s4 + $0x48] sm:$0xff]
    %v2440 = vld [vmem:[%s4 + $0x50] sm:$0xff]
    %v2441 = vld [vmem:[%s4 + $0x58] sm:$0xff]
    %v2442 = vld [vmem:[%s4 + $0x60] sm:$0xff]
    %v2443 = vld [vmem:[%s4 + $0x68] sm:$0xff]
    %v2444 = vld [vmem:[%s4 + $0x70] sm:$0xff]
    %v2445 = vld [vmem:[%s4 + $0x78] sm:$0xff]
    %v2446 = vld [vmem:[%s4 + $0x80] sm:$0xff]
    %v2447 = vld [vmem:[%s4 + $0x88] sm:$0xff]
    %v2448 = vld [vmem:[%s4 + $0x90] sm:$0xff]
    %v2449 = vld [vmem:[%s4 + $0x98] sm:$0xff]
    %v2450 = vld [vmem:[%s4 + $0xa0] sm:$0xff]
    %v2451 = vld [vmem:[%s4 + $0xa8] sm:$0xff]
    %v2452 = vld [vmem:[%s4 + $0xb0] sm:$0xff]
    %v2453 = vld [vmem:[%s4 + $0xb8] sm:$0xff]
    %v2454 = vld [vmem:[%s4 + $0xc0] sm:$0xff]
    %v2455 = vld [vmem:[%s4 + $0xc8] sm:$0xff]
    %v2456 = vld [vmem:[%s4 + $0xd0] sm:$0xff]
    %v2457 = vld [vmem:[%s4 + $0xd8] sm:$0xff]
    %v2458 = vld [vmem:[%s4 + $0xe0] sm:$0xff]
    %v2459 = vld [vmem:[%s4 + $0xe8] sm:$0xff]
    %v2460 = vld [vmem:[%s4 + $0xf0] sm:$0xff]
    %v2461 = vld [vmem:[%s4 + $0xf8] sm:$0xff]
    %v2462 = vld [vmem:[%s4 + $0x100] sm:$0xff]
    %v2463 = vld [vmem:[%s4 + $0x108] sm:$0xff]
    %v2464 = vld [vmem:[%s4 + $0x110] sm:$0xff]
    %v2465 = vld [vmem:[%s4 + $0x118] sm:$0xff]
    %v2466 = vld [vmem:[%s4 + $0x120] sm:$0xff]
    %v2467 = vld [vmem:[%s4 + $0x128] sm:$0xff]
    %v2468 = vld [vmem:[%s4 + $0x130] sm:$0xff]
    %v2469 = vld [vmem:[%s4 + $0x138] sm:$0xff]
    %v2470 = vmul.f32 %v2079, %v2430
    %v2471 = vmul.f32 %v2161, %v2431
    %v2472 = vmul.f32 %v2243, %v2432
    %v2473 = vmul.f32 %v2325, %v2433
    %v2474 = vmul.f32 %v2407, %v2434
    %v2475 = vmul.f32 %v2082, %v2435
    %v2476 = vmul.f32 %v2164, %v2436
    %v2477 = vmul.f32 %v2246, %v2437
    %v2478 = vmul.f32 %v2328, %v2438
    %v2479 = vmul.f32 %v2410, %v2439
    %v2480 = vmul.f32 %v2085, %v2440
    %v2481 = vmul.f32 %v2167, %v2441
    %v2482 = vmul.f32 %v2249, %v2442
    %v2483 = vmul.f32 %v2331, %v2443
    %v2484 = vmul.f32 %v2413, %v2444
    %v2485 = vmul.f32 %v2088, %v2445
    %v2486 = vmul.f32 %v2170, %v2446
    %v2487 = vmul.f32 %v2252, %v2447
    %v2488 = vmul.f32 %v2334, %v2448
    %v2489 = vmul.f32 %v2416, %v2449
    %v2490 = vmul.f32 %v2091, %v2450
    %v2491 = vmul.f32 %v2173, %v2451
    %v2492 = vmul.f32 %v2255, %v2452
    %v2493 = vmul.f32 %v2337, %v2453
    %v2494 = vmul.f32 %v2419, %v2454
    %v2495 = vmul.f32 %v2094, %v2455
    %v2496 = vmul.f32 %v2176, %v2456
    %v2497 = vmul.f32 %v2258, %v2457
    %v2498 = vmul.f32 %v2340, %v2458
    %v2499 = vmul.f32 %v2422, %v2459
    %v2500 = vmul.f32 %v2097, %v2460
    %v2501 = vmul.f32 %v2179, %v2461
    %v2502 = vmul.f32 %v2261, %v2462
    %v2503 = vmul.f32 %v2343, %v2463
    %v2504 = vmul.f32 %v2425, %v2464
    %v2505 = vmul.f32 %v2100, %v2465
    %v2506 = vmul.f32 %v2182, %v2466
    %v2507 = vmul.f32 %v2264, %v2467
    %v2508 = vmul.f32 %v2346, %v2468
    %v2509 = vmul.f32 %v2428, %v2469
    %v2510 = vadd.f32 %v2470, %v2475
    %v2511 = vadd.f32 %v2510, %v2480
    %v2512 = vadd.f32 %v2511, %v2485
    %v2513 = vadd.f32 %v2512, %v2490
    %v2514 = vadd.f32 %v2513, %v2495
    %v2515 = vadd.f32 %v2514, %v2500
    %v2516 = vadd.f32 %v2515, %v2505
    %v2517 = vrot.slane %v2516, 4
    %v2518 = vadd.f32 %v2516, %v2517
    %v2519 = vrot.slane %v2518, 2
    %v2520 = vadd.f32 %v2518, %v2519
    %v2521 = vrot.slane %v2520, 1
    %v2522 = vadd.f32 %v2520, %v2521
    %v2523 = vadd.f32 %v2471, %v2476
    %v2524 = vadd.f32 %v2523, %v2481
    %v2525 = vadd.f32 %v2524, %v2486
    %v2526 = vadd.f32 %v2525, %v2491
    %v2527 = vadd.f32 %v2526, %v2496
    %v2528 = vadd.f32 %v2527, %v2501
    %v2529 = vadd.f32 %v2528, %v2506
    %v2530 = vrot.slane %v2529, 4
    %v2531 = vadd.f32 %v2529, %v2530
    %v2532 = vrot.slane %v2531, 2
    %v2533 = vadd.f32 %v2531, %v2532
    %v2534 = vrot.slane %v2533, 1
    %v2535 = vadd.f32 %v2533, %v2534
    %v2536 = vadd.f32 %v2472, %v2477
    %v2537 = vadd.f32 %v2536, %v2482
    %v2538 = vadd.f32 %v2537, %v2487
    %v2539 = vadd.f32 %v2538, %v2492
    %v2540 = vadd.f32 %v2539, %v2497
    %v2541 = vadd.f32 %v2540, %v2502
    %v2542 = vadd.f32 %v2541, %v2507
    %v2543 = vrot.slane %v2542, 4
    %v2544 = vadd.f32 %v2542, %v2543
    %v2545 = vrot.slane %v2544, 2
    %v2546 = vadd.f32 %v2544, %v2545
    %v2547 = vrot.slane %v2546, 1
    %v2548 = vadd.f32 %v2546, %v2547
    %v2549 = vadd.f32 %v2473, %v2478
    %v2550 = vadd.f32 %v2549, %v2483
    %v2551 = vadd.f32 %v2550, %v2488
    %v2552 = vadd.f32 %v2551, %v2493
    %v2553 = vadd.f32 %v2552, %v2498
    %v2554 = vadd.f32 %v2553, %v2503
    %v2555 = vadd.f32 %v2554, %v2508
    %v2556 = vrot.slane %v2555, 4
    %v2557 = vadd.f32 %v2555, %v2556
    %v2558 = vrot.slane %v2557, 2
    %v2559 = vadd.f32 %v2557, %v2558
    %v2560 = vrot.slane %v2559, 1
    %v2561 = vadd.f32 %v2559, %v2560
    %v2562 = vadd.f32 %v2474, %v2479
    %v2563 = vadd.f32 %v2562, %v2484
    %v2564 = vadd.f32 %v2563, %v2489
    %v2565 = vadd.f32 %v2564, %v2494
    %v2566 = vadd.f32 %v2565, %v2499
    %v2567 = vadd.f32 %v2566, %v2504
    %v2568 = vadd.f32 %v2567, %v2509
    %v2569 = vrot.slane %v2568, 4
    %v2570 = vadd.f32 %v2568, %v2569
    %v2571 = vrot.slane %v2570, 2
    %v2572 = vadd.f32 %v2570, %v2571
    %v2573 = vrot.slane %v2572, 1
    %v2574 = vadd.f32 %v2572, %v2573
    %v2575 = vld [vmem:[%s5] sm:$0xff]
    %v2576 = vld [vmem:[%s5 + $0x8] sm:$0xff]
    %v2577 = vld [vmem:[%s5 + $0x10] sm:$0xff]
    %v2578 = vld [vmem:[%s5 + $0x18] sm:$0xff]
    %v2579 = vld [vmem:[%s5 + $0x20] sm:$0xff]
    %v2580 = vld [vmem:[%s5 + $0x28] sm:$0xff]
    %v2581 = vld [vmem:[%s5 + $0x30] sm:$0xff]
    %v2582 = vld [vmem:[%s5 + $0x38] sm:$0xff]
    %v2583 = vld [vmem:[%s5 + $0x40] sm:$0xff]
    %v2584 = vld [vmem:[%s5 + $0x48] sm:$0xff]
    %v2585 = vld [vmem:[%s5 + $0x50] sm:$0xff]
    %v2586 = vld [vmem:[%s5 + $0x58] sm:$0xff]
    %v2587 = vld [vmem:[%s5 + $0x60] sm:$0xff]
    %v2588 = vld [vmem:[%s5 + $0x68] sm:$0xff]
    %v2589 = vld [vmem:[%s5 + $0x70] sm:$0xff]
    %v2590 = vld [vmem:[%s5 + $0x78] sm:$0xff]
    %v2591 = vld [vmem:[%s5 + $0x80] sm:$0xff]
    %v2592 = vld [vmem:[%s5 + $0x88] sm:$0xff]
    %v2593 = vld [vmem:[%s5 + $0x90] sm:$0xff]
    %v2594 = vld [vmem:[%s5 + $0x98] sm:$0xff]
    %v2595 = vld [vmem:[%s5 + $0xa0] sm:$0xff]
    %v2596 = vld [vmem:[%s5 + $0xa8] sm:$0xff]
    %v2597 = vld [vmem:[%s5 + $0xb0] sm:$0xff]
    %v2598 = vld [vmem:[%s5 + $0xb8] sm:$0xff]
    %v2599 = vld [vmem:[%s5 + $0xc0] sm:$0xff]
    %v2600 = vld [vmem:[%s5 + $0xc8] sm:$0xff]
    %v2601 = vld [vmem:[%s5 + $0xd0] sm:$0xff]
    %v2602 = vld [vmem:[%s5 + $0xd8] sm:$0xff]
    %v2603 = vld [vmem:[%s5 + $0xe0] sm:$0xff]
    %v2604 = vld [vmem:[%s5 + $0xe8] sm:$0xff]
    %v2605 = vld [vmem:[%s5 + $0xf0] sm:$0xff]
    %v2606 = vld [vmem:[%s5 + $0xf8] sm:$0xff]
    %v2607 = vld [vmem:[%s5 + $0x100] sm:$0xff]
    %v2608 = vld [vmem:[%s5 + $0x108] sm:$0xff]
    %v2609 = vld [vmem:[%s5 + $0x110] sm:$0xff]
    %v2610 = vld [vmem:[%s5 + $0x118] sm:$0xff]
    %v2611 = vld [vmem:[%s5 + $0x120] sm:$0xff]
    %v2612 = vld [vmem:[%s5 + $0x128] sm:$0xff]
    %v2613 = vld [vmem:[%s5 + $0x130] sm:$0xff]
    %v2614 = vld [vmem:[%s5 + $0x138] sm:$0xff]
    %v2615 = vld [vmem:[%s5 + $0x140] sm:$0xff]
    %v2616 = vld [vmem:[%s5 + $0x148] sm:$0xff]
    %v2617 = vld [vmem:[%s5 + $0x150] sm:$0xff]
    %v2618 = vld [vmem:[%s5 + $0x158] sm:$0xff]
    %v2619 = vld [vmem:[%s5 + $0x160] sm:$0xff]
    %v2620 = vld [vmem:[%s5 + $0x168] sm:$0xff]
    %v2621 = vld [vmem:[%s5 + $0x170] sm:$0xff]
    %v2622 = vld [vmem:[%s5 + $0x178] sm:$0xff]
    %v2623 = vld [vmem:[%s5 + $0x180] sm:$0xff]
    %v2624 = vld [vmem:[%s5 + $0x188] sm:$0xff]
    %v2625 = vld [vmem:[%s5 + $0x190] sm:$0xff]
    %v2626 = vld [vmem:[%s5 + $0x198] sm:$0xff]
    %v2627 = vld [vmem:[%s5 + $0x1a0] sm:$0xff]
    %v2628 = vld [vmem:[%s5 + $0x1a8] sm:$0xff]
    %v2629 = vld [vmem:[%s5 + $0x1b0] sm:$0xff]
    %v2630 = vld [vmem:[%s5 + $0x1b8] sm:$0xff]
    %v2631 = vld [vmem:[%s5 + $0x1c0] sm:$0xff]
    %v2632 = vld [vmem:[%s5 + $0x1c8] sm:$0xff]
    %v2633 = vld [vmem:[%s5 + $0x1d0] sm:$0xff]
    %v2634 = vld [vmem:[%s5 + $0x1d8] sm:$0xff]
    %v2635 = vld [vmem:[%s5 + $0x1e0] sm:$0xff]
    %v2636 = vld [vmem:[%s5 + $0x1e8] sm:$0xff]
    %v2637 = vld [vmem:[%s5 + $0x1f0] sm:$0xff]
    %v2638 = vld [vmem:[%s5 + $0x1f8] sm:$0xff]
    %v2639 = vld [vmem:[%s5 + $0x200] sm:$0xff]
    %v2640 = vld [vmem:[%s5 + $0x208] sm:$0xff]
    %v2641 = vld [vmem:[%s5 + $0x210] sm:$0xff]
    %v2642 = vld [vmem:[%s5 + $0x218] sm:$0xff]
    %v2643 = vld [vmem:[%s5 + $0x220] sm:$0xff]
    %v2644 = vld [vmem:[%s5 + $0x228] sm:$0xff]
    %v2645 = vld [vmem:[%s5 + $0x230] sm:$0xff]
    %v2646 = vld [vmem:[%s5 + $0x238] sm:$0xff]
    %v2647 = vld [vmem:[%s5 + $0x240] sm:$0xff]
    %v2648 = vld [vmem:[%s5 + $0x248] sm:$0xff]
    %v2649 = vld [vmem:[%s5 + $0x250] sm:$0xff]
    %v2650 = vld [vmem:[%s5 + $0x258] sm:$0xff]
    %v2651 = vld [vmem:[%s5 + $0x260] sm:$0xff]
    %v2652 = vld [vmem:[%s5 + $0x268] sm:$0xff]
    %v2653 = vld [vmem:[%s5 + $0x270] sm:$0xff]
    %v2654 = vld [vmem:[%s5 + $0x278] sm:$0xff]
    %2655 = vmatpush.msra.mxu0 %v2590
    %2656 = vmatpush.msra.mxu0 %v2589
    %2657 = vmatpush.msra.mxu0 %v2588
    %2658 = vmatpush.msra.mxu0 %v2587
    %2659 = vmatpush.msra.mxu0 %v2586
    %2660 = vmatpush.msra.mxu0 %v2585
    %2661 = vmatpush.msra.mxu0 %v2584
    %2662 = vmatpush.msra.mxu0 %v2583
    %2663 = vmatpush.msra.mxu0 %v2582
    %2664 = vmatpush.msra.mxu0 %v2581
    %2665 = vmatpush.msra.mxu0 %v2580
    %2666 = vmatpush.msra.mxu0 %v2579
    %2667 = vmatpush.msra.mxu0 %v2578
    %2668 = vmatpush.msra.mxu0 %v2577
    %2669 = vmatpush.msra.mxu0 %v2576
    %2670 = vmatpush.msra.mxu0 %v2575
    %2671 = vmatmul.f32.gmra.mxu0 %v2522
    %v2672 = vpop.f32.mrf.mxu0
    %v2673 = vadd.f32 0.0, %v2672
    %2674 = vdwg.mxu0
    %2675 = vmatpush.msra.mxu0 %v2606
    %2676 = vmatpush.msra.mxu0 %v2605
    %2677 = vmatpush.msra.mxu0 %v2604
    %2678 = vmatpush.msra.mxu0 %v2603
    %2679 = vmatpush.msra.mxu0 %v2602
    %2680 = vmatpush.msra.mxu0 %v2601
    %2681 = vmatpush.msra.mxu0 %v2600
    %2682 = vmatpush.msra.mxu0 %v2599
    %2683 = vmatpush.msra.mxu0 %v2598
    %2684 = vmatpush.msra.mxu0 %v2597
    %2685 = vmatpush.msra.mxu0 %v2596
    %2686 = vmatpush.msra.mxu0 %v2595
    %2687 = vmatpush.msra.mxu0 %v2594
    %2688 = vmatpush.msra.mxu0 %v2593
    %2689 = vmatpush.msra.mxu0 %v2592
    %2690 = vmatpush.msra.mxu0 %v2591
    %2691 = vmatmul.f32.gmra.mxu0 %v2535
    %v2692 = vpop.f32.mrf.mxu0
    %v2693 = vadd.f32 %v2673, %v2692
    %2694 = vdwg.mxu0
    %2695 = vmatpush.msra.mxu0 %v2622
    %2696 = vmatpush.msra.mxu0 %v2621
    %2697 = vmatpush.msra.mxu0 %v2620
    %2698 = vmatpush.msra.mxu0 %v2619
    %2699 = vmatpush.msra.mxu0 %v2618
    %2700 = vmatpush.msra.mxu0 %v2617
    %2701 = vmatpush.msra.mxu0 %v2616
    %2702 = vmatpush.msra.mxu0 %v2615
    %2703 = vmatpush.msra.mxu0 %v2614
    %2704 = vmatpush.msra.mxu0 %v2613
    %2705 = vmatpush.msra.mxu0 %v2612
    %2706 = vmatpush.msra.mxu0 %v2611
    %2707 = vmatpush.msra.mxu0 %v2610
    %2708 = vmatpush.msra.mxu0 %v2609
    %2709 = vmatpush.msra.mxu0 %v2608
    %2710 = vmatpush.msra.mxu0 %v2607
    %2711 = vmatmul.f32.gmra.mxu0 %v2548
    %v2712 = vpop.f32.mrf.mxu0
    %v2713 = vadd.f32 %v2693, %v2712
    %2714 = vdwg.mxu0
    %2715 = vmatpush.msra.mxu0 %v2638
    %2716 = vmatpush.msra.mxu0 %v2637
    %2717 = vmatpush.msra.mxu0 %v2636
    %2718 = vmatpush.msra.mxu0 %v2635
    %2719 = vmatpush.msra.mxu0 %v2634
    %2720 = vmatpush.msra.mxu0 %v2633
    %2721 = vmatpush.msra.mxu0 %v2632
    %2722 = vmatpush.msra.mxu0 %v2631
    %2723 = vmatpush.msra.mxu0 %v2630
    %2724 = vmatpush.msra.mxu0 %v2629
    %2725 = vmatpush.msra.mxu0 %v2628
    %2726 = vmatpush.msra.mxu0 %v2627
    %2727 = vmatpush.msra.mxu0 %v2626
    %2728 = vmatpush.msra.mxu0 %v2625
    %2729 = vmatpush.msra.mxu0 %v2624
    %2730 = vmatpush.msra.mxu0 %v2623
    %2731 = vmatmul.f32.gmra.mxu0 %v2561
    %v2732 = vpop.f32.mrf.mxu0
    %v2733 = vadd.f32 %v2713, %v2732
    %2734 = vdwg.mxu0
    %2735 = vmatpush.msra.mxu0 %v2654
    %2736 = vmatpush.msra.mxu0 %v2653
    %2737 = vmatpush.msra.mxu0 %v2652
    %2738 = vmatpush.msra.mxu0 %v2651
    %2739 = vmatpush.msra.mxu0 %v2650
    %2740 = vmatpush.msra.mxu0 %v2649
    %2741 = vmatpush.msra.mxu0 %v2648
    %2742 = vmatpush.msra.mxu0 %v2647
    %2743 = vmatpush.msra.mxu0 %v2646
    %2744 = vmatpush.msra.mxu0 %v2645
    %2745 = vmatpush.msra.mxu0 %v2644
    %2746 = vmatpush.msra.mxu0 %v2643
    %2747 = vmatpush.msra.mxu0 %v2642
    %2748 = vmatpush.msra.mxu0 %v2641
    %2749 = vmatpush.msra.mxu0 %v2640
    %2750 = vmatpush.msra.mxu0 %v2639
    %2751 = vmatmul.f32.gmra.mxu0 %v2574
    %v2752 = vpop.f32.mrf.mxu0
    %v2753 = vadd.f32 %v2733, %v2752
    %2754 = vdwg.mxu0
    %2755 = vmatpush.msra.mxu0 %v1935
    %2756 = vmatpush.msra.mxu0 %v1930
    %2757 = vmatpush.msra.mxu0 %v1925
    %2758 = vmatpush.msra.mxu0 %v1920
    %2759 = vmatpush.msra.mxu0 %v1915
    %2760 = vmatpush.msra.mxu0 %v1910
    %2761 = vmatpush.msra.mxu0 %v1905
    %2762 = vmatpush.msra.mxu0 %v1900
    %2763 = vmatpush.msra.mxu0 %v1895
    %2764 = vmatpush.msra.mxu0 %v1890
    %2765 = vmatpush.msra.mxu0 %v1885
    %2766 = vmatpush.msra.mxu0 %v1880
    %2767 = vmatpush.msra.mxu0 %v1875
    %2768 = vmatpush.msra.mxu0 %v1870
    %2769 = vmatpush.msra.mxu0 %v1865
    %2770 = vmatpush.msra.mxu0 %v1860
    %2771 = vmatmul.f32.gmra.mxu0 %v1830
    %v2772 = vpop.f32.mrf.mxu0
    %v2773 = vadd.f32 0.0, %v2772
    %2774 = vmatmul.f32.gmra.mxu0 %v1834
    %v2775 = vpop.f32.mrf.mxu0
    %v2776 = vadd.f32 0.0, %v2775
    %2777 = vmatmul.f32.gmra.mxu0 %v1838
    %v2778 = vpop.f32.mrf.mxu0
    %v2779 = vadd.f32 0.0, %v2778
    %2780 = vmatmul.f32.gmra.mxu0 %v1842
    %v2781 = vpop.f32.mrf.mxu0
    %v2782 = vadd.f32 0.0, %v2781
    %2783 = vmatmul.f32.gmra.mxu0 %v1846
    %v2784 = vpop.f32.mrf.mxu0
    %v2785 = vadd.f32 0.0, %v2784
    %2786 = vmatmul.f32.gmra.mxu0 %v1850
    %v2787 = vpop.f32.mrf.mxu0
    %v2788 = vadd.f32 0.0, %v2787
    %2789 = vmatmul.f32.gmra.mxu0 %v1854
    %v2790 = vpop.f32.mrf.mxu0
    %v2791 = vadd.f32 0.0, %v2790
    %2792 = vmatmul.f32.gmra.mxu0 %v1858
    %v2793 = vpop.f32.mrf.mxu0
    %v2794 = vadd.f32 0.0, %v2793
    %2795 = vdwg.mxu0
    %2796 = vmatpush.msra.mxu0 %v2015
    %2797 = vmatpush.msra.mxu0 %v2010
    %2798 = vmatpush.msra.mxu0 %v2005
    %2799 = vmatpush.msra.mxu0 %v2000
    %2800 = vmatpush.msra.mxu0 %v1995
    %2801 = vmatpush.msra.mxu0 %v1990
    %2802 = vmatpush.msra.mxu0 %v1985
    %2803 = vmatpush.msra.mxu0 %v1980
    %2804 = vmatpush.msra.mxu0 %v1975
    %2805 = vmatpush.msra.mxu0 %v1970
    %2806 = vmatpush.msra.mxu0 %v1965
    %2807 = vmatpush.msra.mxu0 %v1960
    %2808 = vmatpush.msra.mxu0 %v1955
    %2809 = vmatpush.msra.mxu0 %v1950
    %2810 = vmatpush.msra.mxu0 %v1945
    %2811 = vmatpush.msra.mxu0 %v1940
    %2812 = vmatmul.f32.gmra.mxu0 %v1831
    %v2813 = vpop.f32.mrf.mxu0
    %v2814 = vadd.f32 %v2773, %v2813
    %2815 = vmatmul.f32.gmra.mxu0 %v1835
    %v2816 = vpop.f32.mrf.mxu0
    %v2817 = vadd.f32 %v2776, %v2816
    %2818 = vmatmul.f32.gmra.mxu0 %v1839
    %v2819 = vpop.f32.mrf.mxu0
    %v2820 = vadd.f32 %v2779, %v2819
    %2821 = vmatmul.f32.gmra.mxu0 %v1843
    %v2822 = vpop.f32.mrf.mxu0
    %v2823 = vadd.f32 %v2782, %v2822
    %2824 = vmatmul.f32.gmra.mxu0 %v1847
    %v2825 = vpop.f32.mrf.mxu0
    %v2826 = vadd.f32 %v2785, %v2825
    %2827 = vmatmul.f32.gmra.mxu0 %v1851
    %v2828 = vpop.f32.mrf.mxu0
    %v2829 = vadd.f32 %v2788, %v2828
    %2830 = vmatmul.f32.gmra.mxu0 %v1855
    %v2831 = vpop.f32.mrf.mxu0
    %v2832 = vadd.f32 %v2791, %v2831
    %2833 = vmatmul.f32.gmra.mxu0 %v1859
    %v2834 = vpop.f32.mrf.mxu0
    %v2835 = vadd.f32 %v2794, %v2834
    %2836 = vdwg.mxu0
    %2837 = vmatpush.msra.mxu0 %v1936
    %2838 = vmatpush.msra.mxu0 %v1931
    %2839 = vmatpush.msra.mxu0 %v1926
    %2840 = vmatpush.msra.mxu0 %v1921
    %2841 = vmatpush.msra.mxu0 %v1916
    %2842 = vmatpush.msra.mxu0 %v1911
    %2843 = vmatpush.msra.mxu0 %v1906
    %2844 = vmatpush.msra.mxu0 %v1901
    %2845 = vmatpush.msra.mxu0 %v1896
    %2846 = vmatpush.msra.mxu0 %v1891
    %2847 = vmatpush.msra.mxu0 %v1886
    %2848 = vmatpush.msra.mxu0 %v1881
    %2849 = vmatpush.msra.mxu0 %v1876
    %2850 = vmatpush.msra.mxu0 %v1871
    %2851 = vmatpush.msra.mxu0 %v1866
    %2852 = vmatpush.msra.mxu0 %v1861
    %2853 = vmatmul.f32.gmra.mxu0 %v1830
    %v2854 = vpop.f32.mrf.mxu0
    %v2855 = vadd.f32 0.0, %v2854
    %2856 = vmatmul.f32.gmra.mxu0 %v1834
    %v2857 = vpop.f32.mrf.mxu0
    %v2858 = vadd.f32 0.0, %v2857
    %2859 = vmatmul.f32.gmra.mxu0 %v1838
    %v2860 = vpop.f32.mrf.mxu0
    %v2861 = vadd.f32 0.0, %v2860
    %2862 = vmatmul.f32.gmra.mxu0 %v1842
    %v2863 = vpop.f32.mrf.mxu0
    %v2864 = vadd.f32 0.0, %v2863
    %2865 = vmatmul.f32.gmra.mxu0 %v1846
    %v2866 = vpop.f32.mrf.mxu0
    %v2867 = vadd.f32 0.0, %v2866
    %2868 = vmatmul.f32.gmra.mxu0 %v1850
    %v2869 = vpop.f32.mrf.mxu0
    %v2870 = vadd.f32 0.0, %v2869
    %2871 = vmatmul.f32.gmra.mxu0 %v1854
    %v2872 = vpop.f32.mrf.mxu0
    %v2873 = vadd.f32 0.0, %v2872
    %2874 = vmatmul.f32.gmra.mxu0 %v1858
    %v2875 = vpop.f32.mrf.mxu0
    %v2876 = vadd.f32 0.0, %v2875
    %2877 = vdwg.mxu0
    %2878 = vmatpush.msra.mxu0 %v2016
    %2879 = vmatpush.msra.mxu0 %v2011
    %2880 = vmatpush.msra.mxu0 %v2006
    %2881 = vmatpush.msra.mxu0 %v2001
    %2882 = vmatpush.msra.mxu0 %v1996
    %2883 = vmatpush.msra.mxu0 %v1991
    %2884 = vmatpush.msra.mxu0 %v1986
    %2885 = vmatpush.msra.mxu0 %v1981
    %2886 = vmatpush.msra.mxu0 %v1976
    %2887 = vmatpush.msra.mxu0 %v1971
    %2888 = vmatpush.msra.mxu0 %v1966
    %2889 = vmatpush.msra.mxu0 %v1961
    %2890 = vmatpush.msra.mxu0 %v1956
    %2891 = vmatpush.msra.mxu0 %v1951
    %2892 = vmatpush.msra.mxu0 %v1946
    %2893 = vmatpush.msra.mxu0 %v1941
    %2894 = vmatmul.f32.gmra.mxu0 %v1831
    %v2895 = vpop.f32.mrf.mxu0
    %v2896 = vadd.f32 %v2855, %v2895
    %2897 = vmatmul.f32.gmra.mxu0 %v1835
    %v2898 = vpop.f32.mrf.mxu0
    %v2899 = vadd.f32 %v2858, %v2898
    %2900 = vmatmul.f32.gmra.mxu0 %v1839
    %v2901 = vpop.f32.mrf.mxu0
    %v2902 = vadd.f32 %v2861, %v2901
    %2903 = vmatmul.f32.gmra.mxu0 %v1843
    %v2904 = vpop.f32.mrf.mxu0
    %v2905 = vadd.f32 %v2864, %v2904
    %2906 = vmatmul.f32.gmra.mxu0 %v1847
    %v2907 = vpop.f32.mrf.mxu0
    %v2908 = vadd.f32 %v2867, %v2907
    %2909 = vmatmul.f32.gmra.mxu0 %v1851
    %v2910 = vpop.f32.mrf.mxu0
    %v2911 = vadd.f32 %v2870, %v2910
    %2912 = vmatmul.f32.gmra.mxu0 %v1855
    %v2913 = vpop.f32.mrf.mxu0
    %v2914 = vadd.f32 %v2873, %v2913
    %2915 = vmatmul.f32.gmra.mxu0 %v1859
    %v2916 = vpop.f32.mrf.mxu0
    %v2917 = vadd.f32 %v2876, %v2916
    %2918 = vdwg.mxu0
    %2919 = vmatpush.msra.mxu0 %v1937
    %2920 = vmatpush.msra.mxu0 %v1932
    %2921 = vmatpush.msra.mxu0 %v1927
    %2922 = vmatpush.msra.mxu0 %v1922
    %2923 = vmatpush.msra.mxu0 %v1917
    %2924 = vmatpush.msra.mxu0 %v1912
    %2925 = vmatpush.msra.mxu0 %v1907
    %2926 = vmatpush.msra.mxu0 %v1902
    %2927 = vmatpush.msra.mxu0 %v1897
    %2928 = vmatpush.msra.mxu0 %v1892
    %2929 = vmatpush.msra.mxu0 %v1887
    %2930 = vmatpush.msra.mxu0 %v1882
    %2931 = vmatpush.msra.mxu0 %v1877
    %2932 = vmatpush.msra.mxu0 %v1872
    %2933 = vmatpush.msra.mxu0 %v1867
    %2934 = vmatpush.msra.mxu0 %v1862
    %2935 = vmatmul.f32.gmra.mxu0 %v1830
    %v2936 = vpop.f32.mrf.mxu0
    %v2937 = vadd.f32 0.0, %v2936
    %2938 = vmatmul.f32.gmra.mxu0 %v1834
    %v2939 = vpop.f32.mrf.mxu0
    %v2940 = vadd.f32 0.0, %v2939
    %2941 = vmatmul.f32.gmra.mxu0 %v1838
    %v2942 = vpop.f32.mrf.mxu0
    %v2943 = vadd.f32 0.0, %v2942
    %2944 = vmatmul.f32.gmra.mxu0 %v1842
    %v2945 = vpop.f32.mrf.mxu0
    %v2946 = vadd.f32 0.0, %v2945
    %2947 = vmatmul.f32.gmra.mxu0 %v1846
    %v2948 = vpop.f32.mrf.mxu0
    %v2949 = vadd.f32 0.0, %v2948
    %2950 = vmatmul.f32.gmra.mxu0 %v1850
    %v2951 = vpop.f32.mrf.mxu0
    %v2952 = vadd.f32 0.0, %v2951
    %2953 = vmatmul.f32.gmra.mxu0 %v1854
    %v2954 = vpop.f32.mrf.mxu0
    %v2955 = vadd.f32 0.0, %v2954
    %2956 = vmatmul.f32.gmra.mxu0 %v1858
    %v2957 = vpop.f32.mrf.mxu0
    %v2958 = vadd.f32 0.0, %v2957
    %2959 = vdwg.mxu0
    %2960 = vmatpush.msra.mxu0 %v2017
    %2961 = vmatpush.msra.mxu0 %v2012
    %2962 = vmatpush.msra.mxu0 %v2007
    %2963 = vmatpush.msra.mxu0 %v2002
    %2964 = vmatpush.msra.mxu0 %v1997
    %2965 = vmatpush.msra.mxu0 %v1992
    %2966 = vmatpush.msra.mxu0 %v1987
    %2967 = vmatpush.msra.mxu0 %v1982
    %2968 = vmatpush.msra.mxu0 %v1977
    %2969 = vmatpush.msra.mxu0 %v1972
    %2970 = vmatpush.msra.mxu0 %v1967
    %2971 = vmatpush.msra.mxu0 %v1962
    %2972 = vmatpush.msra.mxu0 %v1957
    %2973 = vmatpush.msra.mxu0 %v1952
    %2974 = vmatpush.msra.mxu0 %v1947
    %2975 = vmatpush.msra.mxu0 %v1942
    %2976 = vmatmul.f32.gmra.mxu0 %v1831
    %v2977 = vpop.f32.mrf.mxu0
    %v2978 = vadd.f32 %v2937, %v2977
    %2979 = vmatmul.f32.gmra.mxu0 %v1835
    %v2980 = vpop.f32.mrf.mxu0
    %v2981 = vadd.f32 %v2940, %v2980
    %2982 = vmatmul.f32.gmra.mxu0 %v1839
    %v2983 = vpop.f32.mrf.mxu0
    %v2984 = vadd.f32 %v2943, %v2983
    %2985 = vmatmul.f32.gmra.mxu0 %v1843
    %v2986 = vpop.f32.mrf.mxu0
    %v2987 = vadd.f32 %v2946, %v2986
    %2988 = vmatmul.f32.gmra.mxu0 %v1847
    %v2989 = vpop.f32.mrf.mxu0
    %v2990 = vadd.f32 %v2949, %v2989
    %2991 = vmatmul.f32.gmra.mxu0 %v1851
    %v2992 = vpop.f32.mrf.mxu0
    %v2993 = vadd.f32 %v2952, %v2992
    %2994 = vmatmul.f32.gmra.mxu0 %v1855
    %v2995 = vpop.f32.mrf.mxu0
    %v2996 = vadd.f32 %v2955, %v2995
    %2997 = vmatmul.f32.gmra.mxu0 %v1859
    %v2998 = vpop.f32.mrf.mxu0
    %v2999 = vadd.f32 %v2958, %v2998
    %3000 = vdwg.mxu0
    %3001 = vmatpush.msra.mxu0 %v1938
    %3002 = vmatpush.msra.mxu0 %v1933
    %3003 = vmatpush.msra.mxu0 %v1928
    %3004 = vmatpush.msra.mxu0 %v1923
    %3005 = vmatpush.msra.mxu0 %v1918
    %3006 = vmatpush.msra.mxu0 %v1913
    %3007 = vmatpush.msra.mxu0 %v1908
    %3008 = vmatpush.msra.mxu0 %v1903
    %3009 = vmatpush.msra.mxu0 %v1898
    %3010 = vmatpush.msra.mxu0 %v1893
    %3011 = vmatpush.msra.mxu0 %v1888
    %3012 = vmatpush.msra.mxu0 %v1883
    %3013 = vmatpush.msra.mxu0 %v1878
    %3014 = vmatpush.msra.mxu0 %v1873
    %3015 = vmatpush.msra.mxu0 %v1868
    %3016 = vmatpush.msra.mxu0 %v1863
    %3017 = vmatmul.f32.gmra.mxu0 %v1830
    %v3018 = vpop.f32.mrf.mxu0
    %v3019 = vadd.f32 0.0, %v3018
    %3020 = vmatmul.f32.gmra.mxu0 %v1834
    %v3021 = vpop.f32.mrf.mxu0
    %v3022 = vadd.f32 0.0, %v3021
    %3023 = vmatmul.f32.gmra.mxu0 %v1838
    %v3024 = vpop.f32.mrf.mxu0
    %v3025 = vadd.f32 0.0, %v3024
    %3026 = vmatmul.f32.gmra.mxu0 %v1842
    %v3027 = vpop.f32.mrf.mxu0
    %v3028 = vadd.f32 0.0, %v3027
    %3029 = vmatmul.f32.gmra.mxu0 %v1846
    %v3030 = vpop.f32.mrf.mxu0
    %v3031 = vadd.f32 0.0, %v3030
    %3032 = vmatmul.f32.gmra.mxu0 %v1850
    %v3033 = vpop.f32.mrf.mxu0
    %v3034 = vadd.f32 0.0, %v3033
    %3035 = vmatmul.f32.gmra.mxu0 %v1854
    %v3036 = vpop.f32.mrf.mxu0
    %v3037 = vadd.f32 0.0, %v3036
    %3038 = vmatmul.f32.gmra.mxu0 %v1858
    %v3039 = vpop.f32.mrf.mxu0
    %v3040 = vadd.f32 0.0, %v3039
    %3041 = vdwg.mxu0
    %3042 = vmatpush.msra.mxu0 %v2018
    %3043 = vmatpush.msra.mxu0 %v2013
    %3044 = vmatpush.msra.mxu0 %v2008
    %3045 = vmatpush.msra.mxu0 %v2003
    %3046 = vmatpush.msra.mxu0 %v1998
    %3047 = vmatpush.msra.mxu0 %v1993
    %3048 = vmatpush.msra.mxu0 %v1988
    %3049 = vmatpush.msra.mxu0 %v1983
    %3050 = vmatpush.msra.mxu0 %v1978
    %3051 = vmatpush.msra.mxu0 %v1973
    %3052 = vmatpush.msra.mxu0 %v1968
    %3053 = vmatpush.msra.mxu0 %v1963
    %3054 = vmatpush.msra.mxu0 %v1958
    %3055 = vmatpush.msra.mxu0 %v1953
    %3056 = vmatpush.msra.mxu0 %v1948
    %3057 = vmatpush.msra.mxu0 %v1943
    %3058 = vmatmul.f32.gmra.mxu0 %v1831
    %v3059 = vpop.f32.mrf.mxu0
    %v3060 = vadd.f32 %v3019, %v3059
    %3061 = vmatmul.f32.gmra.mxu0 %v1835
    %v3062 = vpop.f32.mrf.mxu0
    %v3063 = vadd.f32 %v3022, %v3062
    %3064 = vmatmul.f32.gmra.mxu0 %v1839
    %v3065 = vpop.f32.mrf.mxu0
    %v3066 = vadd.f32 %v3025, %v3065
    %3067 = vmatmul.f32.gmra.mxu0 %v1843
    %v3068 = vpop.f32.mrf.mxu0
    %v3069 = vadd.f32 %v3028, %v3068
    %3070 = vmatmul.f32.gmra.mxu0 %v1847
    %v3071 = vpop.f32.mrf.mxu0
    %v3072 = vadd.f32 %v3031, %v3071
    %3073 = vmatmul.f32.gmra.mxu0 %v1851
    %v3074 = vpop.f32.mrf.mxu0
    %v3075 = vadd.f32 %v3034, %v3074
    %3076 = vmatmul.f32.gmra.mxu0 %v1855
    %v3077 = vpop.f32.mrf.mxu0
    %v3078 = vadd.f32 %v3037, %v3077
    %3079 = vmatmul.f32.gmra.mxu0 %v1859
    %v3080 = vpop.f32.mrf.mxu0
    %v3081 = vadd.f32 %v3040, %v3080
    %3082 = vdwg.mxu0
    %3083 = vmatpush.msra.mxu0 %v1939
    %3084 = vmatpush.msra.mxu0 %v1934
    %3085 = vmatpush.msra.mxu0 %v1929
    %3086 = vmatpush.msra.mxu0 %v1924
    %3087 = vmatpush.msra.mxu0 %v1919
    %3088 = vmatpush.msra.mxu0 %v1914
    %3089 = vmatpush.msra.mxu0 %v1909
    %3090 = vmatpush.msra.mxu0 %v1904
    %3091 = vmatpush.msra.mxu0 %v1899
    %3092 = vmatpush.msra.mxu0 %v1894
    %3093 = vmatpush.msra.mxu0 %v1889
    %3094 = vmatpush.msra.mxu0 %v1884
    %3095 = vmatpush.msra.mxu0 %v1879
    %3096 = vmatpush.msra.mxu0 %v1874
    %3097 = vmatpush.msra.mxu0 %v1869
    %3098 = vmatpush.msra.mxu0 %v1864
    %3099 = vmatmul.f32.gmra.mxu0 %v1830
    %v3100 = vpop.f32.mrf.mxu0
    %v3101 = vadd.f32 0.0, %v3100
    %3102 = vmatmul.f32.gmra.mxu0 %v1834
    %v3103 = vpop.f32.mrf.mxu0
    %v3104 = vadd.f32 0.0, %v3103
    %3105 = vmatmul.f32.gmra.mxu0 %v1838
    %v3106 = vpop.f32.mrf.mxu0
    %v3107 = vadd.f32 0.0, %v3106
    %3108 = vmatmul.f32.gmra.mxu0 %v1842
    %v3109 = vpop.f32.mrf.mxu0
    %v3110 = vadd.f32 0.0, %v3109
    %3111 = vmatmul.f32.gmra.mxu0 %v1846
    %v3112 = vpop.f32.mrf.mxu0
    %v3113 = vadd.f32 0.0, %v3112
    %3114 = vmatmul.f32.gmra.mxu0 %v1850
    %v3115 = vpop.f32.mrf.mxu0
    %v3116 = vadd.f32 0.0, %v3115
    %3117 = vmatmul.f32.gmra.mxu0 %v1854
    %v3118 = vpop.f32.mrf.mxu0
    %v3119 = vadd.f32 0.0, %v3118
    %3120 = vmatmul.f32.gmra.mxu0 %v1858
    %v3121 = vpop.f32.mrf.mxu0
    %v3122 = vadd.f32 0.0, %v3121
    %3123 = vdwg.mxu0
    %3124 = vmatpush.msra.mxu0 %v2019
    %3125 = vmatpush.msra.mxu0 %v2014
    %3126 = vmatpush.msra.mxu0 %v2009
    %3127 = vmatpush.msra.mxu0 %v2004
    %3128 = vmatpush.msra.mxu0 %v1999
    %3129 = vmatpush.msra.mxu0 %v1994
    %3130 = vmatpush.msra.mxu0 %v1989
    %3131 = vmatpush.msra.mxu0 %v1984
    %3132 = vmatpush.msra.mxu0 %v1979
    %3133 = vmatpush.msra.mxu0 %v1974
    %3134 = vmatpush.msra.mxu0 %v1969
    %3135 = vmatpush.msra.mxu0 %v1964
    %3136 = vmatpush.msra.mxu0 %v1959
    %3137 = vmatpush.msra.mxu0 %v1954
    %3138 = vmatpush.msra.mxu0 %v1949
    %3139 = vmatpush.msra.mxu0 %v1944
    %3140 = vmatmul.f32.gmra.mxu0 %v1831
    %v3141 = vpop.f32.mrf.mxu0
    %v3142 = vadd.f32 %v3101, %v3141
    %3143 = vmatmul.f32.gmra.mxu0 %v1835
    %v3144 = vpop.f32.mrf.mxu0
    %v3145 = vadd.f32 %v3104, %v3144
    %3146 = vmatmul.f32.gmra.mxu0 %v1839
    %v3147 = vpop.f32.mrf.mxu0
    %v3148 = vadd.f32 %v3107, %v3147
    %3149 = vmatmul.f32.gmra.mxu0 %v1843
    %v3150 = vpop.f32.mrf.mxu0
    %v3151 = vadd.f32 %v3110, %v3150
    %3152 = vmatmul.f32.gmra.mxu0 %v1847
    %v3153 = vpop.f32.mrf.mxu0
    %v3154 = vadd.f32 %v3113, %v3153
    %3155 = vmatmul.f32.gmra.mxu0 %v1851
    %v3156 = vpop.f32.mrf.mxu0
    %v3157 = vadd.f32 %v3116, %v3156
    %3158 = vmatmul.f32.gmra.mxu0 %v1855
    %v3159 = vpop.f32.mrf.mxu0
    %v3160 = vadd.f32 %v3119, %v3159
    %3161 = vmatmul.f32.gmra.mxu0 %v1859
    %v3162 = vpop.f32.mrf.mxu0
    %v3163 = vadd.f32 %v3122, %v3162
    %3164 = vdwg.mxu0
    %v3165 = vmul.f32 %v2814, %v2430
    %v3166 = vmul.f32 %v2896, %v2431
    %v3167 = vmul.f32 %v2978, %v2432
    %v3168 = vmul.f32 %v3060, %v2433
    %v3169 = vmul.f32 %v3142, %v2434
    %v3170 = vmul.f32 %v2817, %v2435
    %v3171 = vmul.f32 %v2899, %v2436
    %v3172 = vmul.f32 %v2981, %v2437
    %v3173 = vmul.f32 %v3063, %v2438
    %v3174 = vmul.f32 %v3145, %v2439
    %v3175 = vmul.f32 %v2820, %v2440
    %v3176 = vmul.f32 %v2902, %v2441
    %v3177 = vmul.f32 %v2984, %v2442
    %v3178 = vmul.f32 %v3066, %v2443
    %v3179 = vmul.f32 %v3148, %v2444
    %v3180 = vmul.f32 %v2823, %v2445
    %v3181 = vmul.f32 %v2905, %v2446
    %v3182 = vmul.f32 %v2987, %v2447
    %v3183 = vmul.f32 %v3069, %v2448
    %v3184 = vmul.f32 %v3151, %v2449
    %v3185 = vmul.f32 %v2826, %v2450
    %v3186 = vmul.f32 %v2908, %v2451
    %v3187 = vmul.f32 %v2990, %v2452
    %v3188 = vmul.f32 %v3072, %v2453
    %v3189 = vmul.f32 %v3154, %v2454
    %v3190 = vmul.f32 %v2829, %v2455
    %v3191 = vmul.f32 %v2911, %v2456
    %v3192 = vmul.f32 %v2993, %v2457
    %v3193 = vmul.f32 %v3075, %v2458
    %v3194 = vmul.f32 %v3157, %v2459
    %v3195 = vmul.f32 %v2832, %v2460
    %v3196 = vmul.f32 %v2914, %v2461
    %v3197 = vmul.f32 %v2996, %v2462
    %v3198 = vmul.f32 %v3078, %v2463
    %v3199 = vmul.f32 %v3160, %v2464
    %v3200 = vmul.f32 %v2835, %v2465
    %v3201 = vmul.f32 %v2917, %v2466
    %v3202 = vmul.f32 %v2999, %v2467
    %v3203 = vmul.f32 %v3081, %v2468
    %v3204 = vmul.f32 %v3163, %v2469
    %v3205 = vadd.f32 %v3165, %v3170
    %v3206 = vadd.f32 %v3205, %v3175
    %v3207 = vadd.f32 %v3206, %v3180
    %v3208 = vadd.f32 %v3207, %v3185
    %v3209 = vadd.f32 %v3208, %v3190
    %v3210 = vadd.f32 %v3209, %v3195
    %v3211 = vadd.f32 %v3210, %v3200
    %v3212 = vrot.slane %v3211, 4
    %v3213 = vadd.f32 %v3211, %v3212
    %v3214 = vrot.slane %v3213, 2
    %v3215 = vadd.f32 %v3213, %v3214
    %v3216 = vrot.slane %v3215, 1
    %v3217 = vadd.f32 %v3215, %v3216
    %v3218 = vadd.f32 %v3166, %v3171
    %v3219 = vadd.f32 %v3218, %v3176
    %v3220 = vadd.f32 %v3219, %v3181
    %v3221 = vadd.f32 %v3220, %v3186
    %v3222 = vadd.f32 %v3221, %v3191
    %v3223 = vadd.f32 %v3222, %v3196
    %v3224 = vadd.f32 %v3223, %v3201
    %v3225 = vrot.slane %v3224, 4
    %v3226 = vadd.f32 %v3224, %v3225
    %v3227 = vrot.slane %v3226, 2
    %v3228 = vadd.f32 %v3226, %v3227
    %v3229 = vrot.slane %v3228, 1
    %v3230 = vadd.f32 %v3228, %v3229
    %v3231 = vadd.f32 %v3167, %v3172
    %v3232 = vadd.f32 %v3231, %v3177
    %v3233 = vadd.f32 %v3232, %v3182
    %v3234 = vadd.f32 %v3233, %v3187
    %v3235 = vadd.f32 %v3234, %v3192
    %v3236 = vadd.f32 %v3235, %v3197
    %v3237 = vadd.f32 %v3236, %v3202
    %v3238 = vrot.slane %v3237, 4
    %v3239 = vadd.f32 %v3237, %v3238
    %v3240 = vrot.slane %v3239, 2
    %v3241 = vadd.f32 %v3239, %v3240
    %v3242 = vrot.slane %v3241, 1
    %v3243 = vadd.f32 %v3241, %v3242
    %v3244 = vadd.f32 %v3168, %v3173
    %v3245 = vadd.f32 %v3244, %v3178
    %v3246 = vadd.f32 %v3245, %v3183
    %v3247 = vadd.f32 %v3246, %v3188
    %v3248 = vadd.f32 %v3247, %v3193
    %v3249 = vadd.f32 %v3248, %v3198
    %v3250 = vadd.f32 %v3249, %v3203
    %v3251 = vrot.slane %v3250, 4
    %v3252 = vadd.f32 %v3250, %v3251
    %v3253 = vrot.slane %v3252, 2
    %v3254 = vadd.f32 %v3252, %v3253
    %v3255 = vrot.slane %v3254, 1
    %v3256 = vadd.f32 %v3254, %v3255
    %v3257 = vadd.f32 %v3169, %v3174
    %v3258 = vadd.f32 %v3257, %v3179
    %v3259 = vadd.f32 %v3258, %v3184
    %v3260 = vadd.f32 %v3259, %v3189
    %v3261 = vadd.f32 %v3260, %v3194
    %v3262 = vadd.f32 %v3261, %v3199
    %v3263 = vadd.f32 %v3262, %v3204
    %v3264 = vrot.slane %v3263, 4
    %v3265 = vadd.f32 %v3263, %v3264
    %v3266 = vrot.slane %v3265, 2
    %v3267 = vadd.f32 %v3265, %v3266
    %v3268 = vrot.slane %v3267, 1
    %v3269 = vadd.f32 %v3267, %v3268
    %3270 = vmatpush.msra.mxu0 %v2590
    %3271 = vmatpush.msra.mxu0 %v2589
    %3272 = vmatpush.msra.mxu0 %v2588
    %3273 = vmatpush.msra.mxu0 %v2587
    %3274 = vmatpush.msra.mxu0 %v2586
    %3275 = vmatpush.msra.mxu0 %v2585
    %3276 = vmatpush.msra.mxu0 %v2584
    %3277 = vmatpush.msra.mxu0 %v2583
    %3278 = vmatpush.msra.mxu0 %v2582
    %3279 = vmatpush.msra.mxu0 %v2581
    %3280 = vmatpush.msra.mxu0 %v2580
    %3281 = vmatpush.msra.mxu0 %v2579
    %3282 = vmatpush.msra.mxu0 %v2578
    %3283 = vmatpush.msra.mxu0 %v2577
    %3284 = vmatpush.msra.mxu0 %v2576
    %3285 = vmatpush.msra.mxu0 %v2575
    %3286 = vmatmul.f32.gmra.mxu0 %v3217
    %v3287 = vpop.f32.mrf.mxu0
    %v3288 = vadd.f32 0.0, %v3287
    %3289 = vdwg.mxu0
    %3290 = vmatpush.msra.mxu0 %v2606
    %3291 = vmatpush.msra.mxu0 %v2605
    %3292 = vmatpush.msra.mxu0 %v2604
    %3293 = vmatpush.msra.mxu0 %v2603
    %3294 = vmatpush.msra.mxu0 %v2602
    %3295 = vmatpush.msra.mxu0 %v2601
    %3296 = vmatpush.msra.mxu0 %v2600
    %3297 = vmatpush.msra.mxu0 %v2599
    %3298 = vmatpush.msra.mxu0 %v2598
    %3299 = vmatpush.msra.mxu0 %v2597
    %3300 = vmatpush.msra.mxu0 %v2596
    %3301 = vmatpush.msra.mxu0 %v2595
    %3302 = vmatpush.msra.mxu0 %v2594
    %3303 = vmatpush.msra.mxu0 %v2593
    %3304 = vmatpush.msra.mxu0 %v2592
    %3305 = vmatpush.msra.mxu0 %v2591
    %3306 = vmatmul.f32.gmra.mxu0 %v3230
    %v3307 = vpop.f32.mrf.mxu0
    %v3308 = vadd.f32 %v3288, %v3307
    %3309 = vdwg.mxu0
    %3310 = vmatpush.msra.mxu0 %v2622
    %3311 = vmatpush.msra.mxu0 %v2621
    %3312 = vmatpush.msra.mxu0 %v2620
    %3313 = vmatpush.msra.mxu0 %v2619
    %3314 = vmatpush.msra.mxu0 %v2618
    %3315 = vmatpush.msra.mxu0 %v2617
    %3316 = vmatpush.msra.mxu0 %v2616
    %3317 = vmatpush.msra.mxu0 %v2615
    %3318 = vmatpush.msra.mxu0 %v2614
    %3319 = vmatpush.msra.mxu0 %v2613
    %3320 = vmatpush.msra.mxu0 %v2612
    %3321 = vmatpush.msra.mxu0 %v2611
    %3322 = vmatpush.msra.mxu0 %v2610
    %3323 = vmatpush.msra.mxu0 %v2609
    %3324 = vmatpush.msra.mxu0 %v2608
    %3325 = vmatpush.msra.mxu0 %v2607
    %3326 = vmatmul.f32.gmra.mxu0 %v3243
    %v3327 = vpop.f32.mrf.mxu0
    %v3328 = vadd.f32 %v3308, %v3327
    %3329 = vdwg.mxu0
    %3330 = vmatpush.msra.mxu0 %v2638
    %3331 = vmatpush.msra.mxu0 %v2637
    %3332 = vmatpush.msra.mxu0 %v2636
    %3333 = vmatpush.msra.mxu0 %v2635
    %3334 = vmatpush.msra.mxu0 %v2634
    %3335 = vmatpush.msra.mxu0 %v2633
    %3336 = vmatpush.msra.mxu0 %v2632
    %3337 = vmatpush.msra.mxu0 %v2631
    %3338 = vmatpush.msra.mxu0 %v2630
    %3339 = vmatpush.msra.mxu0 %v2629
    %3340 = vmatpush.msra.mxu0 %v2628
    %3341 = vmatpush.msra.mxu0 %v2627
    %3342 = vmatpush.msra.mxu0 %v2626
    %3343 = vmatpush.msra.mxu0 %v2625
    %3344 = vmatpush.msra.mxu0 %v2624
    %3345 = vmatpush.msra.mxu0 %v2623
    %3346 = vmatmul.f32.gmra.mxu0 %v3256
    %v3347 = vpop.f32.mrf.mxu0
    %v3348 = vadd.f32 %v3328, %v3347
    %3349 = vdwg.mxu0
    %3350 = vmatpush.msra.mxu0 %v2654
    %3351 = vmatpush.msra.mxu0 %v2653
    %3352 = vmatpush.msra.mxu0 %v2652
    %3353 = vmatpush.msra.mxu0 %v2651
    %3354 = vmatpush.msra.mxu0 %v2650
    %3355 = vmatpush.msra.mxu0 %v2649
    %3356 = vmatpush.msra.mxu0 %v2648
    %3357 = vmatpush.msra.mxu0 %v2647
    %3358 = vmatpush.msra.mxu0 %v2646
    %3359 = vmatpush.msra.mxu0 %v2645
    %3360 = vmatpush.msra.mxu0 %v2644
    %3361 = vmatpush.msra.mxu0 %v2643
    %3362 = vmatpush.msra.mxu0 %v2642
    %3363 = vmatpush.msra.mxu0 %v2641
    %3364 = vmatpush.msra.mxu0 %v2640
    %3365 = vmatpush.msra.mxu0 %v2639
    %3366 = vmatmul.f32.gmra.mxu0 %v3269
    %v3367 = vpop.f32.mrf.mxu0
    %v3368 = vadd.f32 %v3348, %v3367
    %3369 = vdwg.mxu0
    %v3371 = vrot.slane %v3368, 7
    %v3373 = vsel %vm225, %v2753, %v3371
    %v3374 = vld [vmem:[%s6] sm:$0x1]
    %v3376 = vperm.slane %v3374, 0
    %v3378 = vadd.f32 %v3373, %v3376
    %vm3379 = vcmask 74752
    %3380 = vst.msk [vmem:[#allocation2] sm:$0x3] %vm3379, %v3378
    // Predicated region
    $region30: #{vgg11_forward.1} parent=1 // pred_check
      _
    $region31: #{vgg11_forward.1} parent=1 // pred_check_branch
      %3382 = sbr.rel (0) target = $region33
    $region32: #{vgg11_forward.1} parent=1 // pred_region
      %3384 = vsyncadd [#allocation3], 0
      %s3386 = sshll.u32 [#allocation2], 4
      %s3387 = int_to_ptr.vmem [resolvable:$true] %s3386
      %s3388 = sshll.u32 %s7, 4
      %s3389 = int_to_ptr.hbm [resolvable:$true] %s3388
      %3391 = dma.vmem_to_hbm [thread:$0]  %s3387, 32, %s3389, [#allocation3]
    $region33: #{vgg11_forward.1} parent=1 // pred_fallthru
      _
    // Predicated region
    $region34: #{vgg11_forward.1} parent=1 // pred_check
      _
    $region35: #{vgg11_forward.1} parent=1 // pred_check_branch
      %3393 = sbr.rel (0) target = $region37
    $region36: #{vgg11_forward.1} parent=1 // pred_region
      %3395 = dma.done [#allocation3], 32
    $region37: #{vgg11_forward.1} parent=1 // pred_fallthru
      _
    %3396 = vsyncpa [#allocation3], 1

</llo_original>
